<compile_context>
chip_gen: v5e
topology: v5e:2x2
jax: 0.10.0
libtpu: 0.0.40
codegen_flags: <defaults>
</compile_context>

<pallas_src>
import functools

import jax
import jax.numpy as jnp
from jax.experimental import pallas as pl
from jax.experimental.pallas import tpu as pltpu

# ---- module hyper-parameters (from the PyTorch source) ----
N_EMB = 384
BLOCK_SIZE = 256  # tril buffer size; only requires T <= BLOCK_SIZE


# ---------------------------------------------------------------------------
# Fused kernel: packed QKV matmul + per-head causal softmax attention +
# per-head accumulated output projection (+ bias).
# grid = (B // Bb,): one program per block of Bb batch elements.
# ---------------------------------------------------------------------------
def _fused_mha_kernel(x_ref, wqkv_ref, wproj_ref, bproj_ref, o_ref,
                      *, num_heads, head_pad):
    # x_ref    : (Bb, T, C)        f32
    # wqkv_ref : (C, 3*NH*Hp)      bf16  (Wq pre-scaled by n_emb**-0.5; heads
    #                                     zero-padded to Hp=128 lanes)
    # wproj_ref: (NH*Hp, E)        bf16  (rows zero-padded to match)
    # bproj_ref: (1, E)            f32
    # o_ref    : (Bb, T, E)        f32
    Bb, T, C = x_ref.shape
    Dp = num_heads * head_pad
    E = o_ref.shape[2]

    # --- packed QKV projection for all heads & all batch rows at once -------
    x2d = x_ref[...].reshape(Bb * T, C).astype(jnp.bfloat16)         # (Bb*T, C)
    qkv = jnp.dot(x2d, wqkv_ref[...],
                  preferred_element_type=jnp.float32)                # (Bb*T, 3*Dp)
    # Single f32->bf16 cast for the whole slab, then restore the batch axis.
    qkv = qkv.astype(jnp.bfloat16).reshape(Bb, T, 3 * Dp)

    # --- additive causal bias built once, shared by every head --------------
    row = jax.lax.broadcasted_iota(jnp.int32, (T, T), 0)
    col = jax.lax.broadcasted_iota(jnp.int32, (T, T), 1)
    bias = jnp.where(col <= row, 0.0, -1e30).astype(jnp.float32)     # (T, T)

    # --- per-head attention + partial output projection ---------------------
    acc = jnp.zeros((Bb * T, E), jnp.float32)
    for h in range(num_heads):                                       # unrolled
        lo = h * head_pad                                            # 128-aligned
        q = qkv[:, :, lo:lo + head_pad]                              # (Bb, T, Hp)
        k = qkv[:, :, Dp + lo:Dp + lo + head_pad]
        v = qkv[:, :, 2 * Dp + lo:2 * Dp + lo + head_pad]

        # Batched NT matmul (contract last dims, no explicit transpose).
        s = jnp.einsum('bqd,bkd->bqk', q, k,
                       preferred_element_type=jnp.float32)           # (Bb, T, T)
        s = s + bias[None, :, :]

        # Numerically stable softmax, all in f32 (v5e-friendly).
        m = jnp.max(s, axis=-1, keepdims=True)
        p = jnp.exp(s - m)
        denom = jnp.sum(p, axis=-1, keepdims=True)
        probs = (p * pl.reciprocal(denom, approx=True)).astype(jnp.bfloat16)

        out_h = jnp.einsum('bqk,bkd->bqd', probs, v,
                           preferred_element_type=jnp.float32)       # (Bb, T, Hp)

        # Partial output projection: sublane slice of w_proj at a 128-aligned
        # row offset (free view); accumulator stays lane-dense at E=384.
        acc = acc + jnp.dot(
            out_h.reshape(Bb * T, head_pad).astype(jnp.bfloat16),
            wproj_ref[lo:lo + head_pad, :],
            preferred_element_type=jnp.float32)                      # (Bb*T, E)

    y = acc.reshape(Bb, T, E) + bproj_ref[...]                       # bias broadcast
    o_ref[...] = y.astype(o_ref.dtype)


# ---------------------------------------------------------------------------
# Wrapper: host-side weight packing (head padding, scale fold) + pallas_call
# ---------------------------------------------------------------------------
def multi_head_attention(x, params):
    """x: (B, T, C=n_emb); params: wq/wk/wv (NH, C, H), w_proj (NH*H, E), b_proj (E,)."""
    B, T, C = x.shape
    assert T <= BLOCK_SIZE and C == N_EMB
    NH, _, H = params["wq"].shape
    E = params["w_proj"].shape[1]
    Hp = ((H + 127) // 128) * 128          # pad each head to 128 lanes
    Dp = NH * Hp
    scale = float(N_EMB) ** -0.5           # PyTorch code scales by C**-0.5, C = n_emb

    def pack(w, s=1.0):                    # (NH, C, H) -> (C, NH*Hp), zero-padded
        wp = jnp.pad(w * s, ((0, 0), (0, 0), (0, Hp - H)))
        return jnp.transpose(wp, (1, 0, 2)).reshape(C, Dp)

    # [scale*Wq | Wk | Wv], bf16, per-head columns 128-aligned inside each group.
    w_qkv = jnp.concatenate(
        [pack(params["wq"], scale), pack(params["wk"]), pack(params["wv"])],
        axis=-1).astype(jnp.bfloat16)                                # (C, 3*Dp)

    # Zero-pad the matching rows of the projection weight so padded lanes are inert.
    w_proj = jnp.pad(params["w_proj"].reshape(NH, H, E),
                     ((0, 0), (0, Hp - H), (0, 0))
                     ).reshape(Dp, E).astype(jnp.bfloat16)           # (Dp, E)
    b_proj = params["b_proj"].reshape(1, E).astype(jnp.float32)

    # ---- batch blocking: amortize per-step overhead & weight-resident matmuls
    target_rows = 256                                   # MXU M-fill target
    bb_cap = min(8, max(1, -(-target_rows // T)))       # cap for v7x 64 MiB VMEM
    if B >= 2:
        bb_cap = min(bb_cap, B // 2)                    # keep grid >= 2 (v7x 2 TCs)
    bb = 1
    for d in range(1, B + 1):
        if B % d == 0 and d <= bb_cap:
            bb = d

    kernel = functools.partial(_fused_mha_kernel, num_heads=NH, head_pad=Hp)

    return pl.pallas_call(
        kernel,
        out_shape=jax.ShapeDtypeStruct((B, T, E), x.dtype),
        grid_spec=pltpu.PrefetchScalarGridSpec(
            num_scalar_prefetch=0,
            grid=(B // bb,),
            in_specs=[
                pl.BlockSpec((bb, T, C), lambda b: (b, 0, 0)),       # x block
                pl.BlockSpec((C, 3 * Dp), lambda b: (0, 0)),         # packed QKV W
                pl.BlockSpec((Dp, E), lambda b: (0, 0)),             # proj W
                pl.BlockSpec((1, E), lambda b: (0, 0)),              # proj bias
            ],
            out_specs=pl.BlockSpec((bb, T, E), lambda b: (b, 0, 0)),
        ),
        compiler_params=pltpu.CompilerParams(
            dimension_semantics=("parallel",),
            vmem_limit_bytes=64 * 1024 * 1024),
    )(x, w_qkv, w_proj, b_proj)


# ---------------------------------------------------------------------------
# Pure-JAX reference (for a silent correctness check)
# ---------------------------------------------------------------------------
def reference(x, params):
    B, T, C = x.shape
    scale = float(C) ** -0.5
    outs = []
    for h in range(params["wq"].shape[0]):
        q = x @ params["wq"][h]
        k = x @ params["wk"][h]
        v = x @ params["wv"][h]
        wei = (q @ jnp.swapaxes(k, -2, -1)) * scale
        mask = jnp.tril(jnp.ones((T, T), dtype=bool))
        wei = jnp.where(mask, wei, -jnp.inf)
        wei = jax.nn.softmax(wei, axis=-1)
        outs.append(wei @ v)
    h_cat = jnp.concatenate(outs, axis=-1)
    return h_cat @ params["w_proj"] + params["b_proj"]


if __name__ == "__main__":
    # Small but module-consistent shapes: n_emb fixed at 384 by the module.
    B, T = 2, 8
    NUM_HEADS, HEAD_SIZE = 4, 96          # 4 * 96 = 384 = n_emb
    assert T <= BLOCK_SIZE

    key = jax.random.PRNGKey(0)
    kx, kq, kk, kv, kw, kb = jax.random.split(key, 6)

    x = jax.random.normal(kx, (B, T, N_EMB), dtype=jnp.float32)

    # Deterministic parameter init (synthetic, not a checkpoint).
    params = {
        "wq": jax.random.normal(kq, (NUM_HEADS, N_EMB, HEAD_SIZE), jnp.float32) * 0.02,
        "wk": jax.random.normal(kk, (NUM_HEADS, N_EMB, HEAD_SIZE), jnp.float32) * 0.02,
        "wv": jax.random.normal(kv, (NUM_HEADS, N_EMB, HEAD_SIZE), jnp.float32) * 0.02,
        "w_proj": jax.random.normal(kw, (NUM_HEADS * HEAD_SIZE, N_EMB), jnp.float32) * 0.02,
        "b_proj": jax.random.normal(kb, (N_EMB,), jnp.float32) * 0.02,
    }

    out = multi_head_attention(x, params)
    out = jax.block_until_ready(out)

    ref = reference(x, params)
    assert out.shape == (B, T, N_EMB)
    # bf16 MXU operands (f32 accumulation) => loosened tolerance vs f32 reference.
    assert jnp.allclose(out, ref, atol=2e-2, rtol=2e-2), (
        float(jnp.max(jnp.abs(out - ref))))

    print("KERNEL_OK")
</pallas_src>

<mosaic_0001>
module attributes {stable_mosaic.version = 11 : i64} {
  func.func @_fused_mha_kernel(%arg0: i32, %arg1: memref<1x8x384xf32, #tpu.memory_space<vmem>>, %arg2: memref<384x1536xbf16, #tpu.memory_space<vmem>>, %arg3: memref<512x384xbf16, #tpu.memory_space<vmem>>, %arg4: memref<1x384xf32, #tpu.memory_space<vmem>>, %arg5: memref<1x8x384xf32, #tpu.memory_space<vmem>>) attributes {dimension_semantics = [#tpu.dimension_semantics<parallel>], iteration_bounds = array<i64: 2>, scalar_prefetch = 0 : i64, scratch_operands = 0 : i64, tpu.core_type = #tpu.core_type<tc>, window_params = [{transform_indices = @transform_0, window_bounds = array<i64: 1, 8, 384>}, {pipeline_mode = #tpu.pipeline_mode<synchronous>, transform_indices = @transform_1, window_bounds = array<i64: 384, 1536>}, {pipeline_mode = #tpu.pipeline_mode<synchronous>, transform_indices = @transform_2, window_bounds = array<i64: 512, 384>}, {pipeline_mode = #tpu.pipeline_mode<synchronous>, transform_indices = @transform_3, window_bounds = array<i64: 1, 384>}, {transform_indices = @transform_4, window_bounds = array<i64: 1, 8, 384>}]} {
    %c0 = arith.constant 0 : index
    %c0_0 = arith.constant 0 : index
    %c0_1 = arith.constant 0 : index
    %0 = vector.load %arg1[%c0, %c0_0, %c0_1] : memref<1x8x384xf32, #tpu.memory_space<vmem>>, vector<1x8x384xf32>
    %1 = vector.shape_cast %0 : vector<1x8x384xf32> to vector<8x384xf32>
    %2 = arith.truncf %1 : vector<8x384xf32> to vector<8x384xbf16>
    %c0_2 = arith.constant 0 : index
    %c0_3 = arith.constant 0 : index
    %3 = vector.load %arg2[%c0_2, %c0_3] : memref<384x1536xbf16, #tpu.memory_space<vmem>>, vector<384x1536xbf16>
    %cst = arith.constant dense<0.000000e+00> : vector<8x1536xf32>
    %4 = tpu.matmul %2, %3, %cst {dimension_numbers = #tpu.dot_dimension_numbers<[1], [0], [0], [1], [0, 0, 1, 1], [], []>} : vector<8x384xbf16>, vector<384x1536xbf16>, vector<8x1536xf32> -> vector<8x1536xf32>
    %5 = arith.truncf %4 : vector<8x1536xf32> to vector<8x1536xbf16>
    %6 = vector.shape_cast %5 : vector<8x1536xbf16> to vector<1x8x1536xbf16>
    %7 = tpu.iota {dimensions = array<i32: 0>} : vector<8x8xi32>
    %8 = tpu.iota {dimensions = array<i32: 1>} : vector<8x8xi32>
    %9 = arith.cmpi sle, %8, %7 : vector<8x8xi32>
    %cst_4 = arith.constant 0.000000e+00 : f32
    %cst_5 = arith.constant -1.000000e+30 : f32
    %10 = vector.broadcast %cst_4 : f32 to vector<8x8xf32>
    %11 = vector.broadcast %cst_5 : f32 to vector<8x8xf32>
    %12 = arith.select %9, %10, %11 : vector<8x8xi1>, vector<8x8xf32>
    %cst_6 = arith.constant 0.000000e+00 : f32
    %13 = vector.broadcast %cst_6 : f32 to vector<8x384xf32>
    %14 = vector.extract_strided_slice %6 {offsets = [0, 0, 0], sizes = [1, 8, 128], strides = [1, 1, 1]} : vector<1x8x1536xbf16> to vector<1x8x128xbf16>
    %15 = vector.extract_strided_slice %6 {offsets = [0, 0, 512], sizes = [1, 8, 128], strides = [1, 1, 1]} : vector<1x8x1536xbf16> to vector<1x8x128xbf16>
    %16 = vector.extract_strided_slice %6 {offsets = [0, 0, 1024], sizes = [1, 8, 128], strides = [1, 1, 1]} : vector<1x8x1536xbf16> to vector<1x8x128xbf16>
    "tpu.trace_start"() <{level = 10 : i32, message = "bqd,bkd->bqk"}> : () -> ()
    %cst_7 = arith.constant dense<0.000000e+00> : vector<1x8x8xf32>
    %17 = tpu.matmul %14, %15, %cst_7 {dimension_numbers = #tpu.dot_dimension_numbers<[2], [2], [1], [1], [0, 0, 0, 1, 1, 1], [0], [0]>} : vector<1x8x128xbf16>, vector<1x8x128xbf16>, vector<1x8x8xf32> -> vector<1x8x8xf32>
    "tpu.trace_stop"() : () -> ()
    %18 = vector.shape_cast %12 : vector<8x8xf32> to vector<1x8x8xf32>
    %19 = arith.addf %17, %18 : vector<1x8x8xf32>
    %cst_8 = arith.constant dense<0xFF800000> : vector<1x8xf32>
    %20 = vector.multi_reduction <maximumf>, %19, %cst_8 [2] : vector<1x8x8xf32> to vector<1x8xf32>
    %21 = vector.shape_cast %20 : vector<1x8xf32> to vector<1x8x1xf32>
    %22 = vector.broadcast %21 : vector<1x8x1xf32> to vector<1x8x8xf32>
    %23 = arith.subf %19, %22 : vector<1x8x8xf32>
    %24 = math.exp %23 : vector<1x8x8xf32>
    %cst_9 = arith.constant dense<0.000000e+00> : vector<1x8xf32>
    %25 = vector.multi_reduction <add>, %24, %cst_9 [2] : vector<1x8x8xf32> to vector<1x8xf32>
    %26 = vector.shape_cast %25 : vector<1x8xf32> to vector<1x8x1xf32>
    %27 = tpu.reciprocal %26 {approx = true} : vector<1x8x1xf32> -> vector<1x8x1xf32>
    %28 = vector.broadcast %27 : vector<1x8x1xf32> to vector<1x8x8xf32>
    %29 = arith.mulf %24, %28 : vector<1x8x8xf32>
    %30 = arith.truncf %29 : vector<1x8x8xf32> to vector<1x8x8xbf16>
    "tpu.trace_start"() <{level = 10 : i32, message = "bqk,bkd->bqd"}> : () -> ()
    %cst_10 = arith.constant dense<0.000000e+00> : vector<1x8x128xf32>
    %31 = tpu.matmul %30, %16, %cst_10 {dimension_numbers = #tpu.dot_dimension_numbers<[2], [1], [1], [2], [0, 0, 0, 1, 1, 2], [0], [0]>} : vector<1x8x8xbf16>, vector<1x8x128xbf16>, vector<1x8x128xf32> -> vector<1x8x128xf32>
    "tpu.trace_stop"() : () -> ()
    %32 = vector.shape_cast %31 : vector<1x8x128xf32> to vector<8x128xf32>
    %33 = arith.truncf %32 : vector<8x128xf32> to vector<8x128xbf16>
    %c0_11 = arith.constant 0 : index
    %c0_12 = arith.constant 0 : index
    %34 = vector.load %arg3[%c0_11, %c0_12] : memref<512x384xbf16, #tpu.memory_space<vmem>>, vector<128x384xbf16>
    %cst_13 = arith.constant dense<0.000000e+00> : vector<8x384xf32>
    %35 = tpu.matmul %33, %34, %cst_13 {dimension_numbers = #tpu.dot_dimension_numbers<[1], [0], [0], [1], [0, 0, 1, 1], [], []>} : vector<8x128xbf16>, vector<128x384xbf16>, vector<8x384xf32> -> vector<8x384xf32>
    %36 = arith.addf %13, %35 : vector<8x384xf32>
    %37 = vector.extract_strided_slice %6 {offsets = [0, 0, 128], sizes = [1, 8, 128], strides = [1, 1, 1]} : vector<1x8x1536xbf16> to vector<1x8x128xbf16>
    %38 = vector.extract_strided_slice %6 {offsets = [0, 0, 640], sizes = [1, 8, 128], strides = [1, 1, 1]} : vector<1x8x1536xbf16> to vector<1x8x128xbf16>
    %39 = vector.extract_strided_slice %6 {offsets = [0, 0, 1152], sizes = [1, 8, 128], strides = [1, 1, 1]} : vector<1x8x1536xbf16> to vector<1x8x128xbf16>
    "tpu.trace_start"() <{level = 10 : i32, message = "bqd,bkd->bqk"}> : () -> ()
    %cst_14 = arith.constant dense<0.000000e+00> : vector<1x8x8xf32>
    %40 = tpu.matmul %37, %38, %cst_14 {dimension_numbers = #tpu.dot_dimension_numbers<[2], [2], [1], [1], [0, 0, 0, 1, 1, 1], [0], [0]>} : vector<1x8x128xbf16>, vector<1x8x128xbf16>, vector<1x8x8xf32> -> vector<1x8x8xf32>
    "tpu.trace_stop"() : () -> ()
    %41 = vector.shape_cast %12 : vector<8x8xf32> to vector<1x8x8xf32>
    %42 = arith.addf %40, %41 : vector<1x8x8xf32>
    %cst_15 = arith.constant dense<0xFF800000> : vector<1x8xf32>
    %43 = vector.multi_reduction <maximumf>, %42, %cst_15 [2] : vector<1x8x8xf32> to vector<1x8xf32>
    %44 = vector.shape_cast %43 : vector<1x8xf32> to vector<1x8x1xf32>
    %45 = vector.broadcast %44 : vector<1x8x1xf32> to vector<1x8x8xf32>
    %46 = arith.subf %42, %45 : vector<1x8x8xf32>
    %47 = math.exp %46 : vector<1x8x8xf32>
    %cst_16 = arith.constant dense<0.000000e+00> : vector<1x8xf32>
    %48 = vector.multi_reduction <add>, %47, %cst_16 [2] : vector<1x8x8xf32> to vector<1x8xf32>
    %49 = vector.shape_cast %48 : vector<1x8xf32> to vector<1x8x1xf32>
    %50 = tpu.reciprocal %49 {approx = true} : vector<1x8x1xf32> -> vector<1x8x1xf32>
    %51 = vector.broadcast %50 : vector<1x8x1xf32> to vector<1x8x8xf32>
    %52 = arith.mulf %47, %51 : vector<1x8x8xf32>
    %53 = arith.truncf %52 : vector<1x8x8xf32> to vector<1x8x8xbf16>
    "tpu.trace_start"() <{level = 10 : i32, message = "bqk,bkd->bqd"}> : () -> ()
    %cst_17 = arith.constant dense<0.000000e+00> : vector<1x8x128xf32>
    %54 = tpu.matmul %53, %39, %cst_17 {dimension_numbers = #tpu.dot_dimension_numbers<[2], [1], [1], [2], [0, 0, 0, 1, 1, 2], [0], [0]>} : vector<1x8x8xbf16>, vector<1x8x128xbf16>, vector<1x8x128xf32> -> vector<1x8x128xf32>
    "tpu.trace_stop"() : () -> ()
    %55 = vector.shape_cast %54 : vector<1x8x128xf32> to vector<8x128xf32>
    %56 = arith.truncf %55 : vector<8x128xf32> to vector<8x128xbf16>
    %c128 = arith.constant 128 : index
    %c0_18 = arith.constant 0 : index
    %57 = vector.load %arg3[%c128, %c0_18] : memref<512x384xbf16, #tpu.memory_space<vmem>>, vector<128x384xbf16>
    %cst_19 = arith.constant dense<0.000000e+00> : vector<8x384xf32>
    %58 = tpu.matmul %56, %57, %cst_19 {dimension_numbers = #tpu.dot_dimension_numbers<[1], [0], [0], [1], [0, 0, 1, 1], [], []>} : vector<8x128xbf16>, vector<128x384xbf16>, vector<8x384xf32> -> vector<8x384xf32>
    %59 = arith.addf %36, %58 : vector<8x384xf32>
    %60 = vector.extract_strided_slice %6 {offsets = [0, 0, 256], sizes = [1, 8, 128], strides = [1, 1, 1]} : vector<1x8x1536xbf16> to vector<1x8x128xbf16>
    %61 = vector.extract_strided_slice %6 {offsets = [0, 0, 768], sizes = [1, 8, 128], strides = [1, 1, 1]} : vector<1x8x1536xbf16> to vector<1x8x128xbf16>
    %62 = vector.extract_strided_slice %6 {offsets = [0, 0, 1280], sizes = [1, 8, 128], strides = [1, 1, 1]} : vector<1x8x1536xbf16> to vector<1x8x128xbf16>
    "tpu.trace_start"() <{level = 10 : i32, message = "bqd,bkd->bqk"}> : () -> ()
    %cst_20 = arith.constant dense<0.000000e+00> : vector<1x8x8xf32>
    %63 = tpu.matmul %60, %61, %cst_20 {dimension_numbers = #tpu.dot_dimension_numbers<[2], [2], [1], [1], [0, 0, 0, 1, 1, 1], [0], [0]>} : vector<1x8x128xbf16>, vector<1x8x128xbf16>, vector<1x8x8xf32> -> vector<1x8x8xf32>
    "tpu.trace_stop"() : () -> ()
    %64 = vector.shape_cast %12 : vector<8x8xf32> to vector<1x8x8xf32>
    %65 = arith.addf %63, %64 : vector<1x8x8xf32>
    %cst_21 = arith.constant dense<0xFF800000> : vector<1x8xf32>
    %66 = vector.multi_reduction <maximumf>, %65, %cst_21 [2] : vector<1x8x8xf32> to vector<1x8xf32>
    %67 = vector.shape_cast %66 : vector<1x8xf32> to vector<1x8x1xf32>
    %68 = vector.broadcast %67 : vector<1x8x1xf32> to vector<1x8x8xf32>
    %69 = arith.subf %65, %68 : vector<1x8x8xf32>
    %70 = math.exp %69 : vector<1x8x8xf32>
    %cst_22 = arith.constant dense<0.000000e+00> : vector<1x8xf32>
    %71 = vector.multi_reduction <add>, %70, %cst_22 [2] : vector<1x8x8xf32> to vector<1x8xf32>
    %72 = vector.shape_cast %71 : vector<1x8xf32> to vector<1x8x1xf32>
    %73 = tpu.reciprocal %72 {approx = true} : vector<1x8x1xf32> -> vector<1x8x1xf32>
    %74 = vector.broadcast %73 : vector<1x8x1xf32> to vector<1x8x8xf32>
    %75 = arith.mulf %70, %74 : vector<1x8x8xf32>
    %76 = arith.truncf %75 : vector<1x8x8xf32> to vector<1x8x8xbf16>
    "tpu.trace_start"() <{level = 10 : i32, message = "bqk,bkd->bqd"}> : () -> ()
    %cst_23 = arith.constant dense<0.000000e+00> : vector<1x8x128xf32>
    %77 = tpu.matmul %76, %62, %cst_23 {dimension_numbers = #tpu.dot_dimension_numbers<[2], [1], [1], [2], [0, 0, 0, 1, 1, 2], [0], [0]>} : vector<1x8x8xbf16>, vector<1x8x128xbf16>, vector<1x8x128xf32> -> vector<1x8x128xf32>
    "tpu.trace_stop"() : () -> ()
    %78 = vector.shape_cast %77 : vector<1x8x128xf32> to vector<8x128xf32>
    %79 = arith.truncf %78 : vector<8x128xf32> to vector<8x128xbf16>
    %c256 = arith.constant 256 : index
    %c0_24 = arith.constant 0 : index
    %80 = vector.load %arg3[%c256, %c0_24] : memref<512x384xbf16, #tpu.memory_space<vmem>>, vector<128x384xbf16>
    %cst_25 = arith.constant dense<0.000000e+00> : vector<8x384xf32>
    %81 = tpu.matmul %79, %80, %cst_25 {dimension_numbers = #tpu.dot_dimension_numbers<[1], [0], [0], [1], [0, 0, 1, 1], [], []>} : vector<8x128xbf16>, vector<128x384xbf16>, vector<8x384xf32> -> vector<8x384xf32>
    %82 = arith.addf %59, %81 : vector<8x384xf32>
    %83 = vector.extract_strided_slice %6 {offsets = [0, 0, 384], sizes = [1, 8, 128], strides = [1, 1, 1]} : vector<1x8x1536xbf16> to vector<1x8x128xbf16>
    %84 = vector.extract_strided_slice %6 {offsets = [0, 0, 896], sizes = [1, 8, 128], strides = [1, 1, 1]} : vector<1x8x1536xbf16> to vector<1x8x128xbf16>
    %85 = vector.extract_strided_slice %6 {offsets = [0, 0, 1408], sizes = [1, 8, 128], strides = [1, 1, 1]} : vector<1x8x1536xbf16> to vector<1x8x128xbf16>
    "tpu.trace_start"() <{level = 10 : i32, message = "bqd,bkd->bqk"}> : () -> ()
    %cst_26 = arith.constant dense<0.000000e+00> : vector<1x8x8xf32>
    %86 = tpu.matmul %83, %84, %cst_26 {dimension_numbers = #tpu.dot_dimension_numbers<[2], [2], [1], [1], [0, 0, 0, 1, 1, 1], [0], [0]>} : vector<1x8x128xbf16>, vector<1x8x128xbf16>, vector<1x8x8xf32> -> vector<1x8x8xf32>
    "tpu.trace_stop"() : () -> ()
    %87 = vector.shape_cast %12 : vector<8x8xf32> to vector<1x8x8xf32>
    %88 = arith.addf %86, %87 : vector<1x8x8xf32>
    %cst_27 = arith.constant dense<0xFF800000> : vector<1x8xf32>
    %89 = vector.multi_reduction <maximumf>, %88, %cst_27 [2] : vector<1x8x8xf32> to vector<1x8xf32>
    %90 = vector.shape_cast %89 : vector<1x8xf32> to vector<1x8x1xf32>
    %91 = vector.broadcast %90 : vector<1x8x1xf32> to vector<1x8x8xf32>
    %92 = arith.subf %88, %91 : vector<1x8x8xf32>
    %93 = math.exp %92 : vector<1x8x8xf32>
    %cst_28 = arith.constant dense<0.000000e+00> : vector<1x8xf32>
    %94 = vector.multi_reduction <add>, %93, %cst_28 [2] : vector<1x8x8xf32> to vector<1x8xf32>
    %95 = vector.shape_cast %94 : vector<1x8xf32> to vector<1x8x1xf32>
    %96 = tpu.reciprocal %95 {approx = true} : vector<1x8x1xf32> -> vector<1x8x1xf32>
    %97 = vector.broadcast %96 : vector<1x8x1xf32> to vector<1x8x8xf32>
    %98 = arith.mulf %93, %97 : vector<1x8x8xf32>
    %99 = arith.truncf %98 : vector<1x8x8xf32> to vector<1x8x8xbf16>
    "tpu.trace_start"() <{level = 10 : i32, message = "bqk,bkd->bqd"}> : () -> ()
    %cst_29 = arith.constant dense<0.000000e+00> : vector<1x8x128xf32>
    %100 = tpu.matmul %99, %85, %cst_29 {dimension_numbers = #tpu.dot_dimension_numbers<[2], [1], [1], [2], [0, 0, 0, 1, 1, 2], [0], [0]>} : vector<1x8x8xbf16>, vector<1x8x128xbf16>, vector<1x8x128xf32> -> vector<1x8x128xf32>
    "tpu.trace_stop"() : () -> ()
    %101 = vector.shape_cast %100 : vector<1x8x128xf32> to vector<8x128xf32>
    %102 = arith.truncf %101 : vector<8x128xf32> to vector<8x128xbf16>
    %c384 = arith.constant 384 : index
    %c0_30 = arith.constant 0 : index
    %103 = vector.load %arg3[%c384, %c0_30] : memref<512x384xbf16, #tpu.memory_space<vmem>>, vector<128x384xbf16>
    %cst_31 = arith.constant dense<0.000000e+00> : vector<8x384xf32>
    %104 = tpu.matmul %102, %103, %cst_31 {dimension_numbers = #tpu.dot_dimension_numbers<[1], [0], [0], [1], [0, 0, 1, 1], [], []>} : vector<8x128xbf16>, vector<128x384xbf16>, vector<8x384xf32> -> vector<8x384xf32>
    %105 = arith.addf %82, %104 : vector<8x384xf32>
    %106 = vector.shape_cast %105 : vector<8x384xf32> to vector<1x8x384xf32>
    %c0_32 = arith.constant 0 : index
    %c0_33 = arith.constant 0 : index
    %107 = vector.load %arg4[%c0_32, %c0_33] : memref<1x384xf32, #tpu.memory_space<vmem>>, vector<1x384xf32>
    %108 = vector.shape_cast %107 : vector<1x384xf32> to vector<1x1x384xf32>
    %109 = vector.broadcast %108 : vector<1x1x384xf32> to vector<1x8x384xf32>
    %110 = arith.addf %106, %109 : vector<1x8x384xf32>
    %c0_34 = arith.constant 0 : index
    %c0_35 = arith.constant 0 : index
    %c0_36 = arith.constant 0 : index
    %111 = vector.load %arg5[%c0_34, %c0_35, %c0_36] : memref<1x8x384xf32, #tpu.memory_space<vmem>>, vector<1x8x384xf32>
    tpu.vector_store %arg5[%c0_34, %c0_35, %c0_36], %110 {strides = array<i32>} : memref<1x8x384xf32, #tpu.memory_space<vmem>>, vector<1x8x384xf32>,
    return
  }
  func.func @transform_0(%arg0: i32) -> (i32, i32, i32) {
    %c0_i32 = arith.constant 0 : i32
    %c0_i32_0 = arith.constant 0 : i32
    %c0_i32_1 = arith.constant 0 : i32
    return %arg0, %c0_i32, %c0_i32_0 : i32, i32, i32
  }
  func.func @transform_1(%arg0: i32) -> (i32, i32) {
    %c0_i32 = arith.constant 0 : i32
    %c0_i32_0 = arith.constant 0 : i32
    %c0_i32_1 = arith.constant 0 : i32
    return %c0_i32, %c0_i32_0 : i32, i32
  }
  func.func @transform_2(%arg0: i32) -> (i32, i32) {
    %c0_i32 = arith.constant 0 : i32
    %c0_i32_0 = arith.constant 0 : i32
    %c0_i32_1 = arith.constant 0 : i32
    return %c0_i32, %c0_i32_0 : i32, i32
  }
  func.func @transform_3(%arg0: i32) -> (i32, i32) {
    %c0_i32 = arith.constant 0 : i32
    %c0_i32_0 = arith.constant 0 : i32
    %c0_i32_1 = arith.constant 0 : i32
    return %c0_i32, %c0_i32_0 : i32, i32
  }
  func.func @transform_4(%arg0: i32) -> (i32, i32, i32) {
    %c0_i32 = arith.constant 0 : i32
    %c0_i32_0 = arith.constant 0 : i32
    %c0_i32_1 = arith.constant 0 : i32
    return %arg0, %c0_i32, %c0_i32_0 : i32, i32, i32
  }
}

</mosaic_0001>

<llo_original>
// kernel: tpu_custom_call.1
$region0: #{tpu_custom_call.1}
  #allocation0 [shape = 'u32[]', space=smem, size = 0x4, offset = 0x4, fixed_abs, tag = 'smem constant byte address 0x4 - core index']
  #allocation1 [shape = 'u32[72,128]{1,0:T(1,128)}', space=vmem, size = 0x9000, scoped, tag = 'internal scratch']
  %s0 = inlined_call_operand.hbm [shape: f32[2,8,384], index: 0, kind: input, shape index: {}]
  %s1 = inlined_call_operand.hbm [shape: bf16[384,1536], index: 1, kind: input, shape index: {}]
  %s2 = inlined_call_operand.hbm [shape: bf16[512,384], index: 2, kind: input, shape index: {}]
  %s3 = inlined_call_operand.hbm [shape: f32[1,384], index: 3, kind: input, shape index: {}]
  %s4 = inlined_call_operand.hbm [shape: f32[2,8,384], index: 4, kind: output, shape index: {}]
  %s5 = sld [smem:[#allocation0]]
  $region65: #{tpu_custom_call.1} parent=0
    _
  %s7 = ssub.s32 1, %s5
  %s8 = scalar_select 0, %s7, %s5
  $region1: #{tpu_custom_call.1} parent=0
    #allocation2 [shape = 'u8[24576]{0}', space=vmem, size = 0x6000, scoped, tag = 'input window, operand 0']
    #allocation3 [shape = 's32[2]{0}', space=sflag, size = 0x8, scoped, tag = 'scoped memory for tpu_custom_call.1']
    #allocation4 [shape = 's32[2]{0}', space=sflag, size = 0x8, scoped, tag = 'scoped memory for tpu_custom_call.1']
    #allocation5 [shape = 'u8[1179648]{0}', space=vmem, size = 0x120000, scoped, tag = 'input window, operand 1, single buffered']
    #allocation6 [shape = 's32[1]{0}', space=sflag, size = 0x4, scoped, tag = 'scoped memory for tpu_custom_call.1']
    #allocation7 [shape = 'u8[393216]{0}', space=vmem, size = 0x60000, scoped, tag = 'input window, operand 2, single buffered']
    #allocation8 [shape = 'u8[1536]{0}', space=vmem, size = 0x800, scoped, tag = 'input window, operand 3, single buffered']
    #allocation9 [shape = 's32[1]{0}', space=sflag, size = 0x4, scoped, tag = 'scoped memory for tpu_custom_call.1']
    #allocation10 [shape = 'u8[24576]{0}', space=vmem, size = 0x6000, scoped, tag = 'output window, operand 0']
    %9 = vsyncpa [#allocation3], 0
    %s10 = scalar_lea.sflag [#allocation3], 1
    %11 = vsyncpa %s10, 0
    %12 = vsyncpa [#allocation6], 0
    %13 = vsyncpa [#allocation9], 0
    %14 = vsyncpa [#allocation4], 0
    %s15 = scalar_lea.sflag [#allocation4], 1
    %16 = vsyncpa %s15, 0
    loop: start=0, step=1, limit=4
    $region2: #{tpu_custom_call.1} parent=1 // loop_pre_header
      _
    $region3: #{tpu_custom_call.1} parent=1 // loop_header
      %s18 = sphi 0, %s22
      %p19 = scmp.ge.s32.totalorder %s18, 4
      %s28 = sphi 0, %s30
      %s31 = sphi 0, %s28
      %s32 = sphi 0, %s31
      %s48 = sphi 0, %s32
      %s52 = sphi 0, %s52
      %s54 = sphi 0, %s52
      %s55 = sphi 0, %s54
      %s69 = sphi 0, %s55
      %s73 = sphi 0, %s73
      %s75 = sphi 0, %s73
      %s76 = sphi 0, %s75
      %s90 = sphi 0, %s76
      %s94 = sphi 0, %s94
      %s96 = sphi 0, %s94
      %s97 = sphi 0, %s96
      %s111 = sphi 0, %s97
      %s117 = sphi 0, %s119
      %s120 = sphi 0, %s117
      %s121 = sphi 0, %s120
      %s137 = sphi 0, %s121
    $region4: #{tpu_custom_call.1} parent=1 // loop_header_branch
      %21 = sbr.rel (%p19) target = $region8
    $region5: #{tpu_custom_call.1} parent=1 // loop_body
      %s23 = ssub.s32 %s18, 1
      %s24 = ssub.s32 %s18, 2
      %s25 = sadd.s32 %s18, 1
      %s26 = ssub.s32 %s18, %s25
      %p27 = scmp.eq.s32.totalorder %s26, 0
      %s29 = sadd.s32 %s28, 1
      %s30 = scalar_select %p27, %s28, %s29
      %p33 = pneg %p27
      %p34 = scmp.eq.s32.totalorder %s18, 1
      %p35 = por %p33, %p34
      %p36 = scmp.ne.s32.totalorder %s28, %s31
      %p37 = scmp.eq.s32.totalorder %s18, 0
      %p38 = por %p36, %p37
      %p39 = scmp.ne.s32.totalorder %s28, %s31
      %p40 = scmp.eq.s32.totalorder %s23, 1
      %p41 = por %p39, %p40
      %p42 = scmp.ne.s32.totalorder %s31, %s32
      %p43 = scmp.eq.s32.totalorder %s23, 0
      %p44 = por %p42, %p43
      %p45 = scmp.ne.s32.totalorder %s31, %s32
      %p46 = scmp.eq.s32.totalorder %s24, 1
      %p47 = por %p45, %p46
      %p49 = scmp.ne.s32.totalorder %s32, %s48
      %p50 = scmp.eq.s32.totalorder %s24, 0
      %p51 = por %p49, %p50
      %s53 = sadd.s32 %s52, 1
      %p56 = scmp.eq.s32.totalorder %s18, 1
      %p57 = scmp.ne.s32.totalorder %s52, %s54
      %p58 = scmp.eq.s32.totalorder %s18, 0
      %p59 = por %p57, %p58
      %p60 = scmp.ne.s32.totalorder %s52, %s54
      %p61 = scmp.eq.s32.totalorder %s23, 1
      %p62 = por %p60, %p61
      %p63 = scmp.ne.s32.totalorder %s54, %s55
      %p64 = scmp.eq.s32.totalorder %s23, 0
      %p65 = por %p63, %p64
      %p66 = scmp.ne.s32.totalorder %s54, %s55
      %p67 = scmp.eq.s32.totalorder %s24, 1
      %p68 = por %p66, %p67
      %p70 = scmp.ne.s32.totalorder %s55, %s69
      %p71 = scmp.eq.s32.totalorder %s24, 0
      %p72 = por %p70, %p71
      %s74 = sadd.s32 %s73, 1
      %p77 = scmp.eq.s32.totalorder %s18, 1
      %p78 = scmp.ne.s32.totalorder %s73, %s75
      %p79 = scmp.eq.s32.totalorder %s18, 0
      %p80 = por %p78, %p79
      %p81 = scmp.ne.s32.totalorder %s73, %s75
      %p82 = scmp.eq.s32.totalorder %s23, 1
      %p83 = por %p81, %p82
      %p84 = scmp.ne.s32.totalorder %s75, %s76
      %p85 = scmp.eq.s32.totalorder %s23, 0
      %p86 = por %p84, %p85
      %p87 = scmp.ne.s32.totalorder %s75, %s76
      %p88 = scmp.eq.s32.totalorder %s24, 1
      %p89 = por %p87, %p88
      %p91 = scmp.ne.s32.totalorder %s76, %s90
      %p92 = scmp.eq.s32.totalorder %s24, 0
      %p93 = por %p91, %p92
      %s95 = sadd.s32 %s94, 1
      %p98 = scmp.eq.s32.totalorder %s18, 1
      %p99 = scmp.ne.s32.totalorder %s94, %s96
      %p100 = scmp.eq.s32.totalorder %s18, 0
      %p101 = por %p99, %p100
      %p102 = scmp.ne.s32.totalorder %s94, %s96
      %p103 = scmp.eq.s32.totalorder %s23, 1
      %p104 = por %p102, %p103
      %p105 = scmp.ne.s32.totalorder %s96, %s97
      %p106 = scmp.eq.s32.totalorder %s23, 0
      %p107 = por %p105, %p106
      %p108 = scmp.ne.s32.totalorder %s96, %s97
      %p109 = scmp.eq.s32.totalorder %s24, 1
      %p110 = por %p108, %p109
      %p112 = scmp.ne.s32.totalorder %s97, %s111
      %p113 = scmp.eq.s32.totalorder %s24, 0
      %p114 = por %p112, %p113
      %s115 = ssub.s32 %s18, %s25
      %p116 = scmp.eq.s32.totalorder %s115, 0
      %s118 = sadd.s32 %s117, 1
      %s119 = scalar_select %p116, %s117, %s118
      %p122 = pneg %p116
      %p123 = scmp.eq.s32.totalorder %s18, 1
      %p124 = por %p122, %p123
      %p125 = scmp.ne.s32.totalorder %s117, %s120
      %p126 = scmp.eq.s32.totalorder %s18, 0
      %p127 = por %p125, %p126
      %p128 = scmp.ne.s32.totalorder %s117, %s120
      %p129 = scmp.eq.s32.totalorder %s23, 1
      %p130 = por %p128, %p129
      %p131 = scmp.ne.s32.totalorder %s120, %s121
      %p132 = scmp.eq.s32.totalorder %s23, 0
      %p133 = por %p131, %p132
      %p134 = scmp.ne.s32.totalorder %s120, %s121
      %p135 = scmp.eq.s32.totalorder %s24, 1
      %p136 = por %p134, %p135
      %p138 = scmp.ne.s32.totalorder %s121, %s137
      %p139 = scmp.eq.s32.totalorder %s24, 0
      %p140 = por %p138, %p139
      %p141 = scmp.le.s32.totalorder 1, %s18
      %p142 = scmp.lt.s32.totalorder %s18, 3
      %p143 = pnand %p141, %p142
      %p144 = pneg %p143
      // Predicated region
      $region9: #{tpu_custom_call.1} parent=5 // pred_check
        _
      $region10: #{tpu_custom_call.1} parent=5 // pred_check_branch
        %146 = sbr.rel (%p143) target = $region12
      $region11: #{tpu_custom_call.1} parent=5 // pred_region
        %s147 = ssub.s32 %s18, 1
        // Predicated region
        $region13: #{tpu_custom_call.1} parent=11 // pred_check
          %p148 = pneg %p65
        $region14: #{tpu_custom_call.1} parent=11 // pred_check_branch
          %150 = sbr.rel (%p148) target = $region16
        $region15: #{tpu_custom_call.1} parent=11 // pred_region
          %152 = vsyncadd [#allocation6], 0
          %s153 = sshll.u32 %s1, 4
          %s154 = int_to_ptr.hbm [resolvable:$true] %s153
          %s155 = sshll.u32 [#allocation5], 4
          %s156 = int_to_ptr.vmem [resolvable:$true] %s155
          %161 = dma.hbm_to_vmem [thread:$0]  %s154, 36864, %s156, [#allocation6], 768, 768, 48
        $region16: #{tpu_custom_call.1} parent=11 // pred_fallthru
          _
        // Predicated region
        $region17: #{tpu_custom_call.1} parent=11 // pred_check
          %p162 = pneg %p86
        $region18: #{tpu_custom_call.1} parent=11 // pred_check_branch
          %164 = sbr.rel (%p162) target = $region20
        $region19: #{tpu_custom_call.1} parent=11 // pred_region
          %166 = vsyncadd [#allocation6], 0
          %s167 = sshll.u32 %s2, 4
          %s168 = int_to_ptr.hbm [resolvable:$true] %s167
          %s169 = sshll.u32 [#allocation7], 4
          %s170 = int_to_ptr.vmem [resolvable:$true] %s169
          %175 = dma.hbm_to_vmem [thread:$0]  %s168, 12288, %s170, [#allocation6], 192, 192, 12
        $region20: #{tpu_custom_call.1} parent=11 // pred_fallthru
          _
        // Predicated region
        $region21: #{tpu_custom_call.1} parent=11 // pred_check
          %p176 = pneg %p107
        $region22: #{tpu_custom_call.1} parent=11 // pred_check_branch
          %178 = sbr.rel (%p176) target = $region24
        $region23: #{tpu_custom_call.1} parent=11 // pred_region
          %180 = vsyncadd [#allocation9], 0
          %s182 = sshll.u32 %s3, 4
          %s183 = int_to_ptr.hbm [resolvable:$true] %s182
          %s184 = sshll.u32 [#allocation8], 4
          %s185 = int_to_ptr.vmem [resolvable:$true] %s184
          %187 = dma.hbm_to_vmem [thread:$0]  %s183, 48, %s185, [#allocation9]
        $region24: #{tpu_custom_call.1} parent=11 // pred_fallthru
          _
      $region12: #{tpu_custom_call.1} parent=5 // pred_fallthru
        _
      %p188 = scmp.lt.s32.totalorder %s18, 2
      // Predicated region
      $region25: #{tpu_custom_call.1} parent=5 // pred_check
        %p189 = pneg %p188
      $region26: #{tpu_custom_call.1} parent=5 // pred_check_branch
        %191 = sbr.rel (%p189) target = $region28
      $region27: #{tpu_custom_call.1} parent=5 // pred_region
        // Predicated region
        $region29: #{tpu_custom_call.1} parent=27 // pred_check
          %p192 = pneg %p38
        $region30: #{tpu_custom_call.1} parent=27 // pred_check_branch
          %194 = sbr.rel (%p192) target = $region32
        $region31: #{tpu_custom_call.1} parent=27 // pred_region
          %s195 = sand.u32 %s28, 1
          %s196 = scalar_lea.sflag [#allocation3], %s195
          %s197 = sand.u32 %s28, 1
          %s198 = smul.addr %s197, 24
          %s199 = scalar_lea.vmem [#allocation2], %s198
          %201 = vsyncadd %s196, 0
          %s202 = smul.addr %s18, 3
          %s203 = smul.addr %s202, 8
          %s204 = scalar_lea.hbm %s0, %s203
          %s206 = sshll.u32 %s204, 4
          %s207 = int_to_ptr.hbm [resolvable:$true] %s206
          %s208 = sshll.u32 %s199, 4
          %s209 = int_to_ptr.vmem [resolvable:$true] %s208
          %211 = dma.hbm_to_vmem [thread:$0]  %s207, 384, %s209, %s196
        $region32: #{tpu_custom_call.1} parent=27 // pred_fallthru
          _
      $region28: #{tpu_custom_call.1} parent=5 // pred_fallthru
        _
      %p212 = scmp.le.s32.totalorder 1, %s18
      %p213 = scmp.lt.s32.totalorder %s18, 3
      %p214 = pnand %p212, %p213
      %p215 = pneg %p214
      // Predicated region
      $region33: #{tpu_custom_call.1} parent=5 // pred_check
        _
      $region34: #{tpu_custom_call.1} parent=5 // pred_check_branch
        %217 = sbr.rel (%p214) target = $region36
      $region35: #{tpu_custom_call.1} parent=5 // pred_region
        %s218 = ssub.s32 %s18, 1
        %s219 = sand.u32 %s31, 1
        %s220 = scalar_lea.sflag [#allocation3], %s219
        %s221 = sand.u32 %s31, 1
        %s222 = smul.addr %s221, 24
        %s223 = scalar_lea.vmem [#allocation2], %s222
        // Predicated region
        $region37: #{tpu_custom_call.1} parent=35 // pred_check
          %p224 = pneg %p44
        $region38: #{tpu_custom_call.1} parent=35 // pred_check_branch
          %226 = sbr.rel (%p224) target = $region40
        $region39: #{tpu_custom_call.1} parent=35 // pred_region
          %228 = dma.done %s220, 384
        $region40: #{tpu_custom_call.1} parent=35 // pred_fallthru
          _
        // Predicated region
        $region41: #{tpu_custom_call.1} parent=35 // pred_check
          %p229 = pneg %p65
        $region42: #{tpu_custom_call.1} parent=35 // pred_check_branch
          %231 = sbr.rel (%p229) target = $region44
        $region43: #{tpu_custom_call.1} parent=35 // pred_region
          %233 = dma.done [#allocation6], 36864
        $region44: #{tpu_custom_call.1} parent=35 // pred_fallthru
          _
        // Predicated region
        $region45: #{tpu_custom_call.1} parent=35 // pred_check
          %p234 = pneg %p86
        $region46: #{tpu_custom_call.1} parent=35 // pred_check_branch
          %236 = sbr.rel (%p234) target = $region48
        $region47: #{tpu_custom_call.1} parent=35 // pred_region
          %238 = dma.done [#allocation6], 12288
        $region48: #{tpu_custom_call.1} parent=35 // pred_fallthru
          _
        // Predicated region
        $region49: #{tpu_custom_call.1} parent=35 // pred_check
          %p239 = pneg %p107
        $region50: #{tpu_custom_call.1} parent=35 // pred_check_branch
          %241 = sbr.rel (%p239) target = $region52
        $region51: #{tpu_custom_call.1} parent=35 // pred_region
          %243 = dma.done [#allocation9], 48
        $region52: #{tpu_custom_call.1} parent=35 // pred_fallthru
          _
        %s244 = sand.u32 %s31, 1
        %s245 = scalar_lea.sflag [#allocation3], %s244
        %s246 = sand.u32 %s31, 1
        %s247 = smul.addr %s246, 24
        %s248 = scalar_lea.vmem [#allocation2], %s247
        %p249 = pneg %p44
        %p250 = pneg %p41
        %p251 = pneg %p65
        %p252 = pneg %p62
        %p253 = pneg %p86
        %p254 = pneg %p83
        %p255 = pneg %p107
        %p256 = pneg %p104
        %p257 = pneg %p133
        %p258 = pneg %p130
        %s259 = sand.u32 %s120, 1
        %s260 = scalar_lea.sflag [#allocation4], %s259
        %s261 = sand.u32 %s120, 1
        %s262 = smul.addr %s261, 24
        %s263 = scalar_lea.vmem [#allocation10], %s262
        %v265 = vld [vmem:[%s223] sm:$0xff]
        %v266 = vld [vmem:[%s223 + $0x8] sm:$0xff]
        %v267 = vld [vmem:[%s223 + $0x10] sm:$0xff]
        %v268 = vpack.c.bf16 %v265, %v265
        %v269 = vpack.c.bf16 %v266, %v266
        %v270 = vpack.c.bf16 %v267, %v267
        %v271 = vld [vmem:[#allocation5] sm:$0xff]
        %v272 = vld [vmem:[#allocation5 + $0x8] sm:$0xff]
        %v273 = vld [vmem:[#allocation5 + $0x10] sm:$0xff]
        %v274 = vld [vmem:[#allocation5 + $0x18] sm:$0xff]
        %v275 = vld [vmem:[#allocation5 + $0x20] sm:$0xff]
        %v276 = vld [vmem:[#allocation5 + $0x28] sm:$0xff]
        %v277 = vld [vmem:[#allocation5 + $0x30] sm:$0xff]
        %v278 = vld [vmem:[#allocation5 + $0x38] sm:$0xff]
        %v279 = vld [vmem:[#allocation5 + $0x40] sm:$0xff]
        %v280 = vld [vmem:[#allocation5 + $0x48] sm:$0xff]
        %v281 = vld [vmem:[#allocation5 + $0x50] sm:$0xff]
        %v282 = vld [vmem:[#allocation5 + $0x58] sm:$0xff]
        %v283 = vld [vmem:[#allocation5 + $0x60] sm:$0xff]
        %v284 = vld [vmem:[#allocation5 + $0x68] sm:$0xff]
        %v285 = vld [vmem:[#allocation5 + $0x70] sm:$0xff]
        %v286 = vld [vmem:[#allocation5 + $0x78] sm:$0xff]
        %v287 = vld [vmem:[#allocation5 + $0x80] sm:$0xff]
        %v288 = vld [vmem:[#allocation5 + $0x88] sm:$0xff]
        %v289 = vld [vmem:[#allocation5 + $0x90] sm:$0xff]
        %v290 = vld [vmem:[#allocation5 + $0x98] sm:$0xff]
        %v291 = vld [vmem:[#allocation5 + $0xa0] sm:$0xff]
        %v292 = vld [vmem:[#allocation5 + $0xa8] sm:$0xff]
        %v293 = vld [vmem:[#allocation5 + $0xb0] sm:$0xff]
        %v294 = vld [vmem:[#allocation5 + $0xb8] sm:$0xff]
        %v295 = vld [vmem:[#allocation5 + $0xc0] sm:$0xff]
        %v296 = vld [vmem:[#allocation5 + $0xc8] sm:$0xff]
        %v297 = vld [vmem:[#allocation5 + $0xd0] sm:$0xff]
        %v298 = vld [vmem:[#allocation5 + $0xd8] sm:$0xff]
        %v299 = vld [vmem:[#allocation5 + $0xe0] sm:$0xff]
        %v300 = vld [vmem:[#allocation5 + $0xe8] sm:$0xff]
        %v301 = vld [vmem:[#allocation5 + $0xf0] sm:$0xff]
        %v302 = vld [vmem:[#allocation5 + $0xf8] sm:$0xff]
        %v303 = vld [vmem:[#allocation5 + $0x100] sm:$0xff]
        %v304 = vld [vmem:[#allocation5 + $0x108] sm:$0xff]
        %v305 = vld [vmem:[#allocation5 + $0x110] sm:$0xff]
        %v306 = vld [vmem:[#allocation5 + $0x118] sm:$0xff]
        %v307 = vld [vmem:[#allocation5 + $0x120] sm:$0xff]
        %v308 = vld [vmem:[#allocation5 + $0x128] sm:$0xff]
        %v309 = vld [vmem:[#allocation5 + $0x130] sm:$0xff]
        %v310 = vld [vmem:[#allocation5 + $0x138] sm:$0xff]
        %v311 = vld [vmem:[#allocation5 + $0x140] sm:$0xff]
        %v312 = vld [vmem:[#allocation5 + $0x148] sm:$0xff]
        %v313 = vld [vmem:[#allocation5 + $0x150] sm:$0xff]
        %v314 = vld [vmem:[#allocation5 + $0x158] sm:$0xff]
        %v315 = vld [vmem:[#allocation5 + $0x160] sm:$0xff]
        %v316 = vld [vmem:[#allocation5 + $0x168] sm:$0xff]
        %v317 = vld [vmem:[#allocation5 + $0x170] sm:$0xff]
        %v318 = vld [vmem:[#allocation5 + $0x178] sm:$0xff]
        %v319 = vld [vmem:[#allocation5 + $0x180] sm:$0xff]
        %v320 = vld [vmem:[#allocation5 + $0x188] sm:$0xff]
        %v321 = vld [vmem:[#allocation5 + $0x190] sm:$0xff]
        %v322 = vld [vmem:[#allocation5 + $0x198] sm:$0xff]
        %v323 = vld [vmem:[#allocation5 + $0x1a0] sm:$0xff]
        %v324 = vld [vmem:[#allocation5 + $0x1a8] sm:$0xff]
        %v325 = vld [vmem:[#allocation5 + $0x1b0] sm:$0xff]
        %v326 = vld [vmem:[#allocation5 + $0x1b8] sm:$0xff]
        %v327 = vld [vmem:[#allocation5 + $0x1c0] sm:$0xff]
        %v328 = vld [vmem:[#allocation5 + $0x1c8] sm:$0xff]
        %v329 = vld [vmem:[#allocation5 + $0x1d0] sm:$0xff]
        %v330 = vld [vmem:[#allocation5 + $0x1d8] sm:$0xff]
        %v331 = vld [vmem:[#allocation5 + $0x1e0] sm:$0xff]
        %v332 = vld [vmem:[#allocation5 + $0x1e8] sm:$0xff]
        %v333 = vld [vmem:[#allocation5 + $0x1f0] sm:$0xff]
        %v334 = vld [vmem:[#allocation5 + $0x1f8] sm:$0xff]
        %v335 = vld [vmem:[#allocation5 + $0x200] sm:$0xff]
        %v336 = vld [vmem:[#allocation5 + $0x208] sm:$0xff]
        %v337 = vld [vmem:[#allocation5 + $0x210] sm:$0xff]
        %v338 = vld [vmem:[#allocation5 + $0x218] sm:$0xff]
        %v339 = vld [vmem:[#allocation5 + $0x220] sm:$0xff]
        %v340 = vld [vmem:[#allocation5 + $0x228] sm:$0xff]
        %v341 = vld [vmem:[#allocation5 + $0x230] sm:$0xff]
        %v342 = vld [vmem:[#allocation5 + $0x238] sm:$0xff]
        %v343 = vld [vmem:[#allocation5 + $0x240] sm:$0xff]
        %v344 = vld [vmem:[#allocation5 + $0x248] sm:$0xff]
        %v345 = vld [vmem:[#allocation5 + $0x250] sm:$0xff]
        %v346 = vld [vmem:[#allocation5 + $0x258] sm:$0xff]
        %v347 = vld [vmem:[#allocation5 + $0x260] sm:$0xff]
        %v348 = vld [vmem:[#allocation5 + $0x268] sm:$0xff]
        %v349 = vld [vmem:[#allocation5 + $0x270] sm:$0xff]
        %v350 = vld [vmem:[#allocation5 + $0x278] sm:$0xff]
        %v351 = vld [vmem:[#allocation5 + $0x280] sm:$0xff]
        %v352 = vld [vmem:[#allocation5 + $0x288] sm:$0xff]
        %v353 = vld [vmem:[#allocation5 + $0x290] sm:$0xff]
        %v354 = vld [vmem:[#allocation5 + $0x298] sm:$0xff]
        %v355 = vld [vmem:[#allocation5 + $0x2a0] sm:$0xff]
        %v356 = vld [vmem:[#allocation5 + $0x2a8] sm:$0xff]
        %v357 = vld [vmem:[#allocation5 + $0x2b0] sm:$0xff]
        %v358 = vld [vmem:[#allocation5 + $0x2b8] sm:$0xff]
        %v359 = vld [vmem:[#allocation5 + $0x2c0] sm:$0xff]
        %v360 = vld [vmem:[#allocation5 + $0x2c8] sm:$0xff]
        %v361 = vld [vmem:[#allocation5 + $0x2d0] sm:$0xff]
        %v362 = vld [vmem:[#allocation5 + $0x2d8] sm:$0xff]
        %v363 = vld [vmem:[#allocation5 + $0x2e0] sm:$0xff]
        %v364 = vld [vmem:[#allocation5 + $0x2e8] sm:$0xff]
        %v365 = vld [vmem:[#allocation5 + $0x2f0] sm:$0xff]
        %v366 = vld [vmem:[#allocation5 + $0x2f8] sm:$0xff]
        %v367 = vld [vmem:[#allocation5 + $0x300] sm:$0xff]
        %v368 = vld [vmem:[#allocation5 + $0x308] sm:$0xff]
        %v369 = vld [vmem:[#allocation5 + $0x310] sm:$0xff]
        %v370 = vld [vmem:[#allocation5 + $0x318] sm:$0xff]
        %v371 = vld [vmem:[#allocation5 + $0x320] sm:$0xff]
        %v372 = vld [vmem:[#allocation5 + $0x328] sm:$0xff]
        %v373 = vld [vmem:[#allocation5 + $0x330] sm:$0xff]
        %v374 = vld [vmem:[#allocation5 + $0x338] sm:$0xff]
        %v375 = vld [vmem:[#allocation5 + $0x340] sm:$0xff]
        %v376 = vld [vmem:[#allocation5 + $0x348] sm:$0xff]
        %v377 = vld [vmem:[#allocation5 + $0x350] sm:$0xff]
        %v378 = vld [vmem:[#allocation5 + $0x358] sm:$0xff]
        %v379 = vld [vmem:[#allocation5 + $0x360] sm:$0xff]
        %v380 = vld [vmem:[#allocation5 + $0x368] sm:$0xff]
        %v381 = vld [vmem:[#allocation5 + $0x370] sm:$0xff]
        %v382 = vld [vmem:[#allocation5 + $0x378] sm:$0xff]
        %v383 = vld [vmem:[#allocation5 + $0x380] sm:$0xff]
        %v384 = vld [vmem:[#allocation5 + $0x388] sm:$0xff]
        %v385 = vld [vmem:[#allocation5 + $0x390] sm:$0xff]
        %v386 = vld [vmem:[#allocation5 + $0x398] sm:$0xff]
        %v387 = vld [vmem:[#allocation5 + $0x3a0] sm:$0xff]
        %v388 = vld [vmem:[#allocation5 + $0x3a8] sm:$0xff]
        %v389 = vld [vmem:[#allocation5 + $0x3b0] sm:$0xff]
        %v390 = vld [vmem:[#allocation5 + $0x3b8] sm:$0xff]
        %v391 = vld [vmem:[#allocation5 + $0x3c0] sm:$0xff]
        %v392 = vld [vmem:[#allocation5 + $0x3c8] sm:$0xff]
        %v393 = vld [vmem:[#allocation5 + $0x3d0] sm:$0xff]
        %v394 = vld [vmem:[#allocation5 + $0x3d8] sm:$0xff]
        %v395 = vld [vmem:[#allocation5 + $0x3e0] sm:$0xff]
        %v396 = vld [vmem:[#allocation5 + $0x3e8] sm:$0xff]
        %v397 = vld [vmem:[#allocation5 + $0x3f0] sm:$0xff]
        %v398 = vld [vmem:[#allocation5 + $0x3f8] sm:$0xff]
        %v399 = vld [vmem:[#allocation5 + $0x400] sm:$0xff]
        %v400 = vld [vmem:[#allocation5 + $0x408] sm:$0xff]
        %v401 = vld [vmem:[#allocation5 + $0x410] sm:$0xff]
        %v402 = vld [vmem:[#allocation5 + $0x418] sm:$0xff]
        %v403 = vld [vmem:[#allocation5 + $0x420] sm:$0xff]
        %v404 = vld [vmem:[#allocation5 + $0x428] sm:$0xff]
        %v405 = vld [vmem:[#allocation5 + $0x430] sm:$0xff]
        %v406 = vld [vmem:[#allocation5 + $0x438] sm:$0xff]
        %v407 = vld [vmem:[#allocation5 + $0x440] sm:$0xff]
        %v408 = vld [vmem:[#allocation5 + $0x448] sm:$0xff]
        %v409 = vld [vmem:[#allocation5 + $0x450] sm:$0xff]
        %v410 = vld [vmem:[#allocation5 + $0x458] sm:$0xff]
        %v411 = vld [vmem:[#allocation5 + $0x460] sm:$0xff]
        %v412 = vld [vmem:[#allocation5 + $0x468] sm:$0xff]
        %v413 = vld [vmem:[#allocation5 + $0x470] sm:$0xff]
        %v414 = vld [vmem:[#allocation5 + $0x478] sm:$0xff]
        %v415 = vld [vmem:[#allocation5 + $0x480] sm:$0xff]
        %v416 = vld [vmem:[#allocation5 + $0x488] sm:$0xff]
        %v417 = vld [vmem:[#allocation5 + $0x490] sm:$0xff]
        %v418 = vld [vmem:[#allocation5 + $0x498] sm:$0xff]
        %v419 = vld [vmem:[#allocation5 + $0x4a0] sm:$0xff]
        %v420 = vld [vmem:[#allocation5 + $0x4a8] sm:$0xff]
        %v421 = vld [vmem:[#allocation5 + $0x4b0] sm:$0xff]
        %v422 = vld [vmem:[#allocation5 + $0x4b8] sm:$0xff]
        %v423 = vld [vmem:[#allocation5 + $0x4c0] sm:$0xff]
        %v424 = vld [vmem:[#allocation5 + $0x4c8] sm:$0xff]
        %v425 = vld [vmem:[#allocation5 + $0x4d0] sm:$0xff]
        %v426 = vld [vmem:[#allocation5 + $0x4d8] sm:$0xff]
        %v427 = vld [vmem:[#allocation5 + $0x4e0] sm:$0xff]
        %v428 = vld [vmem:[#allocation5 + $0x4e8] sm:$0xff]
        %v429 = vld [vmem:[#allocation5 + $0x4f0] sm:$0xff]
        %v430 = vld [vmem:[#allocation5 + $0x4f8] sm:$0xff]
        %v431 = vld [vmem:[#allocation5 + $0x500] sm:$0xff]
        %v432 = vld [vmem:[#allocation5 + $0x508] sm:$0xff]
        %v433 = vld [vmem:[#allocation5 + $0x510] sm:$0xff]
        %v434 = vld [vmem:[#allocation5 + $0x518] sm:$0xff]
        %v435 = vld [vmem:[#allocation5 + $0x520] sm:$0xff]
        %v436 = vld [vmem:[#allocation5 + $0x528] sm:$0xff]
        %v437 = vld [vmem:[#allocation5 + $0x530] sm:$0xff]
        %v438 = vld [vmem:[#allocation5 + $0x538] sm:$0xff]
        %v439 = vld [vmem:[#allocation5 + $0x540] sm:$0xff]
        %v440 = vld [vmem:[#allocation5 + $0x548] sm:$0xff]
        %v441 = vld [vmem:[#allocation5 + $0x550] sm:$0xff]
        %v442 = vld [vmem:[#allocation5 + $0x558] sm:$0xff]
        %v443 = vld [vmem:[#allocation5 + $0x560] sm:$0xff]
        %v444 = vld [vmem:[#allocation5 + $0x568] sm:$0xff]
        %v445 = vld [vmem:[#allocation5 + $0x570] sm:$0xff]
        %v446 = vld [vmem:[#allocation5 + $0x578] sm:$0xff]
        %v447 = vld [vmem:[#allocation5 + $0x580] sm:$0xff]
        %v448 = vld [vmem:[#allocation5 + $0x588] sm:$0xff]
        %v449 = vld [vmem:[#allocation5 + $0x590] sm:$0xff]
        %v450 = vld [vmem:[#allocation5 + $0x598] sm:$0xff]
        %v451 = vld [vmem:[#allocation5 + $0x5a0] sm:$0xff]
        %v452 = vld [vmem:[#allocation5 + $0x5a8] sm:$0xff]
        %v453 = vld [vmem:[#allocation5 + $0x5b0] sm:$0xff]
        %v454 = vld [vmem:[#allocation5 + $0x5b8] sm:$0xff]
        %v455 = vld [vmem:[#allocation5 + $0x5c0] sm:$0xff]
        %v456 = vld [vmem:[#allocation5 + $0x5c8] sm:$0xff]
        %v457 = vld [vmem:[#allocation5 + $0x5d0] sm:$0xff]
        %v458 = vld [vmem:[#allocation5 + $0x5d8] sm:$0xff]
        %v459 = vld [vmem:[#allocation5 + $0x5e0] sm:$0xff]
        %v460 = vld [vmem:[#allocation5 + $0x5e8] sm:$0xff]
        %v461 = vld [vmem:[#allocation5 + $0x5f0] sm:$0xff]
        %v462 = vld [vmem:[#allocation5 + $0x5f8] sm:$0xff]
        %v463 = vld [vmem:[#allocation5 + $0x600] sm:$0xff]
        %v464 = vld [vmem:[#allocation5 + $0x608] sm:$0xff]
        %v465 = vld [vmem:[#allocation5 + $0x610] sm:$0xff]
        %v466 = vld [vmem:[#allocation5 + $0x618] sm:$0xff]
        %v467 = vld [vmem:[#allocation5 + $0x620] sm:$0xff]
        %v468 = vld [vmem:[#allocation5 + $0x628] sm:$0xff]
        %v469 = vld [vmem:[#allocation5 + $0x630] sm:$0xff]
        %v470 = vld [vmem:[#allocation5 + $0x638] sm:$0xff]
        %v471 = vld [vmem:[#allocation5 + $0x640] sm:$0xff]
        %v472 = vld [vmem:[#allocation5 + $0x648] sm:$0xff]
        %v473 = vld [vmem:[#allocation5 + $0x650] sm:$0xff]
        %v474 = vld [vmem:[#allocation5 + $0x658] sm:$0xff]
        %v475 = vld [vmem:[#allocation5 + $0x660] sm:$0xff]
        %v476 = vld [vmem:[#allocation5 + $0x668] sm:$0xff]
        %v477 = vld [vmem:[#allocation5 + $0x670] sm:$0xff]
        %v478 = vld [vmem:[#allocation5 + $0x678] sm:$0xff]
        %v479 = vld [vmem:[#allocation5 + $0x680] sm:$0xff]
        %v480 = vld [vmem:[#allocation5 + $0x688] sm:$0xff]
        %v481 = vld [vmem:[#allocation5 + $0x690] sm:$0xff]
        %v482 = vld [vmem:[#allocation5 + $0x698] sm:$0xff]
        %v483 = vld [vmem:[#allocation5 + $0x6a0] sm:$0xff]
        %v484 = vld [vmem:[#allocation5 + $0x6a8] sm:$0xff]
        %v485 = vld [vmem:[#allocation5 + $0x6b0] sm:$0xff]
        %v486 = vld [vmem:[#allocation5 + $0x6b8] sm:$0xff]
        %v487 = vld [vmem:[#allocation5 + $0x6c0] sm:$0xff]
        %v488 = vld [vmem:[#allocation5 + $0x6c8] sm:$0xff]
        %v489 = vld [vmem:[#allocation5 + $0x6d0] sm:$0xff]
        %v490 = vld [vmem:[#allocation5 + $0x6d8] sm:$0xff]
        %v491 = vld [vmem:[#allocation5 + $0x6e0] sm:$0xff]
        %v492 = vld [vmem:[#allocation5 + $0x6e8] sm:$0xff]
        %v493 = vld [vmem:[#allocation5 + $0x6f0] sm:$0xff]
        %v494 = vld [vmem:[#allocation5 + $0x6f8] sm:$0xff]
        %v495 = vld [vmem:[#allocation5 + $0x700] sm:$0xff]
        %v496 = vld [vmem:[#allocation5 + $0x708] sm:$0xff]
        %v497 = vld [vmem:[#allocation5 + $0x710] sm:$0xff]
        %v498 = vld [vmem:[#allocation5 + $0x718] sm:$0xff]
        %v499 = vld [vmem:[#allocation5 + $0x720] sm:$0xff]
        %v500 = vld [vmem:[#allocation5 + $0x728] sm:$0xff]
        %v501 = vld [vmem:[#allocation5 + $0x730] sm:$0xff]
        %v502 = vld [vmem:[#allocation5 + $0x738] sm:$0xff]
        %v503 = vld [vmem:[#allocation5 + $0x740] sm:$0xff]
        %v504 = vld [vmem:[#allocation5 + $0x748] sm:$0xff]
        %v505 = vld [vmem:[#allocation5 + $0x750] sm:$0xff]
        %v506 = vld [vmem:[#allocation5 + $0x758] sm:$0xff]
        %v507 = vld [vmem:[#allocation5 + $0x760] sm:$0xff]
        %v508 = vld [vmem:[#allocation5 + $0x768] sm:$0xff]
        %v509 = vld [vmem:[#allocation5 + $0x770] sm:$0xff]
        %v510 = vld [vmem:[#allocation5 + $0x778] sm:$0xff]
        %v511 = vld [vmem:[#allocation5 + $0x780] sm:$0xff]
        %v512 = vld [vmem:[#allocation5 + $0x788] sm:$0xff]
        %v513 = vld [vmem:[#allocation5 + $0x790] sm:$0xff]
        %v514 = vld [vmem:[#allocation5 + $0x798] sm:$0xff]
        %v515 = vld [vmem:[#allocation5 + $0x7a0] sm:$0xff]
        %v516 = vld [vmem:[#allocation5 + $0x7a8] sm:$0xff]
        %v517 = vld [vmem:[#allocation5 + $0x7b0] sm:$0xff]
        %v518 = vld [vmem:[#allocation5 + $0x7b8] sm:$0xff]
        %v519 = vld [vmem:[#allocation5 + $0x7c0] sm:$0xff]
        %v520 = vld [vmem:[#allocation5 + $0x7c8] sm:$0xff]
        %v521 = vld [vmem:[#allocation5 + $0x7d0] sm:$0xff]
        %v522 = vld [vmem:[#allocation5 + $0x7d8] sm:$0xff]
        %v523 = vld [vmem:[#allocation5 + $0x7e0] sm:$0xff]
        %v524 = vld [vmem:[#allocation5 + $0x7e8] sm:$0xff]
        %v525 = vld [vmem:[#allocation5 + $0x7f0] sm:$0xff]
        %v526 = vld [vmem:[#allocation5 + $0x7f8] sm:$0xff]
        %v527 = vld [vmem:[#allocation5 + $0x800] sm:$0xff]
        %v528 = vld [vmem:[#allocation5 + $0x808] sm:$0xff]
        %v529 = vld [vmem:[#allocation5 + $0x810] sm:$0xff]
        %v530 = vld [vmem:[#allocation5 + $0x818] sm:$0xff]
        %v531 = vld [vmem:[#allocation5 + $0x820] sm:$0xff]
        %v532 = vld [vmem:[#allocation5 + $0x828] sm:$0xff]
        %v533 = vld [vmem:[#allocation5 + $0x830] sm:$0xff]
        %v534 = vld [vmem:[#allocation5 + $0x838] sm:$0xff]
        %v535 = vld [vmem:[#allocation5 + $0x840] sm:$0xff]
        %v536 = vld [vmem:[#allocation5 + $0x848] sm:$0xff]
        %v537 = vld [vmem:[#allocation5 + $0x850] sm:$0xff]
        %v538 = vld [vmem:[#allocation5 + $0x858] sm:$0xff]
        %v539 = vld [vmem:[#allocation5 + $0x860] sm:$0xff]
        %v540 = vld [vmem:[#allocation5 + $0x868] sm:$0xff]
        %v541 = vld [vmem:[#allocation5 + $0x870] sm:$0xff]
        %v542 = vld [vmem:[#allocation5 + $0x878] sm:$0xff]
        %v543 = vld [vmem:[#allocation5 + $0x880] sm:$0xff]
        %v544 = vld [vmem:[#allocation5 + $0x888] sm:$0xff]
        %v545 = vld [vmem:[#allocation5 + $0x890] sm:$0xff]
        %v546 = vld [vmem:[#allocation5 + $0x898] sm:$0xff]
        %v547 = vld [vmem:[#allocation5 + $0x8a0] sm:$0xff]
        %v548 = vld [vmem:[#allocation5 + $0x8a8] sm:$0xff]
        %v549 = vld [vmem:[#allocation5 + $0x8b0] sm:$0xff]
        %v550 = vld [vmem:[#allocation5 + $0x8b8] sm:$0xff]
        %v551 = vld [vmem:[#allocation5 + $0x8c0] sm:$0xff]
        %v552 = vld [vmem:[#allocation5 + $0x8c8] sm:$0xff]
        %v553 = vld [vmem:[#allocation5 + $0x8d0] sm:$0xff]
        %v554 = vld [vmem:[#allocation5 + $0x8d8] sm:$0xff]
        %v555 = vld [vmem:[#allocation5 + $0x8e0] sm:$0xff]
        %v556 = vld [vmem:[#allocation5 + $0x8e8] sm:$0xff]
        %v557 = vld [vmem:[#allocation5 + $0x8f0] sm:$0xff]
        %v558 = vld [vmem:[#allocation5 + $0x8f8] sm:$0xff]
        %v847 = vunpack.c.l.b16 %v271
        %v848 = vunpack.c.h.b16 %v271
        %v849 = vunpack.c.l.b16 %v272
        %v850 = vunpack.c.h.b16 %v272
        %v851 = vunpack.c.l.b16 %v273
        %v852 = vunpack.c.h.b16 %v273
        %v853 = vunpack.c.l.b16 %v274
        %v854 = vunpack.c.h.b16 %v274
        %v855 = vunpack.c.l.b16 %v275
        %v856 = vunpack.c.h.b16 %v275
        %v857 = vunpack.c.l.b16 %v276
        %v858 = vunpack.c.h.b16 %v276
        %v859 = vunpack.c.l.b16 %v277
        %v860 = vunpack.c.h.b16 %v277
        %v861 = vunpack.c.l.b16 %v278
        %v862 = vunpack.c.h.b16 %v278
        %v863 = vunpack.c.l.b16 %v279
        %v864 = vunpack.c.h.b16 %v279
        %v865 = vunpack.c.l.b16 %v280
        %v866 = vunpack.c.h.b16 %v280
        %v867 = vunpack.c.l.b16 %v281
        %v868 = vunpack.c.h.b16 %v281
        %v869 = vunpack.c.l.b16 %v282
        %v870 = vunpack.c.h.b16 %v282
        %v871 = vunpack.c.l.b16 %v283
        %v872 = vunpack.c.h.b16 %v283
        %v873 = vunpack.c.l.b16 %v284
        %v874 = vunpack.c.h.b16 %v284
        %v875 = vunpack.c.l.b16 %v285
        %v876 = vunpack.c.h.b16 %v285
        %v877 = vunpack.c.l.b16 %v286
        %v878 = vunpack.c.h.b16 %v286
        %v879 = vunpack.c.l.b16 %v287
        %v880 = vunpack.c.h.b16 %v287
        %v881 = vunpack.c.l.b16 %v288
        %v882 = vunpack.c.h.b16 %v288
        %v883 = vunpack.c.l.b16 %v289
        %v884 = vunpack.c.h.b16 %v289
        %v885 = vunpack.c.l.b16 %v290
        %v886 = vunpack.c.h.b16 %v290
        %v887 = vunpack.c.l.b16 %v291
        %v888 = vunpack.c.h.b16 %v291
        %v889 = vunpack.c.l.b16 %v292
        %v890 = vunpack.c.h.b16 %v292
        %v891 = vunpack.c.l.b16 %v293
        %v892 = vunpack.c.h.b16 %v293
        %v893 = vunpack.c.l.b16 %v294
        %v894 = vunpack.c.h.b16 %v294
        %v895 = vunpack.c.l.b16 %v295
        %v896 = vunpack.c.h.b16 %v295
        %v897 = vunpack.c.l.b16 %v296
        %v898 = vunpack.c.h.b16 %v296
        %v899 = vunpack.c.l.b16 %v297
        %v900 = vunpack.c.h.b16 %v297
        %v901 = vunpack.c.l.b16 %v298
        %v902 = vunpack.c.h.b16 %v298
        %v903 = vunpack.c.l.b16 %v299
        %v904 = vunpack.c.h.b16 %v299
        %v905 = vunpack.c.l.b16 %v300
        %v906 = vunpack.c.h.b16 %v300
        %v907 = vunpack.c.l.b16 %v301
        %v908 = vunpack.c.h.b16 %v301
        %v909 = vunpack.c.l.b16 %v302
        %v910 = vunpack.c.h.b16 %v302
        %v911 = vunpack.c.l.b16 %v303
        %v912 = vunpack.c.h.b16 %v303
        %v913 = vunpack.c.l.b16 %v304
        %v914 = vunpack.c.h.b16 %v304
        %v915 = vunpack.c.l.b16 %v305
        %v916 = vunpack.c.h.b16 %v305
        %v917 = vunpack.c.l.b16 %v306
        %v918 = vunpack.c.h.b16 %v306
        %v919 = vunpack.c.l.b16 %v307
        %v920 = vunpack.c.h.b16 %v307
        %v921 = vunpack.c.l.b16 %v308
        %v922 = vunpack.c.h.b16 %v308
        %v923 = vunpack.c.l.b16 %v309
        %v924 = vunpack.c.h.b16 %v309
        %v925 = vunpack.c.l.b16 %v310
        %v926 = vunpack.c.h.b16 %v310
        %v927 = vunpack.c.l.b16 %v311
        %v928 = vunpack.c.h.b16 %v311
        %v929 = vunpack.c.l.b16 %v312
        %v930 = vunpack.c.h.b16 %v312
        %v931 = vunpack.c.l.b16 %v313
        %v932 = vunpack.c.h.b16 %v313
        %v933 = vunpack.c.l.b16 %v314
        %v934 = vunpack.c.h.b16 %v314
        %v935 = vunpack.c.l.b16 %v315
        %v936 = vunpack.c.h.b16 %v315
        %v937 = vunpack.c.l.b16 %v316
        %v938 = vunpack.c.h.b16 %v316
        %v939 = vunpack.c.l.b16 %v317
        %v940 = vunpack.c.h.b16 %v317
        %v941 = vunpack.c.l.b16 %v318
        %v942 = vunpack.c.h.b16 %v318
        %v943 = vunpack.c.l.b16 %v319
        %v944 = vunpack.c.h.b16 %v319
        %v945 = vunpack.c.l.b16 %v320
        %v946 = vunpack.c.h.b16 %v320
        %v947 = vunpack.c.l.b16 %v321
        %v948 = vunpack.c.h.b16 %v321
        %v949 = vunpack.c.l.b16 %v322
        %v950 = vunpack.c.h.b16 %v322
        %v951 = vunpack.c.l.b16 %v323
        %v952 = vunpack.c.h.b16 %v323
        %v953 = vunpack.c.l.b16 %v324
        %v954 = vunpack.c.h.b16 %v324
        %v955 = vunpack.c.l.b16 %v325
        %v956 = vunpack.c.h.b16 %v325
        %v957 = vunpack.c.l.b16 %v326
        %v958 = vunpack.c.h.b16 %v326
        %v959 = vunpack.c.l.b16 %v327
        %v960 = vunpack.c.h.b16 %v327
        %v961 = vunpack.c.l.b16 %v328
        %v962 = vunpack.c.h.b16 %v328
        %v963 = vunpack.c.l.b16 %v329
        %v964 = vunpack.c.h.b16 %v329
        %v965 = vunpack.c.l.b16 %v330
        %v966 = vunpack.c.h.b16 %v330
        %v967 = vunpack.c.l.b16 %v331
        %v968 = vunpack.c.h.b16 %v331
        %v969 = vunpack.c.l.b16 %v332
        %v970 = vunpack.c.h.b16 %v332
        %v971 = vunpack.c.l.b16 %v333
        %v972 = vunpack.c.h.b16 %v333
        %v973 = vunpack.c.l.b16 %v334
        %v974 = vunpack.c.h.b16 %v334
        %v975 = vunpack.c.l.b16 %v335
        %v976 = vunpack.c.h.b16 %v335
        %v977 = vunpack.c.l.b16 %v336
        %v978 = vunpack.c.h.b16 %v336
        %v979 = vunpack.c.l.b16 %v337
        %v980 = vunpack.c.h.b16 %v337
        %v981 = vunpack.c.l.b16 %v338
        %v982 = vunpack.c.h.b16 %v338
        %v983 = vunpack.c.l.b16 %v339
        %v984 = vunpack.c.h.b16 %v339
        %v985 = vunpack.c.l.b16 %v340
        %v986 = vunpack.c.h.b16 %v340
        %v987 = vunpack.c.l.b16 %v341
        %v988 = vunpack.c.h.b16 %v341
        %v989 = vunpack.c.l.b16 %v342
        %v990 = vunpack.c.h.b16 %v342
        %v991 = vunpack.c.l.b16 %v343
        %v992 = vunpack.c.h.b16 %v343
        %v993 = vunpack.c.l.b16 %v344
        %v994 = vunpack.c.h.b16 %v344
        %v995 = vunpack.c.l.b16 %v345
        %v996 = vunpack.c.h.b16 %v345
        %v997 = vunpack.c.l.b16 %v346
        %v998 = vunpack.c.h.b16 %v346
        %v999 = vunpack.c.l.b16 %v347
        %v1000 = vunpack.c.h.b16 %v347
        %v1001 = vunpack.c.l.b16 %v348
        %v1002 = vunpack.c.h.b16 %v348
        %v1003 = vunpack.c.l.b16 %v349
        %v1004 = vunpack.c.h.b16 %v349
        %v1005 = vunpack.c.l.b16 %v350
        %v1006 = vunpack.c.h.b16 %v350
        %v1007 = vunpack.c.l.b16 %v351
        %v1008 = vunpack.c.h.b16 %v351
        %v1009 = vunpack.c.l.b16 %v352
        %v1010 = vunpack.c.h.b16 %v352
        %v1011 = vunpack.c.l.b16 %v353
        %v1012 = vunpack.c.h.b16 %v353
        %v1013 = vunpack.c.l.b16 %v354
        %v1014 = vunpack.c.h.b16 %v354
        %v1015 = vunpack.c.l.b16 %v355
        %v1016 = vunpack.c.h.b16 %v355
        %v1017 = vunpack.c.l.b16 %v356
        %v1018 = vunpack.c.h.b16 %v356
        %v1019 = vunpack.c.l.b16 %v357
        %v1020 = vunpack.c.h.b16 %v357
        %v1021 = vunpack.c.l.b16 %v358
        %v1022 = vunpack.c.h.b16 %v358
        %v1023 = vunpack.c.l.b16 %v359
        %v1024 = vunpack.c.h.b16 %v359
        %v1025 = vunpack.c.l.b16 %v360
        %v1026 = vunpack.c.h.b16 %v360
        %v1027 = vunpack.c.l.b16 %v361
        %v1028 = vunpack.c.h.b16 %v361
        %v1029 = vunpack.c.l.b16 %v362
        %v1030 = vunpack.c.h.b16 %v362
        %v1031 = vunpack.c.l.b16 %v363
        %v1032 = vunpack.c.h.b16 %v363
        %v1033 = vunpack.c.l.b16 %v364
        %v1034 = vunpack.c.h.b16 %v364
        %v1035 = vunpack.c.l.b16 %v365
        %v1036 = vunpack.c.h.b16 %v365
        %v1037 = vunpack.c.l.b16 %v366
        %v1038 = vunpack.c.h.b16 %v366
        %v1039 = vunpack.c.l.b16 %v367
        %v1040 = vunpack.c.h.b16 %v367
        %v1041 = vunpack.c.l.b16 %v368
        %v1042 = vunpack.c.h.b16 %v368
        %v1043 = vunpack.c.l.b16 %v369
        %v1044 = vunpack.c.h.b16 %v369
        %v1045 = vunpack.c.l.b16 %v370
        %v1046 = vunpack.c.h.b16 %v370
        %v1047 = vunpack.c.l.b16 %v371
        %v1048 = vunpack.c.h.b16 %v371
        %v1049 = vunpack.c.l.b16 %v372
        %v1050 = vunpack.c.h.b16 %v372
        %v1051 = vunpack.c.l.b16 %v373
        %v1052 = vunpack.c.h.b16 %v373
        %v1053 = vunpack.c.l.b16 %v374
        %v1054 = vunpack.c.h.b16 %v374
        %v1055 = vunpack.c.l.b16 %v375
        %v1056 = vunpack.c.h.b16 %v375
        %v1057 = vunpack.c.l.b16 %v376
        %v1058 = vunpack.c.h.b16 %v376
        %v1059 = vunpack.c.l.b16 %v377
        %v1060 = vunpack.c.h.b16 %v377
        %v1061 = vunpack.c.l.b16 %v378
        %v1062 = vunpack.c.h.b16 %v378
        %v1063 = vunpack.c.l.b16 %v379
        %v1064 = vunpack.c.h.b16 %v379
        %v1065 = vunpack.c.l.b16 %v380
        %v1066 = vunpack.c.h.b16 %v380
        %v1067 = vunpack.c.l.b16 %v381
        %v1068 = vunpack.c.h.b16 %v381
        %v1069 = vunpack.c.l.b16 %v382
        %v1070 = vunpack.c.h.b16 %v382
        %v1071 = vunpack.c.l.b16 %v383
        %v1072 = vunpack.c.h.b16 %v383
        %v1073 = vunpack.c.l.b16 %v384
        %v1074 = vunpack.c.h.b16 %v384
        %v1075 = vunpack.c.l.b16 %v385
        %v1076 = vunpack.c.h.b16 %v385
        %v1077 = vunpack.c.l.b16 %v386
        %v1078 = vunpack.c.h.b16 %v386
        %v1079 = vunpack.c.l.b16 %v387
        %v1080 = vunpack.c.h.b16 %v387
        %v1081 = vunpack.c.l.b16 %v388
        %v1082 = vunpack.c.h.b16 %v388
        %v1083 = vunpack.c.l.b16 %v389
        %v1084 = vunpack.c.h.b16 %v389
        %v1085 = vunpack.c.l.b16 %v390
        %v1086 = vunpack.c.h.b16 %v390
        %v1087 = vunpack.c.l.b16 %v391
        %v1088 = vunpack.c.h.b16 %v391
        %v1089 = vunpack.c.l.b16 %v392
        %v1090 = vunpack.c.h.b16 %v392
        %v1091 = vunpack.c.l.b16 %v393
        %v1092 = vunpack.c.h.b16 %v393
        %v1093 = vunpack.c.l.b16 %v394
        %v1094 = vunpack.c.h.b16 %v394
        %v1095 = vunpack.c.l.b16 %v395
        %v1096 = vunpack.c.h.b16 %v395
        %v1097 = vunpack.c.l.b16 %v396
        %v1098 = vunpack.c.h.b16 %v396
        %v1099 = vunpack.c.l.b16 %v397
        %v1100 = vunpack.c.h.b16 %v397
        %v1101 = vunpack.c.l.b16 %v398
        %v1102 = vunpack.c.h.b16 %v398
        %v1103 = vunpack.c.l.b16 %v399
        %v1104 = vunpack.c.h.b16 %v399
        %v1105 = vunpack.c.l.b16 %v400
        %v1106 = vunpack.c.h.b16 %v400
        %v1107 = vunpack.c.l.b16 %v401
        %v1108 = vunpack.c.h.b16 %v401
        %v1109 = vunpack.c.l.b16 %v402
        %v1110 = vunpack.c.h.b16 %v402
        %v1111 = vunpack.c.l.b16 %v403
        %v1112 = vunpack.c.h.b16 %v403
        %v1113 = vunpack.c.l.b16 %v404
        %v1114 = vunpack.c.h.b16 %v404
        %v1115 = vunpack.c.l.b16 %v405
        %v1116 = vunpack.c.h.b16 %v405
        %v1117 = vunpack.c.l.b16 %v406
        %v1118 = vunpack.c.h.b16 %v406
        %v1119 = vunpack.c.l.b16 %v407
        %v1120 = vunpack.c.h.b16 %v407
        %v1121 = vunpack.c.l.b16 %v408
        %v1122 = vunpack.c.h.b16 %v408
        %v1123 = vunpack.c.l.b16 %v409
        %v1124 = vunpack.c.h.b16 %v409
        %v1125 = vunpack.c.l.b16 %v410
        %v1126 = vunpack.c.h.b16 %v410
        %v1127 = vunpack.c.l.b16 %v411
        %v1128 = vunpack.c.h.b16 %v411
        %v1129 = vunpack.c.l.b16 %v412
        %v1130 = vunpack.c.h.b16 %v412
        %v1131 = vunpack.c.l.b16 %v413
        %v1132 = vunpack.c.h.b16 %v413
        %v1133 = vunpack.c.l.b16 %v414
        %v1134 = vunpack.c.h.b16 %v414
        %v1135 = vunpack.c.l.b16 %v415
        %v1136 = vunpack.c.h.b16 %v415
        %v1137 = vunpack.c.l.b16 %v416
        %v1138 = vunpack.c.h.b16 %v416
        %v1139 = vunpack.c.l.b16 %v417
        %v1140 = vunpack.c.h.b16 %v417
        %v1141 = vunpack.c.l.b16 %v418
        %v1142 = vunpack.c.h.b16 %v418
        %v1143 = vunpack.c.l.b16 %v419
        %v1144 = vunpack.c.h.b16 %v419
        %v1145 = vunpack.c.l.b16 %v420
        %v1146 = vunpack.c.h.b16 %v420
        %v1147 = vunpack.c.l.b16 %v421
        %v1148 = vunpack.c.h.b16 %v421
        %v1149 = vunpack.c.l.b16 %v422
        %v1150 = vunpack.c.h.b16 %v422
        %v1151 = vunpack.c.l.b16 %v423
        %v1152 = vunpack.c.h.b16 %v423
        %v1153 = vunpack.c.l.b16 %v424
        %v1154 = vunpack.c.h.b16 %v424
        %v1155 = vunpack.c.l.b16 %v425
        %v1156 = vunpack.c.h.b16 %v425
        %v1157 = vunpack.c.l.b16 %v426
        %v1158 = vunpack.c.h.b16 %v426
        %v1159 = vunpack.c.l.b16 %v427
        %v1160 = vunpack.c.h.b16 %v427
        %v1161 = vunpack.c.l.b16 %v428
        %v1162 = vunpack.c.h.b16 %v428
        %v1163 = vunpack.c.l.b16 %v429
        %v1164 = vunpack.c.h.b16 %v429
        %v1165 = vunpack.c.l.b16 %v430
        %v1166 = vunpack.c.h.b16 %v430
        %v1167 = vunpack.c.l.b16 %v431
        %v1168 = vunpack.c.h.b16 %v431
        %v1169 = vunpack.c.l.b16 %v432
        %v1170 = vunpack.c.h.b16 %v432
        %v1171 = vunpack.c.l.b16 %v433
        %v1172 = vunpack.c.h.b16 %v433
        %v1173 = vunpack.c.l.b16 %v434
        %v1174 = vunpack.c.h.b16 %v434
        %v1175 = vunpack.c.l.b16 %v435
        %v1176 = vunpack.c.h.b16 %v435
        %v1177 = vunpack.c.l.b16 %v436
        %v1178 = vunpack.c.h.b16 %v436
        %v1179 = vunpack.c.l.b16 %v437
        %v1180 = vunpack.c.h.b16 %v437
        %v1181 = vunpack.c.l.b16 %v438
        %v1182 = vunpack.c.h.b16 %v438
        %v1183 = vunpack.c.l.b16 %v439
        %v1184 = vunpack.c.h.b16 %v439
        %v1185 = vunpack.c.l.b16 %v440
        %v1186 = vunpack.c.h.b16 %v440
        %v1187 = vunpack.c.l.b16 %v441
        %v1188 = vunpack.c.h.b16 %v441
        %v1189 = vunpack.c.l.b16 %v442
        %v1190 = vunpack.c.h.b16 %v442
        %v1191 = vunpack.c.l.b16 %v443
        %v1192 = vunpack.c.h.b16 %v443
        %v1193 = vunpack.c.l.b16 %v444
        %v1194 = vunpack.c.h.b16 %v444
        %v1195 = vunpack.c.l.b16 %v445
        %v1196 = vunpack.c.h.b16 %v445
        %v1197 = vunpack.c.l.b16 %v446
        %v1198 = vunpack.c.h.b16 %v446
        %v1199 = vunpack.c.l.b16 %v447
        %v1200 = vunpack.c.h.b16 %v447
        %v1201 = vunpack.c.l.b16 %v448
        %v1202 = vunpack.c.h.b16 %v448
        %v1203 = vunpack.c.l.b16 %v449
        %v1204 = vunpack.c.h.b16 %v449
        %v1205 = vunpack.c.l.b16 %v450
        %v1206 = vunpack.c.h.b16 %v450
        %v1207 = vunpack.c.l.b16 %v451
        %v1208 = vunpack.c.h.b16 %v451
        %v1209 = vunpack.c.l.b16 %v452
        %v1210 = vunpack.c.h.b16 %v452
        %v1211 = vunpack.c.l.b16 %v453
        %v1212 = vunpack.c.h.b16 %v453
        %v1213 = vunpack.c.l.b16 %v454
        %v1214 = vunpack.c.h.b16 %v454
        %v1215 = vunpack.c.l.b16 %v455
        %v1216 = vunpack.c.h.b16 %v455
        %v1217 = vunpack.c.l.b16 %v456
        %v1218 = vunpack.c.h.b16 %v456
        %v1219 = vunpack.c.l.b16 %v457
        %v1220 = vunpack.c.h.b16 %v457
        %v1221 = vunpack.c.l.b16 %v458
        %v1222 = vunpack.c.h.b16 %v458
        %v1223 = vunpack.c.l.b16 %v459
        %v1224 = vunpack.c.h.b16 %v459
        %v1225 = vunpack.c.l.b16 %v460
        %v1226 = vunpack.c.h.b16 %v460
        %v1227 = vunpack.c.l.b16 %v461
        %v1228 = vunpack.c.h.b16 %v461
        %v1229 = vunpack.c.l.b16 %v462
        %v1230 = vunpack.c.h.b16 %v462
        %v1231 = vunpack.c.l.b16 %v463
        %v1232 = vunpack.c.h.b16 %v463
        %v1233 = vunpack.c.l.b16 %v464
        %v1234 = vunpack.c.h.b16 %v464
        %v1235 = vunpack.c.l.b16 %v465
        %v1236 = vunpack.c.h.b16 %v465
        %v1237 = vunpack.c.l.b16 %v466
        %v1238 = vunpack.c.h.b16 %v466
        %v1239 = vunpack.c.l.b16 %v467
        %v1240 = vunpack.c.h.b16 %v467
        %v1241 = vunpack.c.l.b16 %v468
        %v1242 = vunpack.c.h.b16 %v468
        %v1243 = vunpack.c.l.b16 %v469
        %v1244 = vunpack.c.h.b16 %v469
        %v1245 = vunpack.c.l.b16 %v470
        %v1246 = vunpack.c.h.b16 %v470
        %v1247 = vunpack.c.l.b16 %v471
        %v1248 = vunpack.c.h.b16 %v471
        %v1249 = vunpack.c.l.b16 %v472
        %v1250 = vunpack.c.h.b16 %v472
        %v1251 = vunpack.c.l.b16 %v473
        %v1252 = vunpack.c.h.b16 %v473
        %v1253 = vunpack.c.l.b16 %v474
        %v1254 = vunpack.c.h.b16 %v474
        %v1255 = vunpack.c.l.b16 %v475
        %v1256 = vunpack.c.h.b16 %v475
        %v1257 = vunpack.c.l.b16 %v476
        %v1258 = vunpack.c.h.b16 %v476
        %v1259 = vunpack.c.l.b16 %v477
        %v1260 = vunpack.c.h.b16 %v477
        %v1261 = vunpack.c.l.b16 %v478
        %v1262 = vunpack.c.h.b16 %v478
        %v1263 = vunpack.c.l.b16 %v479
        %v1264 = vunpack.c.h.b16 %v479
        %v1265 = vunpack.c.l.b16 %v480
        %v1266 = vunpack.c.h.b16 %v480
        %v1267 = vunpack.c.l.b16 %v481
        %v1268 = vunpack.c.h.b16 %v481
        %v1269 = vunpack.c.l.b16 %v482
        %v1270 = vunpack.c.h.b16 %v482
        %v1271 = vunpack.c.l.b16 %v483
        %v1272 = vunpack.c.h.b16 %v483
        %v1273 = vunpack.c.l.b16 %v484
        %v1274 = vunpack.c.h.b16 %v484
        %v1275 = vunpack.c.l.b16 %v485
        %v1276 = vunpack.c.h.b16 %v485
        %v1277 = vunpack.c.l.b16 %v486
        %v1278 = vunpack.c.h.b16 %v486
        %v1279 = vunpack.c.l.b16 %v487
        %v1280 = vunpack.c.h.b16 %v487
        %v1281 = vunpack.c.l.b16 %v488
        %v1282 = vunpack.c.h.b16 %v488
        %v1283 = vunpack.c.l.b16 %v489
        %v1284 = vunpack.c.h.b16 %v489
        %v1285 = vunpack.c.l.b16 %v490
        %v1286 = vunpack.c.h.b16 %v490
        %v1287 = vunpack.c.l.b16 %v491
        %v1288 = vunpack.c.h.b16 %v491
        %v1289 = vunpack.c.l.b16 %v492
        %v1290 = vunpack.c.h.b16 %v492
        %v1291 = vunpack.c.l.b16 %v493
        %v1292 = vunpack.c.h.b16 %v493
        %v1293 = vunpack.c.l.b16 %v494
        %v1294 = vunpack.c.h.b16 %v494
        %v1295 = vunpack.c.l.b16 %v495
        %v1296 = vunpack.c.h.b16 %v495
        %v1297 = vunpack.c.l.b16 %v496
        %v1298 = vunpack.c.h.b16 %v496
        %v1299 = vunpack.c.l.b16 %v497
        %v1300 = vunpack.c.h.b16 %v497
        %v1301 = vunpack.c.l.b16 %v498
        %v1302 = vunpack.c.h.b16 %v498
        %v1303 = vunpack.c.l.b16 %v499
        %v1304 = vunpack.c.h.b16 %v499
        %v1305 = vunpack.c.l.b16 %v500
        %v1306 = vunpack.c.h.b16 %v500
        %v1307 = vunpack.c.l.b16 %v501
        %v1308 = vunpack.c.h.b16 %v501
        %v1309 = vunpack.c.l.b16 %v502
        %v1310 = vunpack.c.h.b16 %v502
        %v1311 = vunpack.c.l.b16 %v503
        %v1312 = vunpack.c.h.b16 %v503
        %v1313 = vunpack.c.l.b16 %v504
        %v1314 = vunpack.c.h.b16 %v504
        %v1315 = vunpack.c.l.b16 %v505
        %v1316 = vunpack.c.h.b16 %v505
        %v1317 = vunpack.c.l.b16 %v506
        %v1318 = vunpack.c.h.b16 %v506
        %v1319 = vunpack.c.l.b16 %v507
        %v1320 = vunpack.c.h.b16 %v507
        %v1321 = vunpack.c.l.b16 %v508
        %v1322 = vunpack.c.h.b16 %v508
        %v1323 = vunpack.c.l.b16 %v509
        %v1324 = vunpack.c.h.b16 %v509
        %v1325 = vunpack.c.l.b16 %v510
        %v1326 = vunpack.c.h.b16 %v510
        %v1327 = vunpack.c.l.b16 %v511
        %v1328 = vunpack.c.h.b16 %v511
        %v1329 = vunpack.c.l.b16 %v512
        %v1330 = vunpack.c.h.b16 %v512
        %v1331 = vunpack.c.l.b16 %v513
        %v1332 = vunpack.c.h.b16 %v513
        %v1333 = vunpack.c.l.b16 %v514
        %v1334 = vunpack.c.h.b16 %v514
        %v1335 = vunpack.c.l.b16 %v515
        %v1336 = vunpack.c.h.b16 %v515
        %v1337 = vunpack.c.l.b16 %v516
        %v1338 = vunpack.c.h.b16 %v516
        %v1339 = vunpack.c.l.b16 %v517
        %v1340 = vunpack.c.h.b16 %v517
        %v1341 = vunpack.c.l.b16 %v518
        %v1342 = vunpack.c.h.b16 %v518
        %v1343 = vunpack.c.l.b16 %v519
        %v1344 = vunpack.c.h.b16 %v519
        %v1345 = vunpack.c.l.b16 %v520
        %v1346 = vunpack.c.h.b16 %v520
        %v1347 = vunpack.c.l.b16 %v521
        %v1348 = vunpack.c.h.b16 %v521
        %v1349 = vunpack.c.l.b16 %v522
        %v1350 = vunpack.c.h.b16 %v522
        %v1351 = vunpack.c.l.b16 %v523
        %v1352 = vunpack.c.h.b16 %v523
        %v1353 = vunpack.c.l.b16 %v524
        %v1354 = vunpack.c.h.b16 %v524
        %v1355 = vunpack.c.l.b16 %v525
        %v1356 = vunpack.c.h.b16 %v525
        %v1357 = vunpack.c.l.b16 %v526
        %v1358 = vunpack.c.h.b16 %v526
        %v1359 = vunpack.c.l.b16 %v527
        %v1360 = vunpack.c.h.b16 %v527
        %v1361 = vunpack.c.l.b16 %v528
        %v1362 = vunpack.c.h.b16 %v528
        %v1363 = vunpack.c.l.b16 %v529
        %v1364 = vunpack.c.h.b16 %v529
        %v1365 = vunpack.c.l.b16 %v530
        %v1366 = vunpack.c.h.b16 %v530
        %v1367 = vunpack.c.l.b16 %v531
        %v1368 = vunpack.c.h.b16 %v531
        %v1369 = vunpack.c.l.b16 %v532
        %v1370 = vunpack.c.h.b16 %v532
        %v1371 = vunpack.c.l.b16 %v533
        %v1372 = vunpack.c.h.b16 %v533
        %v1373 = vunpack.c.l.b16 %v534
        %v1374 = vunpack.c.h.b16 %v534
        %v1375 = vunpack.c.l.b16 %v535
        %v1376 = vunpack.c.h.b16 %v535
        %v1377 = vunpack.c.l.b16 %v536
        %v1378 = vunpack.c.h.b16 %v536
        %v1379 = vunpack.c.l.b16 %v537
        %v1380 = vunpack.c.h.b16 %v537
        %v1381 = vunpack.c.l.b16 %v538
        %v1382 = vunpack.c.h.b16 %v538
        %v1383 = vunpack.c.l.b16 %v539
        %v1384 = vunpack.c.h.b16 %v539
        %v1385 = vunpack.c.l.b16 %v540
        %v1386 = vunpack.c.h.b16 %v540
        %v1387 = vunpack.c.l.b16 %v541
        %v1388 = vunpack.c.h.b16 %v541
        %v1389 = vunpack.c.l.b16 %v542
        %v1390 = vunpack.c.h.b16 %v542
        %v1391 = vunpack.c.l.b16 %v543
        %v1392 = vunpack.c.h.b16 %v543
        %v1393 = vunpack.c.l.b16 %v544
        %v1394 = vunpack.c.h.b16 %v544
        %v1395 = vunpack.c.l.b16 %v545
        %v1396 = vunpack.c.h.b16 %v545
        %v1397 = vunpack.c.l.b16 %v546
        %v1398 = vunpack.c.h.b16 %v546
        %v1399 = vunpack.c.l.b16 %v547
        %v1400 = vunpack.c.h.b16 %v547
        %v1401 = vunpack.c.l.b16 %v548
        %v1402 = vunpack.c.h.b16 %v548
        %v1403 = vunpack.c.l.b16 %v549
        %v1404 = vunpack.c.h.b16 %v549
        %v1405 = vunpack.c.l.b16 %v550
        %v1406 = vunpack.c.h.b16 %v550
        %v1407 = vunpack.c.l.b16 %v551
        %v1408 = vunpack.c.h.b16 %v551
        %v1409 = vunpack.c.l.b16 %v552
        %v1410 = vunpack.c.h.b16 %v552
        %v1411 = vunpack.c.l.b16 %v553
        %v1412 = vunpack.c.h.b16 %v553
        %v1413 = vunpack.c.l.b16 %v554
        %v1414 = vunpack.c.h.b16 %v554
        %v1415 = vunpack.c.l.b16 %v555
        %v1416 = vunpack.c.h.b16 %v555
        %v1417 = vunpack.c.l.b16 %v556
        %v1418 = vunpack.c.h.b16 %v556
        %v1419 = vunpack.c.l.b16 %v557
        %v1420 = vunpack.c.h.b16 %v557
        %v1421 = vunpack.c.l.b16 %v558
        %v1422 = vunpack.c.h.b16 %v558
        %v1423 = vpack.c.b16 %v859, %v847
        %v1424 = vpack.c.b16 %v860, %v848
        %v1425 = vpack.c.b16 %v861, %v849
        %v1426 = vpack.c.b16 %v862, %v850
        %v1427 = vpack.c.b16 %v863, %v851
        %v1428 = vpack.c.b16 %v864, %v852
        %v1429 = vpack.c.b16 %v865, %v853
        %v1430 = vpack.c.b16 %v866, %v854
        %v1431 = vpack.c.b16 %v867, %v855
        %v1432 = vpack.c.b16 %v868, %v856
        %v1433 = vpack.c.b16 %v869, %v857
        %v1434 = vpack.c.b16 %v870, %v858
        %v1435 = vpack.c.b16 %v883, %v871
        %v1436 = vpack.c.b16 %v884, %v872
        %v1437 = vpack.c.b16 %v885, %v873
        %v1438 = vpack.c.b16 %v886, %v874
        %v1439 = vpack.c.b16 %v887, %v875
        %v1440 = vpack.c.b16 %v888, %v876
        %v1441 = vpack.c.b16 %v889, %v877
        %v1442 = vpack.c.b16 %v890, %v878
        %v1443 = vpack.c.b16 %v891, %v879
        %v1444 = vpack.c.b16 %v892, %v880
        %v1445 = vpack.c.b16 %v893, %v881
        %v1446 = vpack.c.b16 %v894, %v882
        %v1447 = vpack.c.b16 %v907, %v895
        %v1448 = vpack.c.b16 %v908, %v896
        %v1449 = vpack.c.b16 %v909, %v897
        %v1450 = vpack.c.b16 %v910, %v898
        %v1451 = vpack.c.b16 %v911, %v899
        %v1452 = vpack.c.b16 %v912, %v900
        %v1453 = vpack.c.b16 %v913, %v901
        %v1454 = vpack.c.b16 %v914, %v902
        %v1455 = vpack.c.b16 %v915, %v903
        %v1456 = vpack.c.b16 %v916, %v904
        %v1457 = vpack.c.b16 %v917, %v905
        %v1458 = vpack.c.b16 %v918, %v906
        %v1459 = vpack.c.b16 %v931, %v919
        %v1460 = vpack.c.b16 %v932, %v920
        %v1461 = vpack.c.b16 %v933, %v921
        %v1462 = vpack.c.b16 %v934, %v922
        %v1463 = vpack.c.b16 %v935, %v923
        %v1464 = vpack.c.b16 %v936, %v924
        %v1465 = vpack.c.b16 %v937, %v925
        %v1466 = vpack.c.b16 %v938, %v926
        %v1467 = vpack.c.b16 %v939, %v927
        %v1468 = vpack.c.b16 %v940, %v928
        %v1469 = vpack.c.b16 %v941, %v929
        %v1470 = vpack.c.b16 %v942, %v930
        %v1471 = vpack.c.b16 %v955, %v943
        %v1472 = vpack.c.b16 %v956, %v944
        %v1473 = vpack.c.b16 %v957, %v945
        %v1474 = vpack.c.b16 %v958, %v946
        %v1475 = vpack.c.b16 %v959, %v947
        %v1476 = vpack.c.b16 %v960, %v948
        %v1477 = vpack.c.b16 %v961, %v949
        %v1478 = vpack.c.b16 %v962, %v950
        %v1479 = vpack.c.b16 %v963, %v951
        %v1480 = vpack.c.b16 %v964, %v952
        %v1481 = vpack.c.b16 %v965, %v953
        %v1482 = vpack.c.b16 %v966, %v954
        %v1483 = vpack.c.b16 %v979, %v967
        %v1484 = vpack.c.b16 %v980, %v968
        %v1485 = vpack.c.b16 %v981, %v969
        %v1486 = vpack.c.b16 %v982, %v970
        %v1487 = vpack.c.b16 %v983, %v971
        %v1488 = vpack.c.b16 %v984, %v972
        %v1489 = vpack.c.b16 %v985, %v973
        %v1490 = vpack.c.b16 %v986, %v974
        %v1491 = vpack.c.b16 %v987, %v975
        %v1492 = vpack.c.b16 %v988, %v976
        %v1493 = vpack.c.b16 %v989, %v977
        %v1494 = vpack.c.b16 %v990, %v978
        %v1495 = vpack.c.b16 %v1003, %v991
        %v1496 = vpack.c.b16 %v1004, %v992
        %v1497 = vpack.c.b16 %v1005, %v993
        %v1498 = vpack.c.b16 %v1006, %v994
        %v1499 = vpack.c.b16 %v1007, %v995
        %v1500 = vpack.c.b16 %v1008, %v996
        %v1501 = vpack.c.b16 %v1009, %v997
        %v1502 = vpack.c.b16 %v1010, %v998
        %v1503 = vpack.c.b16 %v1011, %v999
        %v1504 = vpack.c.b16 %v1012, %v1000
        %v1505 = vpack.c.b16 %v1013, %v1001
        %v1506 = vpack.c.b16 %v1014, %v1002
        %v1507 = vpack.c.b16 %v1027, %v1015
        %v1508 = vpack.c.b16 %v1028, %v1016
        %v1509 = vpack.c.b16 %v1029, %v1017
        %v1510 = vpack.c.b16 %v1030, %v1018
        %v1511 = vpack.c.b16 %v1031, %v1019
        %v1512 = vpack.c.b16 %v1032, %v1020
        %v1513 = vpack.c.b16 %v1033, %v1021
        %v1514 = vpack.c.b16 %v1034, %v1022
        %v1515 = vpack.c.b16 %v1035, %v1023
        %v1516 = vpack.c.b16 %v1036, %v1024
        %v1517 = vpack.c.b16 %v1037, %v1025
        %v1518 = vpack.c.b16 %v1038, %v1026
        %v1519 = vpack.c.b16 %v1051, %v1039
        %v1520 = vpack.c.b16 %v1052, %v1040
        %v1521 = vpack.c.b16 %v1053, %v1041
        %v1522 = vpack.c.b16 %v1054, %v1042
        %v1523 = vpack.c.b16 %v1055, %v1043
        %v1524 = vpack.c.b16 %v1056, %v1044
        %v1525 = vpack.c.b16 %v1057, %v1045
        %v1526 = vpack.c.b16 %v1058, %v1046
        %v1527 = vpack.c.b16 %v1059, %v1047
        %v1528 = vpack.c.b16 %v1060, %v1048
        %v1529 = vpack.c.b16 %v1061, %v1049
        %v1530 = vpack.c.b16 %v1062, %v1050
        %v1531 = vpack.c.b16 %v1075, %v1063
        %v1532 = vpack.c.b16 %v1076, %v1064
        %v1533 = vpack.c.b16 %v1077, %v1065
        %v1534 = vpack.c.b16 %v1078, %v1066
        %v1535 = vpack.c.b16 %v1079, %v1067
        %v1536 = vpack.c.b16 %v1080, %v1068
        %v1537 = vpack.c.b16 %v1081, %v1069
        %v1538 = vpack.c.b16 %v1082, %v1070
        %v1539 = vpack.c.b16 %v1083, %v1071
        %v1540 = vpack.c.b16 %v1084, %v1072
        %v1541 = vpack.c.b16 %v1085, %v1073
        %v1542 = vpack.c.b16 %v1086, %v1074
        %v1543 = vpack.c.b16 %v1099, %v1087
        %v1544 = vpack.c.b16 %v1100, %v1088
        %v1545 = vpack.c.b16 %v1101, %v1089
        %v1546 = vpack.c.b16 %v1102, %v1090
        %v1547 = vpack.c.b16 %v1103, %v1091
        %v1548 = vpack.c.b16 %v1104, %v1092
        %v1549 = vpack.c.b16 %v1105, %v1093
        %v1550 = vpack.c.b16 %v1106, %v1094
        %v1551 = vpack.c.b16 %v1107, %v1095
        %v1552 = vpack.c.b16 %v1108, %v1096
        %v1553 = vpack.c.b16 %v1109, %v1097
        %v1554 = vpack.c.b16 %v1110, %v1098
        %v1555 = vpack.c.b16 %v1123, %v1111
        %v1556 = vpack.c.b16 %v1124, %v1112
        %v1557 = vpack.c.b16 %v1125, %v1113
        %v1558 = vpack.c.b16 %v1126, %v1114
        %v1559 = vpack.c.b16 %v1127, %v1115
        %v1560 = vpack.c.b16 %v1128, %v1116
        %v1561 = vpack.c.b16 %v1129, %v1117
        %v1562 = vpack.c.b16 %v1130, %v1118
        %v1563 = vpack.c.b16 %v1131, %v1119
        %v1564 = vpack.c.b16 %v1132, %v1120
        %v1565 = vpack.c.b16 %v1133, %v1121
        %v1566 = vpack.c.b16 %v1134, %v1122
        %v1567 = vpack.c.b16 %v1147, %v1135
        %v1568 = vpack.c.b16 %v1148, %v1136
        %v1569 = vpack.c.b16 %v1149, %v1137
        %v1570 = vpack.c.b16 %v1150, %v1138
        %v1571 = vpack.c.b16 %v1151, %v1139
        %v1572 = vpack.c.b16 %v1152, %v1140
        %v1573 = vpack.c.b16 %v1153, %v1141
        %v1574 = vpack.c.b16 %v1154, %v1142
        %v1575 = vpack.c.b16 %v1155, %v1143
        %v1576 = vpack.c.b16 %v1156, %v1144
        %v1577 = vpack.c.b16 %v1157, %v1145
        %v1578 = vpack.c.b16 %v1158, %v1146
        %v1579 = vpack.c.b16 %v1171, %v1159
        %v1580 = vpack.c.b16 %v1172, %v1160
        %v1581 = vpack.c.b16 %v1173, %v1161
        %v1582 = vpack.c.b16 %v1174, %v1162
        %v1583 = vpack.c.b16 %v1175, %v1163
        %v1584 = vpack.c.b16 %v1176, %v1164
        %v1585 = vpack.c.b16 %v1177, %v1165
        %v1586 = vpack.c.b16 %v1178, %v1166
        %v1587 = vpack.c.b16 %v1179, %v1167
        %v1588 = vpack.c.b16 %v1180, %v1168
        %v1589 = vpack.c.b16 %v1181, %v1169
        %v1590 = vpack.c.b16 %v1182, %v1170
        %v1591 = vpack.c.b16 %v1195, %v1183
        %v1592 = vpack.c.b16 %v1196, %v1184
        %v1593 = vpack.c.b16 %v1197, %v1185
        %v1594 = vpack.c.b16 %v1198, %v1186
        %v1595 = vpack.c.b16 %v1199, %v1187
        %v1596 = vpack.c.b16 %v1200, %v1188
        %v1597 = vpack.c.b16 %v1201, %v1189
        %v1598 = vpack.c.b16 %v1202, %v1190
        %v1599 = vpack.c.b16 %v1203, %v1191
        %v1600 = vpack.c.b16 %v1204, %v1192
        %v1601 = vpack.c.b16 %v1205, %v1193
        %v1602 = vpack.c.b16 %v1206, %v1194
        %v1603 = vpack.c.b16 %v1219, %v1207
        %v1604 = vpack.c.b16 %v1220, %v1208
        %v1605 = vpack.c.b16 %v1221, %v1209
        %v1606 = vpack.c.b16 %v1222, %v1210
        %v1607 = vpack.c.b16 %v1223, %v1211
        %v1608 = vpack.c.b16 %v1224, %v1212
        %v1609 = vpack.c.b16 %v1225, %v1213
        %v1610 = vpack.c.b16 %v1226, %v1214
        %v1611 = vpack.c.b16 %v1227, %v1215
        %v1612 = vpack.c.b16 %v1228, %v1216
        %v1613 = vpack.c.b16 %v1229, %v1217
        %v1614 = vpack.c.b16 %v1230, %v1218
        %v1615 = vpack.c.b16 %v1243, %v1231
        %v1616 = vpack.c.b16 %v1244, %v1232
        %v1617 = vpack.c.b16 %v1245, %v1233
        %v1618 = vpack.c.b16 %v1246, %v1234
        %v1619 = vpack.c.b16 %v1247, %v1235
        %v1620 = vpack.c.b16 %v1248, %v1236
        %v1621 = vpack.c.b16 %v1249, %v1237
        %v1622 = vpack.c.b16 %v1250, %v1238
        %v1623 = vpack.c.b16 %v1251, %v1239
        %v1624 = vpack.c.b16 %v1252, %v1240
        %v1625 = vpack.c.b16 %v1253, %v1241
        %v1626 = vpack.c.b16 %v1254, %v1242
        %v1627 = vpack.c.b16 %v1267, %v1255
        %v1628 = vpack.c.b16 %v1268, %v1256
        %v1629 = vpack.c.b16 %v1269, %v1257
        %v1630 = vpack.c.b16 %v1270, %v1258
        %v1631 = vpack.c.b16 %v1271, %v1259
        %v1632 = vpack.c.b16 %v1272, %v1260
        %v1633 = vpack.c.b16 %v1273, %v1261
        %v1634 = vpack.c.b16 %v1274, %v1262
        %v1635 = vpack.c.b16 %v1275, %v1263
        %v1636 = vpack.c.b16 %v1276, %v1264
        %v1637 = vpack.c.b16 %v1277, %v1265
        %v1638 = vpack.c.b16 %v1278, %v1266
        %v1639 = vpack.c.b16 %v1291, %v1279
        %v1640 = vpack.c.b16 %v1292, %v1280
        %v1641 = vpack.c.b16 %v1293, %v1281
        %v1642 = vpack.c.b16 %v1294, %v1282
        %v1643 = vpack.c.b16 %v1295, %v1283
        %v1644 = vpack.c.b16 %v1296, %v1284
        %v1645 = vpack.c.b16 %v1297, %v1285
        %v1646 = vpack.c.b16 %v1298, %v1286
        %v1647 = vpack.c.b16 %v1299, %v1287
        %v1648 = vpack.c.b16 %v1300, %v1288
        %v1649 = vpack.c.b16 %v1301, %v1289
        %v1650 = vpack.c.b16 %v1302, %v1290
        %v1651 = vpack.c.b16 %v1315, %v1303
        %v1652 = vpack.c.b16 %v1316, %v1304
        %v1653 = vpack.c.b16 %v1317, %v1305
        %v1654 = vpack.c.b16 %v1318, %v1306
        %v1655 = vpack.c.b16 %v1319, %v1307
        %v1656 = vpack.c.b16 %v1320, %v1308
        %v1657 = vpack.c.b16 %v1321, %v1309
        %v1658 = vpack.c.b16 %v1322, %v1310
        %v1659 = vpack.c.b16 %v1323, %v1311
        %v1660 = vpack.c.b16 %v1324, %v1312
        %v1661 = vpack.c.b16 %v1325, %v1313
        %v1662 = vpack.c.b16 %v1326, %v1314
        %v1663 = vpack.c.b16 %v1339, %v1327
        %v1664 = vpack.c.b16 %v1340, %v1328
        %v1665 = vpack.c.b16 %v1341, %v1329
        %v1666 = vpack.c.b16 %v1342, %v1330
        %v1667 = vpack.c.b16 %v1343, %v1331
        %v1668 = vpack.c.b16 %v1344, %v1332
        %v1669 = vpack.c.b16 %v1345, %v1333
        %v1670 = vpack.c.b16 %v1346, %v1334
        %v1671 = vpack.c.b16 %v1347, %v1335
        %v1672 = vpack.c.b16 %v1348, %v1336
        %v1673 = vpack.c.b16 %v1349, %v1337
        %v1674 = vpack.c.b16 %v1350, %v1338
        %v1675 = vpack.c.b16 %v1363, %v1351
        %v1676 = vpack.c.b16 %v1364, %v1352
        %v1677 = vpack.c.b16 %v1365, %v1353
        %v1678 = vpack.c.b16 %v1366, %v1354
        %v1679 = vpack.c.b16 %v1367, %v1355
        %v1680 = vpack.c.b16 %v1368, %v1356
        %v1681 = vpack.c.b16 %v1369, %v1357
        %v1682 = vpack.c.b16 %v1370, %v1358
        %v1683 = vpack.c.b16 %v1371, %v1359
        %v1684 = vpack.c.b16 %v1372, %v1360
        %v1685 = vpack.c.b16 %v1373, %v1361
        %v1686 = vpack.c.b16 %v1374, %v1362
        %v1687 = vpack.c.b16 %v1387, %v1375
        %v1688 = vpack.c.b16 %v1388, %v1376
        %v1689 = vpack.c.b16 %v1389, %v1377
        %v1690 = vpack.c.b16 %v1390, %v1378
        %v1691 = vpack.c.b16 %v1391, %v1379
        %v1692 = vpack.c.b16 %v1392, %v1380
        %v1693 = vpack.c.b16 %v1393, %v1381
        %v1694 = vpack.c.b16 %v1394, %v1382
        %v1695 = vpack.c.b16 %v1395, %v1383
        %v1696 = vpack.c.b16 %v1396, %v1384
        %v1697 = vpack.c.b16 %v1397, %v1385
        %v1698 = vpack.c.b16 %v1398, %v1386
        %v1699 = vpack.c.b16 %v1411, %v1399
        %v1700 = vpack.c.b16 %v1412, %v1400
        %v1701 = vpack.c.b16 %v1413, %v1401
        %v1702 = vpack.c.b16 %v1414, %v1402
        %v1703 = vpack.c.b16 %v1415, %v1403
        %v1704 = vpack.c.b16 %v1416, %v1404
        %v1705 = vpack.c.b16 %v1417, %v1405
        %v1706 = vpack.c.b16 %v1418, %v1406
        %v1707 = vpack.c.b16 %v1419, %v1407
        %v1708 = vpack.c.b16 %v1420, %v1408
        %v1709 = vpack.c.b16 %v1421, %v1409
        %v1710 = vpack.c.b16 %v1422, %v1410
        %1999 = vmatpush.bf16.msra.mxu0 %v1507
        %2000 = vmatpush.bf16.msra.mxu0 %v1495
        %2001 = vmatpush.bf16.msra.mxu0 %v1483
        %2002 = vmatpush.bf16.msra.mxu0 %v1471
        %2003 = vmatpush.bf16.msra.mxu0 %v1459
        %2004 = vmatpush.bf16.msra.mxu0 %v1447
        %2005 = vmatpush.bf16.msra.mxu0 %v1435
        %2006 = vmatpush.bf16.msra.mxu0 %v1423
        %2007 = vmatmul.bf16.gmra.mxu0 %v268
        %v2008 = vpop.f32.mrf.mxu0
        %v2009 = vadd.f32 0.0, %v2008
        %v2010 = vpop.f32.mrf.mxu0
        %2011 = vdwg.mxu0
        %2012 = vmatpush.bf16.msra.mxu0 %v1603
        %2013 = vmatpush.bf16.msra.mxu0 %v1591
        %2014 = vmatpush.bf16.msra.mxu0 %v1579
        %2015 = vmatpush.bf16.msra.mxu0 %v1567
        %2016 = vmatpush.bf16.msra.mxu0 %v1555
        %2017 = vmatpush.bf16.msra.mxu0 %v1543
        %2018 = vmatpush.bf16.msra.mxu0 %v1531
        %2019 = vmatpush.bf16.msra.mxu0 %v1519
        %2020 = vmatmul.bf16.gmra.mxu0 %v269
        %v2021 = vpop.f32.mrf.mxu0
        %v2022 = vadd.f32 %v2009, %v2021
        %v2023 = vpop.f32.mrf.mxu0
        %2024 = vdwg.mxu0
        %2025 = vmatpush.bf16.msra.mxu0 %v1699
        %2026 = vmatpush.bf16.msra.mxu0 %v1687
        %2027 = vmatpush.bf16.msra.mxu0 %v1675
        %2028 = vmatpush.bf16.msra.mxu0 %v1663
        %2029 = vmatpush.bf16.msra.mxu0 %v1651
        %2030 = vmatpush.bf16.msra.mxu0 %v1639
        %2031 = vmatpush.bf16.msra.mxu0 %v1627
        %2032 = vmatpush.bf16.msra.mxu0 %v1615
        %2033 = vmatmul.bf16.gmra.mxu0 %v270
        %v2034 = vpop.f32.mrf.mxu0
        %v2035 = vadd.f32 %v2022, %v2034
        %v2036 = vpop.f32.mrf.mxu0
        %2037 = vdwg.mxu0
        %2038 = vmatpush.bf16.msra.mxu0 %v1508
        %2039 = vmatpush.bf16.msra.mxu0 %v1496
        %2040 = vmatpush.bf16.msra.mxu0 %v1484
        %2041 = vmatpush.bf16.msra.mxu0 %v1472
        %2042 = vmatpush.bf16.msra.mxu0 %v1460
        %2043 = vmatpush.bf16.msra.mxu0 %v1448
        %2044 = vmatpush.bf16.msra.mxu0 %v1436
        %2045 = vmatpush.bf16.msra.mxu0 %v1424
        %2046 = vmatmul.bf16.gmra.mxu0 %v268
        %v2047 = vpop.f32.mrf.mxu0
        %v2048 = vadd.f32 0.0, %v2047
        %v2049 = vpop.f32.mrf.mxu0
        %2050 = vdwg.mxu0
        %2051 = vmatpush.bf16.msra.mxu0 %v1604
        %2052 = vmatpush.bf16.msra.mxu0 %v1592
        %2053 = vmatpush.bf16.msra.mxu0 %v1580
        %2054 = vmatpush.bf16.msra.mxu0 %v1568
        %2055 = vmatpush.bf16.msra.mxu0 %v1556
        %2056 = vmatpush.bf16.msra.mxu0 %v1544
        %2057 = vmatpush.bf16.msra.mxu0 %v1532
        %2058 = vmatpush.bf16.msra.mxu0 %v1520
        %2059 = vmatmul.bf16.gmra.mxu0 %v269
        %v2060 = vpop.f32.mrf.mxu0
        %v2061 = vadd.f32 %v2048, %v2060
        %v2062 = vpop.f32.mrf.mxu0
        %2063 = vdwg.mxu0
        %2064 = vmatpush.bf16.msra.mxu0 %v1700
        %2065 = vmatpush.bf16.msra.mxu0 %v1688
        %2066 = vmatpush.bf16.msra.mxu0 %v1676
        %2067 = vmatpush.bf16.msra.mxu0 %v1664
        %2068 = vmatpush.bf16.msra.mxu0 %v1652
        %2069 = vmatpush.bf16.msra.mxu0 %v1640
        %2070 = vmatpush.bf16.msra.mxu0 %v1628
        %2071 = vmatpush.bf16.msra.mxu0 %v1616
        %2072 = vmatmul.bf16.gmra.mxu0 %v270
        %v2073 = vpop.f32.mrf.mxu0
        %v2074 = vadd.f32 %v2061, %v2073
        %v2075 = vpop.f32.mrf.mxu0
        %2076 = vdwg.mxu0
        %2077 = vmatpush.bf16.msra.mxu0 %v1509
        %2078 = vmatpush.bf16.msra.mxu0 %v1497
        %2079 = vmatpush.bf16.msra.mxu0 %v1485
        %2080 = vmatpush.bf16.msra.mxu0 %v1473
        %2081 = vmatpush.bf16.msra.mxu0 %v1461
        %2082 = vmatpush.bf16.msra.mxu0 %v1449
        %2083 = vmatpush.bf16.msra.mxu0 %v1437
        %2084 = vmatpush.bf16.msra.mxu0 %v1425
        %2085 = vmatmul.bf16.gmra.mxu0 %v268
        %v2086 = vpop.f32.mrf.mxu0
        %v2087 = vadd.f32 0.0, %v2086
        %v2088 = vpop.f32.mrf.mxu0
        %2089 = vdwg.mxu0
        %2090 = vmatpush.bf16.msra.mxu0 %v1605
        %2091 = vmatpush.bf16.msra.mxu0 %v1593
        %2092 = vmatpush.bf16.msra.mxu0 %v1581
        %2093 = vmatpush.bf16.msra.mxu0 %v1569
        %2094 = vmatpush.bf16.msra.mxu0 %v1557
        %2095 = vmatpush.bf16.msra.mxu0 %v1545
        %2096 = vmatpush.bf16.msra.mxu0 %v1533
        %2097 = vmatpush.bf16.msra.mxu0 %v1521
        %2098 = vmatmul.bf16.gmra.mxu0 %v269
        %v2099 = vpop.f32.mrf.mxu0
        %v2100 = vadd.f32 %v2087, %v2099
        %v2101 = vpop.f32.mrf.mxu0
        %2102 = vdwg.mxu0
        %2103 = vmatpush.bf16.msra.mxu0 %v1701
        %2104 = vmatpush.bf16.msra.mxu0 %v1689
        %2105 = vmatpush.bf16.msra.mxu0 %v1677
        %2106 = vmatpush.bf16.msra.mxu0 %v1665
        %2107 = vmatpush.bf16.msra.mxu0 %v1653
        %2108 = vmatpush.bf16.msra.mxu0 %v1641
        %2109 = vmatpush.bf16.msra.mxu0 %v1629
        %2110 = vmatpush.bf16.msra.mxu0 %v1617
        %2111 = vmatmul.bf16.gmra.mxu0 %v270
        %v2112 = vpop.f32.mrf.mxu0
        %v2113 = vadd.f32 %v2100, %v2112
        %v2114 = vpop.f32.mrf.mxu0
        %2115 = vdwg.mxu0
        %2116 = vmatpush.bf16.msra.mxu0 %v1510
        %2117 = vmatpush.bf16.msra.mxu0 %v1498
        %2118 = vmatpush.bf16.msra.mxu0 %v1486
        %2119 = vmatpush.bf16.msra.mxu0 %v1474
        %2120 = vmatpush.bf16.msra.mxu0 %v1462
        %2121 = vmatpush.bf16.msra.mxu0 %v1450
        %2122 = vmatpush.bf16.msra.mxu0 %v1438
        %2123 = vmatpush.bf16.msra.mxu0 %v1426
        %2124 = vmatmul.bf16.gmra.mxu0 %v268
        %v2125 = vpop.f32.mrf.mxu0
        %v2126 = vadd.f32 0.0, %v2125
        %v2127 = vpop.f32.mrf.mxu0
        %2128 = vdwg.mxu0
        %2129 = vmatpush.bf16.msra.mxu0 %v1606
        %2130 = vmatpush.bf16.msra.mxu0 %v1594
        %2131 = vmatpush.bf16.msra.mxu0 %v1582
        %2132 = vmatpush.bf16.msra.mxu0 %v1570
        %2133 = vmatpush.bf16.msra.mxu0 %v1558
        %2134 = vmatpush.bf16.msra.mxu0 %v1546
        %2135 = vmatpush.bf16.msra.mxu0 %v1534
        %2136 = vmatpush.bf16.msra.mxu0 %v1522
        %2137 = vmatmul.bf16.gmra.mxu0 %v269
        %v2138 = vpop.f32.mrf.mxu0
        %v2139 = vadd.f32 %v2126, %v2138
        %v2140 = vpop.f32.mrf.mxu0
        %2141 = vdwg.mxu0
        %2142 = vmatpush.bf16.msra.mxu0 %v1702
        %2143 = vmatpush.bf16.msra.mxu0 %v1690
        %2144 = vmatpush.bf16.msra.mxu0 %v1678
        %2145 = vmatpush.bf16.msra.mxu0 %v1666
        %2146 = vmatpush.bf16.msra.mxu0 %v1654
        %2147 = vmatpush.bf16.msra.mxu0 %v1642
        %2148 = vmatpush.bf16.msra.mxu0 %v1630
        %2149 = vmatpush.bf16.msra.mxu0 %v1618
        %2150 = vmatmul.bf16.gmra.mxu0 %v270
        %v2151 = vpop.f32.mrf.mxu0
        %v2152 = vadd.f32 %v2139, %v2151
        %v2153 = vpop.f32.mrf.mxu0
        %2154 = vdwg.mxu0
        %2155 = vmatpush.bf16.msra.mxu0 %v1511
        %2156 = vmatpush.bf16.msra.mxu0 %v1499
        %2157 = vmatpush.bf16.msra.mxu0 %v1487
        %2158 = vmatpush.bf16.msra.mxu0 %v1475
        %2159 = vmatpush.bf16.msra.mxu0 %v1463
        %2160 = vmatpush.bf16.msra.mxu0 %v1451
        %2161 = vmatpush.bf16.msra.mxu0 %v1439
        %2162 = vmatpush.bf16.msra.mxu0 %v1427
        %2163 = vmatmul.bf16.gmra.mxu0 %v268
        %v2164 = vpop.f32.mrf.mxu0
        %v2165 = vadd.f32 0.0, %v2164
        %v2166 = vpop.f32.mrf.mxu0
        %2167 = vdwg.mxu0
        %2168 = vmatpush.bf16.msra.mxu0 %v1607
        %2169 = vmatpush.bf16.msra.mxu0 %v1595
        %2170 = vmatpush.bf16.msra.mxu0 %v1583
        %2171 = vmatpush.bf16.msra.mxu0 %v1571
        %2172 = vmatpush.bf16.msra.mxu0 %v1559
        %2173 = vmatpush.bf16.msra.mxu0 %v1547
        %2174 = vmatpush.bf16.msra.mxu0 %v1535
        %2175 = vmatpush.bf16.msra.mxu0 %v1523
        %2176 = vmatmul.bf16.gmra.mxu0 %v269
        %v2177 = vpop.f32.mrf.mxu0
        %v2178 = vadd.f32 %v2165, %v2177
        %v2179 = vpop.f32.mrf.mxu0
        %2180 = vdwg.mxu0
        %2181 = vmatpush.bf16.msra.mxu0 %v1703
        %2182 = vmatpush.bf16.msra.mxu0 %v1691
        %2183 = vmatpush.bf16.msra.mxu0 %v1679
        %2184 = vmatpush.bf16.msra.mxu0 %v1667
        %2185 = vmatpush.bf16.msra.mxu0 %v1655
        %2186 = vmatpush.bf16.msra.mxu0 %v1643
        %2187 = vmatpush.bf16.msra.mxu0 %v1631
        %2188 = vmatpush.bf16.msra.mxu0 %v1619
        %2189 = vmatmul.bf16.gmra.mxu0 %v270
        %v2190 = vpop.f32.mrf.mxu0
        %v2191 = vadd.f32 %v2178, %v2190
        %v2192 = vpop.f32.mrf.mxu0
        %2193 = vdwg.mxu0
        %2194 = vmatpush.bf16.msra.mxu0 %v1512
        %2195 = vmatpush.bf16.msra.mxu0 %v1500
        %2196 = vmatpush.bf16.msra.mxu0 %v1488
        %2197 = vmatpush.bf16.msra.mxu0 %v1476
        %2198 = vmatpush.bf16.msra.mxu0 %v1464
        %2199 = vmatpush.bf16.msra.mxu0 %v1452
        %2200 = vmatpush.bf16.msra.mxu0 %v1440
        %2201 = vmatpush.bf16.msra.mxu0 %v1428
        %2202 = vmatmul.bf16.gmra.mxu0 %v268
        %v2203 = vpop.f32.mrf.mxu0
        %v2204 = vadd.f32 0.0, %v2203
        %v2205 = vpop.f32.mrf.mxu0
        %2206 = vdwg.mxu0
        %2207 = vmatpush.bf16.msra.mxu0 %v1608
        %2208 = vmatpush.bf16.msra.mxu0 %v1596
        %2209 = vmatpush.bf16.msra.mxu0 %v1584
        %2210 = vmatpush.bf16.msra.mxu0 %v1572
        %2211 = vmatpush.bf16.msra.mxu0 %v1560
        %2212 = vmatpush.bf16.msra.mxu0 %v1548
        %2213 = vmatpush.bf16.msra.mxu0 %v1536
        %2214 = vmatpush.bf16.msra.mxu0 %v1524
        %2215 = vmatmul.bf16.gmra.mxu0 %v269
        %v2216 = vpop.f32.mrf.mxu0
        %v2217 = vadd.f32 %v2204, %v2216
        %v2218 = vpop.f32.mrf.mxu0
        %2219 = vdwg.mxu0
        %2220 = vmatpush.bf16.msra.mxu0 %v1704
        %2221 = vmatpush.bf16.msra.mxu0 %v1692
        %2222 = vmatpush.bf16.msra.mxu0 %v1680
        %2223 = vmatpush.bf16.msra.mxu0 %v1668
        %2224 = vmatpush.bf16.msra.mxu0 %v1656
        %2225 = vmatpush.bf16.msra.mxu0 %v1644
        %2226 = vmatpush.bf16.msra.mxu0 %v1632
        %2227 = vmatpush.bf16.msra.mxu0 %v1620
        %2228 = vmatmul.bf16.gmra.mxu0 %v270
        %v2229 = vpop.f32.mrf.mxu0
        %v2230 = vadd.f32 %v2217, %v2229
        %v2231 = vpop.f32.mrf.mxu0
        %2232 = vdwg.mxu0
        %2233 = vmatpush.bf16.msra.mxu0 %v1513
        %2234 = vmatpush.bf16.msra.mxu0 %v1501
        %2235 = vmatpush.bf16.msra.mxu0 %v1489
        %2236 = vmatpush.bf16.msra.mxu0 %v1477
        %2237 = vmatpush.bf16.msra.mxu0 %v1465
        %2238 = vmatpush.bf16.msra.mxu0 %v1453
        %2239 = vmatpush.bf16.msra.mxu0 %v1441
        %2240 = vmatpush.bf16.msra.mxu0 %v1429
        %2241 = vmatmul.bf16.gmra.mxu0 %v268
        %v2242 = vpop.f32.mrf.mxu0
        %v2243 = vadd.f32 0.0, %v2242
        %v2244 = vpop.f32.mrf.mxu0
        %2245 = vdwg.mxu0
        %2246 = vmatpush.bf16.msra.mxu0 %v1609
        %2247 = vmatpush.bf16.msra.mxu0 %v1597
        %2248 = vmatpush.bf16.msra.mxu0 %v1585
        %2249 = vmatpush.bf16.msra.mxu0 %v1573
        %2250 = vmatpush.bf16.msra.mxu0 %v1561
        %2251 = vmatpush.bf16.msra.mxu0 %v1549
        %2252 = vmatpush.bf16.msra.mxu0 %v1537
        %2253 = vmatpush.bf16.msra.mxu0 %v1525
        %2254 = vmatmul.bf16.gmra.mxu0 %v269
        %v2255 = vpop.f32.mrf.mxu0
        %v2256 = vadd.f32 %v2243, %v2255
        %v2257 = vpop.f32.mrf.mxu0
        %2258 = vdwg.mxu0
        %2259 = vmatpush.bf16.msra.mxu0 %v1705
        %2260 = vmatpush.bf16.msra.mxu0 %v1693
        %2261 = vmatpush.bf16.msra.mxu0 %v1681
        %2262 = vmatpush.bf16.msra.mxu0 %v1669
        %2263 = vmatpush.bf16.msra.mxu0 %v1657
        %2264 = vmatpush.bf16.msra.mxu0 %v1645
        %2265 = vmatpush.bf16.msra.mxu0 %v1633
        %2266 = vmatpush.bf16.msra.mxu0 %v1621
        %2267 = vmatmul.bf16.gmra.mxu0 %v270
        %v2268 = vpop.f32.mrf.mxu0
        %v2269 = vadd.f32 %v2256, %v2268
        %v2270 = vpop.f32.mrf.mxu0
        %2271 = vdwg.mxu0
        %2272 = vmatpush.bf16.msra.mxu0 %v1514
        %2273 = vmatpush.bf16.msra.mxu0 %v1502
        %2274 = vmatpush.bf16.msra.mxu0 %v1490
        %2275 = vmatpush.bf16.msra.mxu0 %v1478
        %2276 = vmatpush.bf16.msra.mxu0 %v1466
        %2277 = vmatpush.bf16.msra.mxu0 %v1454
        %2278 = vmatpush.bf16.msra.mxu0 %v1442
        %2279 = vmatpush.bf16.msra.mxu0 %v1430
        %2280 = vmatmul.bf16.gmra.mxu0 %v268
        %v2281 = vpop.f32.mrf.mxu0
        %v2282 = vadd.f32 0.0, %v2281
        %v2283 = vpop.f32.mrf.mxu0
        %2284 = vdwg.mxu0
        %2285 = vmatpush.bf16.msra.mxu0 %v1610
        %2286 = vmatpush.bf16.msra.mxu0 %v1598
        %2287 = vmatpush.bf16.msra.mxu0 %v1586
        %2288 = vmatpush.bf16.msra.mxu0 %v1574
        %2289 = vmatpush.bf16.msra.mxu0 %v1562
        %2290 = vmatpush.bf16.msra.mxu0 %v1550
        %2291 = vmatpush.bf16.msra.mxu0 %v1538
        %2292 = vmatpush.bf16.msra.mxu0 %v1526
        %2293 = vmatmul.bf16.gmra.mxu0 %v269
        %v2294 = vpop.f32.mrf.mxu0
        %v2295 = vadd.f32 %v2282, %v2294
        %v2296 = vpop.f32.mrf.mxu0
        %2297 = vdwg.mxu0
        %2298 = vmatpush.bf16.msra.mxu0 %v1706
        %2299 = vmatpush.bf16.msra.mxu0 %v1694
        %2300 = vmatpush.bf16.msra.mxu0 %v1682
        %2301 = vmatpush.bf16.msra.mxu0 %v1670
        %2302 = vmatpush.bf16.msra.mxu0 %v1658
        %2303 = vmatpush.bf16.msra.mxu0 %v1646
        %2304 = vmatpush.bf16.msra.mxu0 %v1634
        %2305 = vmatpush.bf16.msra.mxu0 %v1622
        %2306 = vmatmul.bf16.gmra.mxu0 %v270
        %v2307 = vpop.f32.mrf.mxu0
        %v2308 = vadd.f32 %v2295, %v2307
        %v2309 = vpop.f32.mrf.mxu0
        %2310 = vdwg.mxu0
        %2311 = vmatpush.bf16.msra.mxu0 %v1515
        %2312 = vmatpush.bf16.msra.mxu0 %v1503
        %2313 = vmatpush.bf16.msra.mxu0 %v1491
        %2314 = vmatpush.bf16.msra.mxu0 %v1479
        %2315 = vmatpush.bf16.msra.mxu0 %v1467
        %2316 = vmatpush.bf16.msra.mxu0 %v1455
        %2317 = vmatpush.bf16.msra.mxu0 %v1443
        %2318 = vmatpush.bf16.msra.mxu0 %v1431
        %2319 = vmatmul.bf16.gmra.mxu0 %v268
        %v2320 = vpop.f32.mrf.mxu0
        %v2321 = vadd.f32 0.0, %v2320
        %v2322 = vpop.f32.mrf.mxu0
        %2323 = vdwg.mxu0
        %2324 = vmatpush.bf16.msra.mxu0 %v1611
        %2325 = vmatpush.bf16.msra.mxu0 %v1599
        %2326 = vmatpush.bf16.msra.mxu0 %v1587
        %2327 = vmatpush.bf16.msra.mxu0 %v1575
        %2328 = vmatpush.bf16.msra.mxu0 %v1563
        %2329 = vmatpush.bf16.msra.mxu0 %v1551
        %2330 = vmatpush.bf16.msra.mxu0 %v1539
        %2331 = vmatpush.bf16.msra.mxu0 %v1527
        %2332 = vmatmul.bf16.gmra.mxu0 %v269
        %v2333 = vpop.f32.mrf.mxu0
        %v2334 = vadd.f32 %v2321, %v2333
        %v2335 = vpop.f32.mrf.mxu0
        %2336 = vdwg.mxu0
        %2337 = vmatpush.bf16.msra.mxu0 %v1707
        %2338 = vmatpush.bf16.msra.mxu0 %v1695
        %2339 = vmatpush.bf16.msra.mxu0 %v1683
        %2340 = vmatpush.bf16.msra.mxu0 %v1671
        %2341 = vmatpush.bf16.msra.mxu0 %v1659
        %2342 = vmatpush.bf16.msra.mxu0 %v1647
        %2343 = vmatpush.bf16.msra.mxu0 %v1635
        %2344 = vmatpush.bf16.msra.mxu0 %v1623
        %2345 = vmatmul.bf16.gmra.mxu0 %v270
        %v2346 = vpop.f32.mrf.mxu0
        %v2347 = vadd.f32 %v2334, %v2346
        %v2348 = vpop.f32.mrf.mxu0
        %2349 = vdwg.mxu0
        %2350 = vmatpush.bf16.msra.mxu0 %v1516
        %2351 = vmatpush.bf16.msra.mxu0 %v1504
        %2352 = vmatpush.bf16.msra.mxu0 %v1492
        %2353 = vmatpush.bf16.msra.mxu0 %v1480
        %2354 = vmatpush.bf16.msra.mxu0 %v1468
        %2355 = vmatpush.bf16.msra.mxu0 %v1456
        %2356 = vmatpush.bf16.msra.mxu0 %v1444
        %2357 = vmatpush.bf16.msra.mxu0 %v1432
        %2358 = vmatmul.bf16.gmra.mxu0 %v268
        %v2359 = vpop.f32.mrf.mxu0
        %v2360 = vadd.f32 0.0, %v2359
        %v2361 = vpop.f32.mrf.mxu0
        %2362 = vdwg.mxu0
        %2363 = vmatpush.bf16.msra.mxu0 %v1612
        %2364 = vmatpush.bf16.msra.mxu0 %v1600
        %2365 = vmatpush.bf16.msra.mxu0 %v1588
        %2366 = vmatpush.bf16.msra.mxu0 %v1576
        %2367 = vmatpush.bf16.msra.mxu0 %v1564
        %2368 = vmatpush.bf16.msra.mxu0 %v1552
        %2369 = vmatpush.bf16.msra.mxu0 %v1540
        %2370 = vmatpush.bf16.msra.mxu0 %v1528
        %2371 = vmatmul.bf16.gmra.mxu0 %v269
        %v2372 = vpop.f32.mrf.mxu0
        %v2373 = vadd.f32 %v2360, %v2372
        %v2374 = vpop.f32.mrf.mxu0
        %2375 = vdwg.mxu0
        %2376 = vmatpush.bf16.msra.mxu0 %v1708
        %2377 = vmatpush.bf16.msra.mxu0 %v1696
        %2378 = vmatpush.bf16.msra.mxu0 %v1684
        %2379 = vmatpush.bf16.msra.mxu0 %v1672
        %2380 = vmatpush.bf16.msra.mxu0 %v1660
        %2381 = vmatpush.bf16.msra.mxu0 %v1648
        %2382 = vmatpush.bf16.msra.mxu0 %v1636
        %2383 = vmatpush.bf16.msra.mxu0 %v1624
        %2384 = vmatmul.bf16.gmra.mxu0 %v270
        %v2385 = vpop.f32.mrf.mxu0
        %v2386 = vadd.f32 %v2373, %v2385
        %v2387 = vpop.f32.mrf.mxu0
        %2388 = vdwg.mxu0
        %2389 = vmatpush.bf16.msra.mxu0 %v1517
        %2390 = vmatpush.bf16.msra.mxu0 %v1505
        %2391 = vmatpush.bf16.msra.mxu0 %v1493
        %2392 = vmatpush.bf16.msra.mxu0 %v1481
        %2393 = vmatpush.bf16.msra.mxu0 %v1469
        %2394 = vmatpush.bf16.msra.mxu0 %v1457
        %2395 = vmatpush.bf16.msra.mxu0 %v1445
        %2396 = vmatpush.bf16.msra.mxu0 %v1433
        %2397 = vmatmul.bf16.gmra.mxu0 %v268
        %v2398 = vpop.f32.mrf.mxu0
        %v2399 = vadd.f32 0.0, %v2398
        %v2400 = vpop.f32.mrf.mxu0
        %2401 = vdwg.mxu0
        %2402 = vmatpush.bf16.msra.mxu0 %v1613
        %2403 = vmatpush.bf16.msra.mxu0 %v1601
        %2404 = vmatpush.bf16.msra.mxu0 %v1589
        %2405 = vmatpush.bf16.msra.mxu0 %v1577
        %2406 = vmatpush.bf16.msra.mxu0 %v1565
        %2407 = vmatpush.bf16.msra.mxu0 %v1553
        %2408 = vmatpush.bf16.msra.mxu0 %v1541
        %2409 = vmatpush.bf16.msra.mxu0 %v1529
        %2410 = vmatmul.bf16.gmra.mxu0 %v269
        %v2411 = vpop.f32.mrf.mxu0
        %v2412 = vadd.f32 %v2399, %v2411
        %v2413 = vpop.f32.mrf.mxu0
        %2414 = vdwg.mxu0
        %2415 = vmatpush.bf16.msra.mxu0 %v1709
        %2416 = vmatpush.bf16.msra.mxu0 %v1697
        %2417 = vmatpush.bf16.msra.mxu0 %v1685
        %2418 = vmatpush.bf16.msra.mxu0 %v1673
        %2419 = vmatpush.bf16.msra.mxu0 %v1661
        %2420 = vmatpush.bf16.msra.mxu0 %v1649
        %2421 = vmatpush.bf16.msra.mxu0 %v1637
        %2422 = vmatpush.bf16.msra.mxu0 %v1625
        %2423 = vmatmul.bf16.gmra.mxu0 %v270
        %v2424 = vpop.f32.mrf.mxu0
        %v2425 = vadd.f32 %v2412, %v2424
        %v2426 = vpop.f32.mrf.mxu0
        %2427 = vdwg.mxu0
        %2428 = vmatpush.bf16.msra.mxu0 %v1518
        %2429 = vmatpush.bf16.msra.mxu0 %v1506
        %2430 = vmatpush.bf16.msra.mxu0 %v1494
        %2431 = vmatpush.bf16.msra.mxu0 %v1482
        %2432 = vmatpush.bf16.msra.mxu0 %v1470
        %2433 = vmatpush.bf16.msra.mxu0 %v1458
        %2434 = vmatpush.bf16.msra.mxu0 %v1446
        %2435 = vmatpush.bf16.msra.mxu0 %v1434
        %2436 = vmatmul.bf16.gmra.mxu0 %v268
        %v2437 = vpop.f32.mrf.mxu0
        %v2438 = vadd.f32 0.0, %v2437
        %v2439 = vpop.f32.mrf.mxu0
        %2440 = vdwg.mxu0
        %2441 = vmatpush.bf16.msra.mxu0 %v1614
        %2442 = vmatpush.bf16.msra.mxu0 %v1602
        %2443 = vmatpush.bf16.msra.mxu0 %v1590
        %2444 = vmatpush.bf16.msra.mxu0 %v1578
        %2445 = vmatpush.bf16.msra.mxu0 %v1566
        %2446 = vmatpush.bf16.msra.mxu0 %v1554
        %2447 = vmatpush.bf16.msra.mxu0 %v1542
        %2448 = vmatpush.bf16.msra.mxu0 %v1530
        %2449 = vmatmul.bf16.gmra.mxu0 %v269
        %v2450 = vpop.f32.mrf.mxu0
        %v2451 = vadd.f32 %v2438, %v2450
        %v2452 = vpop.f32.mrf.mxu0
        %2453 = vdwg.mxu0
        %2454 = vmatpush.bf16.msra.mxu0 %v1710
        %2455 = vmatpush.bf16.msra.mxu0 %v1698
        %2456 = vmatpush.bf16.msra.mxu0 %v1686
        %2457 = vmatpush.bf16.msra.mxu0 %v1674
        %2458 = vmatpush.bf16.msra.mxu0 %v1662
        %2459 = vmatpush.bf16.msra.mxu0 %v1650
        %2460 = vmatpush.bf16.msra.mxu0 %v1638
        %2461 = vmatpush.bf16.msra.mxu0 %v1626
        %2462 = vmatmul.bf16.gmra.mxu0 %v270
        %v2463 = vpop.f32.mrf.mxu0
        %v2464 = vadd.f32 %v2451, %v2463
        %v2465 = vpop.f32.mrf.mxu0
        %2466 = vdwg.mxu0
        %v2467 = vpack.c.bf16 %v2074, %v2035
        %v2468 = vpack.c.bf16 %v2152, %v2113
        %v2469 = vpack.c.bf16 %v2230, %v2191
        %v2470 = vpack.c.bf16 %v2308, %v2269
        %v2471 = vpack.c.bf16 %v2386, %v2347
        %v2472 = vpack.c.bf16 %v2464, %v2425
        %v2473 = vlaneseq
        %v2474 = vshrl.u32 %v2473, 7
        %v2475 = vlaneseq
        %v2476 = vand.u32 %v2475, 127
        %vm2477 = vcmp.le.s32.totalorder %v2476, %v2474
        %v2478 = vsel %vm2477, 0.0, -1e+30
        %2479 = vmatpush.bf16.xpose.msra.mxu0 0
        %2480 = vmatpush.bf16.xpose.msra.mxu0 0
        %2481 = vmatpush.bf16.xpose.msra.mxu0 0
        %2482 = vmatpush.bf16.xpose.msra.mxu0 0
        %2483 = vmatpush.bf16.xpose.msra.mxu0 0
        %2484 = vmatpush.bf16.xpose.msra.mxu0 0
        %2485 = vmatpush.bf16.xpose.msra.mxu0 0
        %2486 = vmatpush.bf16.xpose.msra.mxu0 %v2469
        %2487 = vmatmul.bf16.gmra.mxu0 %v2467
        %v2488 = vpop.f32.mrf.mxu0
        %v2489 = vadd.f32 %v2478, %v2488
        %v2490 = vpop.f32.mrf.mxu0
        %2491 = vdwg.mxu0
        %vm2492 = vcmask 64512
        %v2493 = vsel %vm2492, %v2489, -inf
        %2494 = vmax.xlane.f32.xlu0 %v2493
        %v2495 = vpop.xlane.xlu0 %2494
        %v2496 = vsub.f32 %v2489, %v2495
        %v2497 = vmul.f32 %v2496, 1.442695
        %v2498 = vpow.pop %v2497
        %v2499 = vsel %vm2492, %v2498, 0.0
        %2500 = vadd.xlane.f32.xlu0 %v2499
        %v2501 = vpop.xlane.xlu0 %2500
        %v2502 = vrcp.pop %v2501
        %v2503 = vmul.f32 %v2498, %v2502
        %v2504 = vpack.c.bf16 %v2503, %v2503
        %v2506 = vsel %vm2492, %v2504, 0
        %vm2508 = vcmask 1043456
        %v2510 = vsel %vm2508, %v2471, 0
        %2512 = vmatpush.bf16.msra.mxu0 0
        %2513 = vmatpush.bf16.msra.mxu0 0
        %2514 = vmatpush.bf16.msra.mxu0 0
        %2515 = vmatpush.bf16.msra.mxu0 0
        %2516 = vmatpush.bf16.msra.mxu0 0
        %2517 = vmatpush.bf16.msra.mxu0 0
        %2518 = vmatpush.bf16.msra.mxu0 0
        %2519 = vmatpush.bf16.msra.mxu0 %v2510
        %2520 = vmatmul.bf16.gmra.mxu0 %v2506
        %v2521 = vpop.f32.mrf.mxu0
        %v2522 = vadd.f32 0.0, %v2521
        %v2523 = vpop.f32.mrf.mxu0
        %2524 = vdwg.mxu0
        %v2525 = vpack.c.bf16 %v2522, %v2522
        %v2526 = vld [vmem:[#allocation7] sm:$0xff]
        %v2527 = vld [vmem:[#allocation7 + $0x8] sm:$0xf]
        %v2528 = vld [vmem:[#allocation7 + $0xc] sm:$0xff]
        %v2529 = vld [vmem:[#allocation7 + $0x14] sm:$0xf]
        %v2530 = vld [vmem:[#allocation7 + $0x18] sm:$0xff]
        %v2531 = vld [vmem:[#allocation7 + $0x20] sm:$0xf]
        %v2532 = vld [vmem:[#allocation7 + $0x24] sm:$0xff]
        %v2533 = vld [vmem:[#allocation7 + $0x2c] sm:$0xf]
        %v2534 = vld [vmem:[#allocation7 + $0x30] sm:$0xff]
        %v2535 = vld [vmem:[#allocation7 + $0x38] sm:$0xf]
        %v2536 = vld [vmem:[#allocation7 + $0x3c] sm:$0xff]
        %v2537 = vld [vmem:[#allocation7 + $0x44] sm:$0xf]
        %v2538 = vld [vmem:[#allocation7 + $0x48] sm:$0xff]
        %v2539 = vld [vmem:[#allocation7 + $0x50] sm:$0xf]
        %v2540 = vld [vmem:[#allocation7 + $0x54] sm:$0xff]
        %v2541 = vld [vmem:[#allocation7 + $0x5c] sm:$0xf]
        %v2542 = vld [vmem:[#allocation7 + $0x60] sm:$0xff]
        %v2543 = vld [vmem:[#allocation7 + $0x68] sm:$0xf]
        %v2544 = vld [vmem:[#allocation7 + $0x6c] sm:$0xff]
        %v2545 = vld [vmem:[#allocation7 + $0x74] sm:$0xf]
        %v2546 = vld [vmem:[#allocation7 + $0x78] sm:$0xff]
        %v2547 = vld [vmem:[#allocation7 + $0x80] sm:$0xf]
        %v2548 = vld [vmem:[#allocation7 + $0x84] sm:$0xff]
        %v2549 = vld [vmem:[#allocation7 + $0x8c] sm:$0xf]
        %v2550 = vld [vmem:[#allocation7 + $0x90] sm:$0xff]
        %v2551 = vld [vmem:[#allocation7 + $0x98] sm:$0xf]
        %v2552 = vld [vmem:[#allocation7 + $0x9c] sm:$0xff]
        %v2553 = vld [vmem:[#allocation7 + $0xa4] sm:$0xf]
        %v2554 = vld [vmem:[#allocation7 + $0xa8] sm:$0xff]
        %v2555 = vld [vmem:[#allocation7 + $0xb0] sm:$0xf]
        %v2556 = vld [vmem:[#allocation7 + $0xb4] sm:$0xff]
        %v2557 = vld [vmem:[#allocation7 + $0xbc] sm:$0xf]
        %v2559 = vrot.slane %v2467, 4
        %v2562 = vrot.slane %v2469, 4
        %2564 = vmatpush.bf16.xpose.msra.mxu0 0
        %2565 = vmatpush.bf16.xpose.msra.mxu0 0
        %2566 = vmatpush.bf16.xpose.msra.mxu0 0
        %2567 = vmatpush.bf16.xpose.msra.mxu0 0
        %2568 = vmatpush.bf16.xpose.msra.mxu0 0
        %2569 = vmatpush.bf16.xpose.msra.mxu0 0
        %2570 = vmatpush.bf16.xpose.msra.mxu0 0
        %2571 = vmatpush.bf16.xpose.msra.mxu0 %v2562
        %2572 = vmatmul.bf16.gmra.mxu0 %v2559
        %v2573 = vpop.f32.mrf.mxu0
        %v2574 = vadd.f32 %v2478, %v2573
        %v2575 = vpop.f32.mrf.mxu0
        %2576 = vdwg.mxu0
        %v2577 = vsel %vm2492, %v2574, -inf
        %2578 = vmax.xlane.f32.xlu0 %v2577
        %v2579 = vpop.xlane.xlu0 %2578
        %v2580 = vsub.f32 %v2574, %v2579
        %v2581 = vmul.f32 %v2580, 1.442695
        %v2582 = vpow.pop %v2581
        %v2583 = vsel %vm2492, %v2582, 0.0
        %2584 = vadd.xlane.f32.xlu0 %v2583
        %v2585 = vpop.xlane.xlu0 %2584
        %v2586 = vrcp.pop %v2585
        %v2587 = vmul.f32 %v2582, %v2586
        %v2588 = vpack.c.bf16 %v2587, %v2587
        %v2590 = vrot.slane %v2471, 4
        %v2592 = vsel %vm2492, %v2588, 0
        %v2595 = vsel %vm2508, %v2590, 0
        %2597 = vmatpush.bf16.msra.mxu0 0
        %2598 = vmatpush.bf16.msra.mxu0 0
        %2599 = vmatpush.bf16.msra.mxu0 0
        %2600 = vmatpush.bf16.msra.mxu0 0
        %2601 = vmatpush.bf16.msra.mxu0 0
        %2602 = vmatpush.bf16.msra.mxu0 0
        %2603 = vmatpush.bf16.msra.mxu0 0
        %2604 = vmatpush.bf16.msra.mxu0 %v2595
        %2605 = vmatmul.bf16.gmra.mxu0 %v2592
        %v2606 = vpop.f32.mrf.mxu0
        %v2607 = vadd.f32 0.0, %v2606
        %v2608 = vpop.f32.mrf.mxu0
        %2609 = vdwg.mxu0
        %v2610 = vpack.c.bf16 %v2607, %v2607
        %v2611 = vld [vmem:[#allocation7 + $0xc0] sm:$0xff]
        %v2612 = vld [vmem:[#allocation7 + $0xc8] sm:$0xf]
        %v2613 = vld [vmem:[#allocation7 + $0xcc] sm:$0xff]
        %v2614 = vld [vmem:[#allocation7 + $0xd4] sm:$0xf]
        %v2615 = vld [vmem:[#allocation7 + $0xd8] sm:$0xff]
        %v2616 = vld [vmem:[#allocation7 + $0xe0] sm:$0xf]
        %v2617 = vld [vmem:[#allocation7 + $0xe4] sm:$0xff]
        %v2618 = vld [vmem:[#allocation7 + $0xec] sm:$0xf]
        %v2619 = vld [vmem:[#allocation7 + $0xf0] sm:$0xff]
        %v2620 = vld [vmem:[#allocation7 + $0xf8] sm:$0xf]
        %v2621 = vld [vmem:[#allocation7 + $0xfc] sm:$0xff]
        %v2622 = vld [vmem:[#allocation7 + $0x104] sm:$0xf]
        %v2623 = vld [vmem:[#allocation7 + $0x108] sm:$0xff]
        %v2624 = vld [vmem:[#allocation7 + $0x110] sm:$0xf]
        %v2625 = vld [vmem:[#allocation7 + $0x114] sm:$0xff]
        %v2626 = vld [vmem:[#allocation7 + $0x11c] sm:$0xf]
        %v2627 = vld [vmem:[#allocation7 + $0x120] sm:$0xff]
        %v2628 = vld [vmem:[#allocation7 + $0x128] sm:$0xf]
        %v2629 = vld [vmem:[#allocation7 + $0x12c] sm:$0xff]
        %v2630 = vld [vmem:[#allocation7 + $0x134] sm:$0xf]
        %v2631 = vld [vmem:[#allocation7 + $0x138] sm:$0xff]
        %v2632 = vld [vmem:[#allocation7 + $0x140] sm:$0xf]
        %v2633 = vld [vmem:[#allocation7 + $0x144] sm:$0xff]
        %v2634 = vld [vmem:[#allocation7 + $0x14c] sm:$0xf]
        %v2635 = vld [vmem:[#allocation7 + $0x150] sm:$0xff]
        %v2636 = vld [vmem:[#allocation7 + $0x158] sm:$0xf]
        %v2637 = vld [vmem:[#allocation7 + $0x15c] sm:$0xff]
        %v2638 = vld [vmem:[#allocation7 + $0x164] sm:$0xf]
        %v2639 = vld [vmem:[#allocation7 + $0x168] sm:$0xff]
        %v2640 = vld [vmem:[#allocation7 + $0x170] sm:$0xf]
        %v2641 = vld [vmem:[#allocation7 + $0x174] sm:$0xff]
        %v2642 = vld [vmem:[#allocation7 + $0x17c] sm:$0xf]
        %v2675 = vunpack.c.l.b16 %v2611
        %v2676 = vunpack.c.h.b16 %v2611
        %v2677 = vunpack.c.l.b16 %v2612
        %v2678 = vunpack.c.l.b16 %v2613
        %v2679 = vunpack.c.h.b16 %v2613
        %v2680 = vunpack.c.l.b16 %v2614
        %v2681 = vunpack.c.l.b16 %v2615
        %v2682 = vunpack.c.h.b16 %v2615
        %v2683 = vunpack.c.l.b16 %v2616
        %v2684 = vunpack.c.l.b16 %v2617
        %v2685 = vunpack.c.h.b16 %v2617
        %v2686 = vunpack.c.l.b16 %v2618
        %v2687 = vunpack.c.l.b16 %v2619
        %v2688 = vunpack.c.h.b16 %v2619
        %v2689 = vunpack.c.l.b16 %v2620
        %v2690 = vunpack.c.l.b16 %v2621
        %v2691 = vunpack.c.h.b16 %v2621
        %v2692 = vunpack.c.l.b16 %v2622
        %v2693 = vunpack.c.l.b16 %v2623
        %v2694 = vunpack.c.h.b16 %v2623
        %v2695 = vunpack.c.l.b16 %v2624
        %v2696 = vunpack.c.l.b16 %v2625
        %v2697 = vunpack.c.h.b16 %v2625
        %v2698 = vunpack.c.l.b16 %v2626
        %v2699 = vunpack.c.l.b16 %v2627
        %v2700 = vunpack.c.h.b16 %v2627
        %v2701 = vunpack.c.l.b16 %v2628
        %v2702 = vunpack.c.l.b16 %v2629
        %v2703 = vunpack.c.h.b16 %v2629
        %v2704 = vunpack.c.l.b16 %v2630
        %v2705 = vunpack.c.l.b16 %v2631
        %v2706 = vunpack.c.h.b16 %v2631
        %v2707 = vunpack.c.l.b16 %v2632
        %v2708 = vunpack.c.l.b16 %v2633
        %v2709 = vunpack.c.h.b16 %v2633
        %v2710 = vunpack.c.l.b16 %v2634
        %v2711 = vunpack.c.l.b16 %v2635
        %v2712 = vunpack.c.h.b16 %v2635
        %v2713 = vunpack.c.l.b16 %v2636
        %v2714 = vunpack.c.l.b16 %v2637
        %v2715 = vunpack.c.h.b16 %v2637
        %v2716 = vunpack.c.l.b16 %v2638
        %v2717 = vunpack.c.l.b16 %v2639
        %v2718 = vunpack.c.h.b16 %v2639
        %v2719 = vunpack.c.l.b16 %v2640
        %v2720 = vunpack.c.l.b16 %v2641
        %v2721 = vunpack.c.h.b16 %v2641
        %v2722 = vunpack.c.l.b16 %v2642
        %v2723 = vpack.c.b16 %v2678, %v2675
        %v2724 = vpack.c.b16 %v2679, %v2676
        %v2725 = vpack.c.b16 %v2680, %v2677
        %v2726 = vpack.c.b16 %v2684, %v2681
        %v2727 = vpack.c.b16 %v2685, %v2682
        %v2728 = vpack.c.b16 %v2686, %v2683
        %v2729 = vpack.c.b16 %v2690, %v2687
        %v2730 = vpack.c.b16 %v2691, %v2688
        %v2731 = vpack.c.b16 %v2692, %v2689
        %v2732 = vpack.c.b16 %v2696, %v2693
        %v2733 = vpack.c.b16 %v2697, %v2694
        %v2734 = vpack.c.b16 %v2698, %v2695
        %v2735 = vpack.c.b16 %v2702, %v2699
        %v2736 = vpack.c.b16 %v2703, %v2700
        %v2737 = vpack.c.b16 %v2704, %v2701
        %v2738 = vpack.c.b16 %v2708, %v2705
        %v2739 = vpack.c.b16 %v2709, %v2706
        %v2740 = vpack.c.b16 %v2710, %v2707
        %v2741 = vpack.c.b16 %v2714, %v2711
        %v2742 = vpack.c.b16 %v2715, %v2712
        %v2743 = vpack.c.b16 %v2716, %v2713
        %v2744 = vpack.c.b16 %v2720, %v2717
        %v2745 = vpack.c.b16 %v2721, %v2718
        %v2746 = vpack.c.b16 %v2722, %v2719
        %2771 = vmatpush.bf16.msra.mxu0 %v2744
        %2772 = vmatpush.bf16.msra.mxu0 %v2741
        %2773 = vmatpush.bf16.msra.mxu0 %v2738
        %2774 = vmatpush.bf16.msra.mxu0 %v2735
        %2775 = vmatpush.bf16.msra.mxu0 %v2732
        %2776 = vmatpush.bf16.msra.mxu0 %v2729
        %2777 = vmatpush.bf16.msra.mxu0 %v2726
        %2778 = vmatpush.bf16.msra.mxu0 %v2723
        %2779 = vmatmul.bf16.gmra.mxu0 %v2610
        %v2780 = vpop.f32.mrf.mxu0
        %v2781 = vadd.f32 0.0, %v2780
        %v2782 = vpop.f32.mrf.mxu0
        %2783 = vdwg.mxu0
        %2784 = vmatpush.bf16.msra.mxu0 %v2745
        %2785 = vmatpush.bf16.msra.mxu0 %v2742
        %2786 = vmatpush.bf16.msra.mxu0 %v2739
        %2787 = vmatpush.bf16.msra.mxu0 %v2736
        %2788 = vmatpush.bf16.msra.mxu0 %v2733
        %2789 = vmatpush.bf16.msra.mxu0 %v2730
        %2790 = vmatpush.bf16.msra.mxu0 %v2727
        %2791 = vmatpush.bf16.msra.mxu0 %v2724
        %2792 = vmatmul.bf16.gmra.mxu0 %v2610
        %v2793 = vpop.f32.mrf.mxu0
        %v2794 = vadd.f32 0.0, %v2793
        %v2795 = vpop.f32.mrf.mxu0
        %2796 = vdwg.mxu0
        %2797 = vmatpush.bf16.msra.mxu0 %v2746
        %2798 = vmatpush.bf16.msra.mxu0 %v2743
        %2799 = vmatpush.bf16.msra.mxu0 %v2740
        %2800 = vmatpush.bf16.msra.mxu0 %v2737
        %2801 = vmatpush.bf16.msra.mxu0 %v2734
        %2802 = vmatpush.bf16.msra.mxu0 %v2731
        %2803 = vmatpush.bf16.msra.mxu0 %v2728
        %2804 = vmatpush.bf16.msra.mxu0 %v2725
        %2805 = vmatmul.bf16.gmra.mxu0 %v2610
        %v2806 = vpop.f32.mrf.mxu0
        %v2807 = vadd.f32 0.0, %v2806
        %v2808 = vpop.f32.mrf.mxu0
        %2809 = vdwg.mxu0
        %v2842 = vunpack.c.l.b16 %v2526
        %v2843 = vunpack.c.h.b16 %v2526
        %v2844 = vunpack.c.l.b16 %v2527
        %v2845 = vunpack.c.l.b16 %v2528
        %v2846 = vunpack.c.h.b16 %v2528
        %v2847 = vunpack.c.l.b16 %v2529
        %v2848 = vunpack.c.l.b16 %v2530
        %v2849 = vunpack.c.h.b16 %v2530
        %v2850 = vunpack.c.l.b16 %v2531
        %v2851 = vunpack.c.l.b16 %v2532
        %v2852 = vunpack.c.h.b16 %v2532
        %v2853 = vunpack.c.l.b16 %v2533
        %v2854 = vunpack.c.l.b16 %v2534
        %v2855 = vunpack.c.h.b16 %v2534
        %v2856 = vunpack.c.l.b16 %v2535
        %v2857 = vunpack.c.l.b16 %v2536
        %v2858 = vunpack.c.h.b16 %v2536
        %v2859 = vunpack.c.l.b16 %v2537
        %v2860 = vunpack.c.l.b16 %v2538
        %v2861 = vunpack.c.h.b16 %v2538
        %v2862 = vunpack.c.l.b16 %v2539
        %v2863 = vunpack.c.l.b16 %v2540
        %v2864 = vunpack.c.h.b16 %v2540
        %v2865 = vunpack.c.l.b16 %v2541
        %v2866 = vunpack.c.l.b16 %v2542
        %v2867 = vunpack.c.h.b16 %v2542
        %v2868 = vunpack.c.l.b16 %v2543
        %v2869 = vunpack.c.l.b16 %v2544
        %v2870 = vunpack.c.h.b16 %v2544
        %v2871 = vunpack.c.l.b16 %v2545
        %v2872 = vunpack.c.l.b16 %v2546
        %v2873 = vunpack.c.h.b16 %v2546
        %v2874 = vunpack.c.l.b16 %v2547
        %v2875 = vunpack.c.l.b16 %v2548
        %v2876 = vunpack.c.h.b16 %v2548
        %v2877 = vunpack.c.l.b16 %v2549
        %v2878 = vunpack.c.l.b16 %v2550
        %v2879 = vunpack.c.h.b16 %v2550
        %v2880 = vunpack.c.l.b16 %v2551
        %v2881 = vunpack.c.l.b16 %v2552
        %v2882 = vunpack.c.h.b16 %v2552
        %v2883 = vunpack.c.l.b16 %v2553
        %v2884 = vunpack.c.l.b16 %v2554
        %v2885 = vunpack.c.h.b16 %v2554
        %v2886 = vunpack.c.l.b16 %v2555
        %v2887 = vunpack.c.l.b16 %v2556
        %v2888 = vunpack.c.h.b16 %v2556
        %v2889 = vunpack.c.l.b16 %v2557
        %v2890 = vpack.c.b16 %v2845, %v2842
        %v2891 = vpack.c.b16 %v2846, %v2843
        %v2892 = vpack.c.b16 %v2847, %v2844
        %v2893 = vpack.c.b16 %v2851, %v2848
        %v2894 = vpack.c.b16 %v2852, %v2849
        %v2895 = vpack.c.b16 %v2853, %v2850
        %v2896 = vpack.c.b16 %v2857, %v2854
        %v2897 = vpack.c.b16 %v2858, %v2855
        %v2898 = vpack.c.b16 %v2859, %v2856
        %v2899 = vpack.c.b16 %v2863, %v2860
        %v2900 = vpack.c.b16 %v2864, %v2861
        %v2901 = vpack.c.b16 %v2865, %v2862
        %v2902 = vpack.c.b16 %v2869, %v2866
        %v2903 = vpack.c.b16 %v2870, %v2867
        %v2904 = vpack.c.b16 %v2871, %v2868
        %v2905 = vpack.c.b16 %v2875, %v2872
        %v2906 = vpack.c.b16 %v2876, %v2873
        %v2907 = vpack.c.b16 %v2877, %v2874
        %v2908 = vpack.c.b16 %v2881, %v2878
        %v2909 = vpack.c.b16 %v2882, %v2879
        %v2910 = vpack.c.b16 %v2883, %v2880
        %v2911 = vpack.c.b16 %v2887, %v2884
        %v2912 = vpack.c.b16 %v2888, %v2885
        %v2913 = vpack.c.b16 %v2889, %v2886
        %2938 = vmatpush.bf16.msra.mxu0 %v2911
        %2939 = vmatpush.bf16.msra.mxu0 %v2908
        %2940 = vmatpush.bf16.msra.mxu0 %v2905
        %2941 = vmatpush.bf16.msra.mxu0 %v2902
        %2942 = vmatpush.bf16.msra.mxu0 %v2899
        %2943 = vmatpush.bf16.msra.mxu0 %v2896
        %2944 = vmatpush.bf16.msra.mxu0 %v2893
        %2945 = vmatpush.bf16.msra.mxu0 %v2890
        %2946 = vmatmul.bf16.gmra.mxu0 %v2525
        %v2947 = vpop.f32.mrf.mxu0
        %v2948 = vadd.f32 %v2781, %v2947
        %v2949 = vpop.f32.mrf.mxu0
        %2950 = vdwg.mxu0
        %2951 = vmatpush.bf16.msra.mxu0 %v2912
        %2952 = vmatpush.bf16.msra.mxu0 %v2909
        %2953 = vmatpush.bf16.msra.mxu0 %v2906
        %2954 = vmatpush.bf16.msra.mxu0 %v2903
        %2955 = vmatpush.bf16.msra.mxu0 %v2900
        %2956 = vmatpush.bf16.msra.mxu0 %v2897
        %2957 = vmatpush.bf16.msra.mxu0 %v2894
        %2958 = vmatpush.bf16.msra.mxu0 %v2891
        %2959 = vmatmul.bf16.gmra.mxu0 %v2525
        %v2960 = vpop.f32.mrf.mxu0
        %v2961 = vadd.f32 %v2794, %v2960
        %v2962 = vpop.f32.mrf.mxu0
        %2963 = vdwg.mxu0
        %2964 = vmatpush.bf16.msra.mxu0 %v2913
        %2965 = vmatpush.bf16.msra.mxu0 %v2910
        %2966 = vmatpush.bf16.msra.mxu0 %v2907
        %2967 = vmatpush.bf16.msra.mxu0 %v2904
        %2968 = vmatpush.bf16.msra.mxu0 %v2901
        %2969 = vmatpush.bf16.msra.mxu0 %v2898
        %2970 = vmatpush.bf16.msra.mxu0 %v2895
        %2971 = vmatpush.bf16.msra.mxu0 %v2892
        %2972 = vmatmul.bf16.gmra.mxu0 %v2525
        %v2973 = vpop.f32.mrf.mxu0
        %v2974 = vadd.f32 %v2807, %v2973
        %v2975 = vpop.f32.mrf.mxu0
        %2976 = vdwg.mxu0
        %2977 = vmatpush.bf16.xpose.msra.mxu0 0
        %2978 = vmatpush.bf16.xpose.msra.mxu0 0
        %2979 = vmatpush.bf16.xpose.msra.mxu0 0
        %2980 = vmatpush.bf16.xpose.msra.mxu0 0
        %2981 = vmatpush.bf16.xpose.msra.mxu0 0
        %2982 = vmatpush.bf16.xpose.msra.mxu0 0
        %2983 = vmatpush.bf16.xpose.msra.mxu0 0
        %2984 = vmatpush.bf16.xpose.msra.mxu0 %v2470
        %2985 = vmatmul.bf16.gmra.mxu0 %v2468
        %v2986 = vpop.f32.mrf.mxu0
        %v2987 = vadd.f32 %v2478, %v2986
        %v2988 = vpop.f32.mrf.mxu0
        %2989 = vdwg.mxu0
        %v2990 = vsel %vm2492, %v2987, -inf
        %2991 = vmax.xlane.f32.xlu0 %v2990
        %v2992 = vpop.xlane.xlu0 %2991
        %v2993 = vsub.f32 %v2987, %v2992
        %v2994 = vmul.f32 %v2993, 1.442695
        %v2995 = vpow.pop %v2994
        %v2996 = vsel %vm2492, %v2995, 0.0
        %2997 = vadd.xlane.f32.xlu0 %v2996
        %v2998 = vpop.xlane.xlu0 %2997
        %v2999 = vrcp.pop %v2998
        %v3000 = vmul.f32 %v2995, %v2999
        %v3001 = vpack.c.bf16 %v3000, %v3000
        %v3003 = vsel %vm2492, %v3001, 0
        %v3006 = vsel %vm2508, %v2472, 0
        %3008 = vmatpush.bf16.msra.mxu0 0
        %3009 = vmatpush.bf16.msra.mxu0 0
        %3010 = vmatpush.bf16.msra.mxu0 0
        %3011 = vmatpush.bf16.msra.mxu0 0
        %3012 = vmatpush.bf16.msra.mxu0 0
        %3013 = vmatpush.bf16.msra.mxu0 0
        %3014 = vmatpush.bf16.msra.mxu0 0
        %3015 = vmatpush.bf16.msra.mxu0 %v3006
        %3016 = vmatmul.bf16.gmra.mxu0 %v3003
        %v3017 = vpop.f32.mrf.mxu0
        %v3018 = vadd.f32 0.0, %v3017
        %v3019 = vpop.f32.mrf.mxu0
        %3020 = vdwg.mxu0
        %v3021 = vpack.c.bf16 %v3018, %v3018
        %v3022 = vld [vmem:[#allocation7 + $0x180] sm:$0xff]
        %v3023 = vld [vmem:[#allocation7 + $0x188] sm:$0xf]
        %v3024 = vld [vmem:[#allocation7 + $0x18c] sm:$0xff]
        %v3025 = vld [vmem:[#allocation7 + $0x194] sm:$0xf]
        %v3026 = vld [vmem:[#allocation7 + $0x198] sm:$0xff]
        %v3027 = vld [vmem:[#allocation7 + $0x1a0] sm:$0xf]
        %v3028 = vld [vmem:[#allocation7 + $0x1a4] sm:$0xff]
        %v3029 = vld [vmem:[#allocation7 + $0x1ac] sm:$0xf]
        %v3030 = vld [vmem:[#allocation7 + $0x1b0] sm:$0xff]
        %v3031 = vld [vmem:[#allocation7 + $0x1b8] sm:$0xf]
        %v3032 = vld [vmem:[#allocation7 + $0x1bc] sm:$0xff]
        %v3033 = vld [vmem:[#allocation7 + $0x1c4] sm:$0xf]
        %v3034 = vld [vmem:[#allocation7 + $0x1c8] sm:$0xff]
        %v3035 = vld [vmem:[#allocation7 + $0x1d0] sm:$0xf]
        %v3036 = vld [vmem:[#allocation7 + $0x1d4] sm:$0xff]
        %v3037 = vld [vmem:[#allocation7 + $0x1dc] sm:$0xf]
        %v3038 = vld [vmem:[#allocation7 + $0x1e0] sm:$0xff]
        %v3039 = vld [vmem:[#allocation7 + $0x1e8] sm:$0xf]
        %v3040 = vld [vmem:[#allocation7 + $0x1ec] sm:$0xff]
        %v3041 = vld [vmem:[#allocation7 + $0x1f4] sm:$0xf]
        %v3042 = vld [vmem:[#allocation7 + $0x1f8] sm:$0xff]
        %v3043 = vld [vmem:[#allocation7 + $0x200] sm:$0xf]
        %v3044 = vld [vmem:[#allocation7 + $0x204] sm:$0xff]
        %v3045 = vld [vmem:[#allocation7 + $0x20c] sm:$0xf]
        %v3046 = vld [vmem:[#allocation7 + $0x210] sm:$0xff]
        %v3047 = vld [vmem:[#allocation7 + $0x218] sm:$0xf]
        %v3048 = vld [vmem:[#allocation7 + $0x21c] sm:$0xff]
        %v3049 = vld [vmem:[#allocation7 + $0x224] sm:$0xf]
        %v3050 = vld [vmem:[#allocation7 + $0x228] sm:$0xff]
        %v3051 = vld [vmem:[#allocation7 + $0x230] sm:$0xf]
        %v3052 = vld [vmem:[#allocation7 + $0x234] sm:$0xff]
        %v3053 = vld [vmem:[#allocation7 + $0x23c] sm:$0xf]
        %v3086 = vunpack.c.l.b16 %v3022
        %v3087 = vunpack.c.h.b16 %v3022
        %v3088 = vunpack.c.l.b16 %v3023
        %v3089 = vunpack.c.l.b16 %v3024
        %v3090 = vunpack.c.h.b16 %v3024
        %v3091 = vunpack.c.l.b16 %v3025
        %v3092 = vunpack.c.l.b16 %v3026
        %v3093 = vunpack.c.h.b16 %v3026
        %v3094 = vunpack.c.l.b16 %v3027
        %v3095 = vunpack.c.l.b16 %v3028
        %v3096 = vunpack.c.h.b16 %v3028
        %v3097 = vunpack.c.l.b16 %v3029
        %v3098 = vunpack.c.l.b16 %v3030
        %v3099 = vunpack.c.h.b16 %v3030
        %v3100 = vunpack.c.l.b16 %v3031
        %v3101 = vunpack.c.l.b16 %v3032
        %v3102 = vunpack.c.h.b16 %v3032
        %v3103 = vunpack.c.l.b16 %v3033
        %v3104 = vunpack.c.l.b16 %v3034
        %v3105 = vunpack.c.h.b16 %v3034
        %v3106 = vunpack.c.l.b16 %v3035
        %v3107 = vunpack.c.l.b16 %v3036
        %v3108 = vunpack.c.h.b16 %v3036
        %v3109 = vunpack.c.l.b16 %v3037
        %v3110 = vunpack.c.l.b16 %v3038
        %v3111 = vunpack.c.h.b16 %v3038
        %v3112 = vunpack.c.l.b16 %v3039
        %v3113 = vunpack.c.l.b16 %v3040
        %v3114 = vunpack.c.h.b16 %v3040
        %v3115 = vunpack.c.l.b16 %v3041
        %v3116 = vunpack.c.l.b16 %v3042
        %v3117 = vunpack.c.h.b16 %v3042
        %v3118 = vunpack.c.l.b16 %v3043
        %v3119 = vunpack.c.l.b16 %v3044
        %v3120 = vunpack.c.h.b16 %v3044
        %v3121 = vunpack.c.l.b16 %v3045
        %v3122 = vunpack.c.l.b16 %v3046
        %v3123 = vunpack.c.h.b16 %v3046
        %v3124 = vunpack.c.l.b16 %v3047
        %v3125 = vunpack.c.l.b16 %v3048
        %v3126 = vunpack.c.h.b16 %v3048
        %v3127 = vunpack.c.l.b16 %v3049
        %v3128 = vunpack.c.l.b16 %v3050
        %v3129 = vunpack.c.h.b16 %v3050
        %v3130 = vunpack.c.l.b16 %v3051
        %v3131 = vunpack.c.l.b16 %v3052
        %v3132 = vunpack.c.h.b16 %v3052
        %v3133 = vunpack.c.l.b16 %v3053
        %v3134 = vpack.c.b16 %v3089, %v3086
        %v3135 = vpack.c.b16 %v3090, %v3087
        %v3136 = vpack.c.b16 %v3091, %v3088
        %v3137 = vpack.c.b16 %v3095, %v3092
        %v3138 = vpack.c.b16 %v3096, %v3093
        %v3139 = vpack.c.b16 %v3097, %v3094
        %v3140 = vpack.c.b16 %v3101, %v3098
        %v3141 = vpack.c.b16 %v3102, %v3099
        %v3142 = vpack.c.b16 %v3103, %v3100
        %v3143 = vpack.c.b16 %v3107, %v3104
        %v3144 = vpack.c.b16 %v3108, %v3105
        %v3145 = vpack.c.b16 %v3109, %v3106
        %v3146 = vpack.c.b16 %v3113, %v3110
        %v3147 = vpack.c.b16 %v3114, %v3111
        %v3148 = vpack.c.b16 %v3115, %v3112
        %v3149 = vpack.c.b16 %v3119, %v3116
        %v3150 = vpack.c.b16 %v3120, %v3117
        %v3151 = vpack.c.b16 %v3121, %v3118
        %v3152 = vpack.c.b16 %v3125, %v3122
        %v3153 = vpack.c.b16 %v3126, %v3123
        %v3154 = vpack.c.b16 %v3127, %v3124
        %v3155 = vpack.c.b16 %v3131, %v3128
        %v3156 = vpack.c.b16 %v3132, %v3129
        %v3157 = vpack.c.b16 %v3133, %v3130
        %3182 = vmatpush.bf16.msra.mxu0 %v3155
        %3183 = vmatpush.bf16.msra.mxu0 %v3152
        %3184 = vmatpush.bf16.msra.mxu0 %v3149
        %3185 = vmatpush.bf16.msra.mxu0 %v3146
        %3186 = vmatpush.bf16.msra.mxu0 %v3143
        %3187 = vmatpush.bf16.msra.mxu0 %v3140
        %3188 = vmatpush.bf16.msra.mxu0 %v3137
        %3189 = vmatpush.bf16.msra.mxu0 %v3134
        %3190 = vmatmul.bf16.gmra.mxu0 %v3021
        %v3191 = vpop.f32.mrf.mxu0
        %v3192 = vadd.f32 0.0, %v3191
        %v3193 = vpop.f32.mrf.mxu0
        %3194 = vdwg.mxu0
        %3195 = vmatpush.bf16.msra.mxu0 %v3156
        %3196 = vmatpush.bf16.msra.mxu0 %v3153
        %3197 = vmatpush.bf16.msra.mxu0 %v3150
        %3198 = vmatpush.bf16.msra.mxu0 %v3147
        %3199 = vmatpush.bf16.msra.mxu0 %v3144
        %3200 = vmatpush.bf16.msra.mxu0 %v3141
        %3201 = vmatpush.bf16.msra.mxu0 %v3138
        %3202 = vmatpush.bf16.msra.mxu0 %v3135
        %3203 = vmatmul.bf16.gmra.mxu0 %v3021
        %v3204 = vpop.f32.mrf.mxu0
        %v3205 = vadd.f32 0.0, %v3204
        %v3206 = vpop.f32.mrf.mxu0
        %3207 = vdwg.mxu0
        %3208 = vmatpush.bf16.msra.mxu0 %v3157
        %3209 = vmatpush.bf16.msra.mxu0 %v3154
        %3210 = vmatpush.bf16.msra.mxu0 %v3151
        %3211 = vmatpush.bf16.msra.mxu0 %v3148
        %3212 = vmatpush.bf16.msra.mxu0 %v3145
        %3213 = vmatpush.bf16.msra.mxu0 %v3142
        %3214 = vmatpush.bf16.msra.mxu0 %v3139
        %3215 = vmatpush.bf16.msra.mxu0 %v3136
        %3216 = vmatmul.bf16.gmra.mxu0 %v3021
        %v3217 = vpop.f32.mrf.mxu0
        %v3218 = vadd.f32 0.0, %v3217
        %v3219 = vpop.f32.mrf.mxu0
        %3220 = vdwg.mxu0
        %v3221 = vadd.f32 %v2948, %v3192
        %v3222 = vadd.f32 %v2961, %v3205
        %v3223 = vadd.f32 %v2974, %v3218
        %v3225 = vrot.slane %v2468, 4
        %v3228 = vrot.slane %v2470, 4
        %3230 = vmatpush.bf16.xpose.msra.mxu0 0
        %3231 = vmatpush.bf16.xpose.msra.mxu0 0
        %3232 = vmatpush.bf16.xpose.msra.mxu0 0
        %3233 = vmatpush.bf16.xpose.msra.mxu0 0
        %3234 = vmatpush.bf16.xpose.msra.mxu0 0
        %3235 = vmatpush.bf16.xpose.msra.mxu0 0
        %3236 = vmatpush.bf16.xpose.msra.mxu0 0
        %3237 = vmatpush.bf16.xpose.msra.mxu0 %v3228
        %3238 = vmatmul.bf16.gmra.mxu0 %v3225
        %v3239 = vpop.f32.mrf.mxu0
        %v3240 = vadd.f32 %v2478, %v3239
        %v3241 = vpop.f32.mrf.mxu0
        %3242 = vdwg.mxu0
        %v3243 = vsel %vm2492, %v3240, -inf
        %3244 = vmax.xlane.f32.xlu0 %v3243
        %v3245 = vpop.xlane.xlu0 %3244
        %v3246 = vsub.f32 %v3240, %v3245
        %v3247 = vmul.f32 %v3246, 1.442695
        %v3248 = vpow.pop %v3247
        %v3249 = vsel %vm2492, %v3248, 0.0
        %3250 = vadd.xlane.f32.xlu0 %v3249
        %v3251 = vpop.xlane.xlu0 %3250
        %v3252 = vrcp.pop %v3251
        %v3253 = vmul.f32 %v3248, %v3252
        %v3254 = vpack.c.bf16 %v3253, %v3253
        %v3256 = vrot.slane %v2472, 4
        %v3258 = vsel %vm2492, %v3254, 0
        %v3261 = vsel %vm2508, %v3256, 0
        %3263 = vmatpush.bf16.msra.mxu0 0
        %3264 = vmatpush.bf16.msra.mxu0 0
        %3265 = vmatpush.bf16.msra.mxu0 0
        %3266 = vmatpush.bf16.msra.mxu0 0
        %3267 = vmatpush.bf16.msra.mxu0 0
        %3268 = vmatpush.bf16.msra.mxu0 0
        %3269 = vmatpush.bf16.msra.mxu0 0
        %3270 = vmatpush.bf16.msra.mxu0 %v3261
        %3271 = vmatmul.bf16.gmra.mxu0 %v3258
        %v3272 = vpop.f32.mrf.mxu0
        %v3273 = vadd.f32 0.0, %v3272
        %v3274 = vpop.f32.mrf.mxu0
        %3275 = vdwg.mxu0
        %v3276 = vpack.c.bf16 %v3273, %v3273
        %v3277 = vld [vmem:[#allocation7 + $0x240] sm:$0xff]
        %v3278 = vld [vmem:[#allocation7 + $0x248] sm:$0xf]
        %v3279 = vld [vmem:[#allocation7 + $0x24c] sm:$0xff]
        %v3280 = vld [vmem:[#allocation7 + $0x254] sm:$0xf]
        %v3281 = vld [vmem:[#allocation7 + $0x258] sm:$0xff]
        %v3282 = vld [vmem:[#allocation7 + $0x260] sm:$0xf]
        %v3283 = vld [vmem:[#allocation7 + $0x264] sm:$0xff]
        %v3284 = vld [vmem:[#allocation7 + $0x26c] sm:$0xf]
        %v3285 = vld [vmem:[#allocation7 + $0x270] sm:$0xff]
        %v3286 = vld [vmem:[#allocation7 + $0x278] sm:$0xf]
        %v3287 = vld [vmem:[#allocation7 + $0x27c] sm:$0xff]
        %v3288 = vld [vmem:[#allocation7 + $0x284] sm:$0xf]
        %v3289 = vld [vmem:[#allocation7 + $0x288] sm:$0xff]
        %v3290 = vld [vmem:[#allocation7 + $0x290] sm:$0xf]
        %v3291 = vld [vmem:[#allocation7 + $0x294] sm:$0xff]
        %v3292 = vld [vmem:[#allocation7 + $0x29c] sm:$0xf]
        %v3293 = vld [vmem:[#allocation7 + $0x2a0] sm:$0xff]
        %v3294 = vld [vmem:[#allocation7 + $0x2a8] sm:$0xf]
        %v3295 = vld [vmem:[#allocation7 + $0x2ac] sm:$0xff]
        %v3296 = vld [vmem:[#allocation7 + $0x2b4] sm:$0xf]
        %v3297 = vld [vmem:[#allocation7 + $0x2b8] sm:$0xff]
        %v3298 = vld [vmem:[#allocation7 + $0x2c0] sm:$0xf]
        %v3299 = vld [vmem:[#allocation7 + $0x2c4] sm:$0xff]
        %v3300 = vld [vmem:[#allocation7 + $0x2cc] sm:$0xf]
        %v3301 = vld [vmem:[#allocation7 + $0x2d0] sm:$0xff]
        %v3302 = vld [vmem:[#allocation7 + $0x2d8] sm:$0xf]
        %v3303 = vld [vmem:[#allocation7 + $0x2dc] sm:$0xff]
        %v3304 = vld [vmem:[#allocation7 + $0x2e4] sm:$0xf]
        %v3305 = vld [vmem:[#allocation7 + $0x2e8] sm:$0xff]
        %v3306 = vld [vmem:[#allocation7 + $0x2f0] sm:$0xf]
        %v3307 = vld [vmem:[#allocation7 + $0x2f4] sm:$0xff]
        %v3308 = vld [vmem:[#allocation7 + $0x2fc] sm:$0xf]
        %v3341 = vunpack.c.l.b16 %v3277
        %v3342 = vunpack.c.h.b16 %v3277
        %v3343 = vunpack.c.l.b16 %v3278
        %v3344 = vunpack.c.l.b16 %v3279
        %v3345 = vunpack.c.h.b16 %v3279
        %v3346 = vunpack.c.l.b16 %v3280
        %v3347 = vunpack.c.l.b16 %v3281
        %v3348 = vunpack.c.h.b16 %v3281
        %v3349 = vunpack.c.l.b16 %v3282
        %v3350 = vunpack.c.l.b16 %v3283
        %v3351 = vunpack.c.h.b16 %v3283
        %v3352 = vunpack.c.l.b16 %v3284
        %v3353 = vunpack.c.l.b16 %v3285
        %v3354 = vunpack.c.h.b16 %v3285
        %v3355 = vunpack.c.l.b16 %v3286
        %v3356 = vunpack.c.l.b16 %v3287
        %v3357 = vunpack.c.h.b16 %v3287
        %v3358 = vunpack.c.l.b16 %v3288
        %v3359 = vunpack.c.l.b16 %v3289
        %v3360 = vunpack.c.h.b16 %v3289
        %v3361 = vunpack.c.l.b16 %v3290
        %v3362 = vunpack.c.l.b16 %v3291
        %v3363 = vunpack.c.h.b16 %v3291
        %v3364 = vunpack.c.l.b16 %v3292
        %v3365 = vunpack.c.l.b16 %v3293
        %v3366 = vunpack.c.h.b16 %v3293
        %v3367 = vunpack.c.l.b16 %v3294
        %v3368 = vunpack.c.l.b16 %v3295
        %v3369 = vunpack.c.h.b16 %v3295
        %v3370 = vunpack.c.l.b16 %v3296
        %v3371 = vunpack.c.l.b16 %v3297
        %v3372 = vunpack.c.h.b16 %v3297
        %v3373 = vunpack.c.l.b16 %v3298
        %v3374 = vunpack.c.l.b16 %v3299
        %v3375 = vunpack.c.h.b16 %v3299
        %v3376 = vunpack.c.l.b16 %v3300
        %v3377 = vunpack.c.l.b16 %v3301
        %v3378 = vunpack.c.h.b16 %v3301
        %v3379 = vunpack.c.l.b16 %v3302
        %v3380 = vunpack.c.l.b16 %v3303
        %v3381 = vunpack.c.h.b16 %v3303
        %v3382 = vunpack.c.l.b16 %v3304
        %v3383 = vunpack.c.l.b16 %v3305
        %v3384 = vunpack.c.h.b16 %v3305
        %v3385 = vunpack.c.l.b16 %v3306
        %v3386 = vunpack.c.l.b16 %v3307
        %v3387 = vunpack.c.h.b16 %v3307
        %v3388 = vunpack.c.l.b16 %v3308
        %v3389 = vpack.c.b16 %v3344, %v3341
        %v3390 = vpack.c.b16 %v3345, %v3342
        %v3391 = vpack.c.b16 %v3346, %v3343
        %v3392 = vpack.c.b16 %v3350, %v3347
        %v3393 = vpack.c.b16 %v3351, %v3348
        %v3394 = vpack.c.b16 %v3352, %v3349
        %v3395 = vpack.c.b16 %v3356, %v3353
        %v3396 = vpack.c.b16 %v3357, %v3354
        %v3397 = vpack.c.b16 %v3358, %v3355
        %v3398 = vpack.c.b16 %v3362, %v3359
        %v3399 = vpack.c.b16 %v3363, %v3360
        %v3400 = vpack.c.b16 %v3364, %v3361
        %v3401 = vpack.c.b16 %v3368, %v3365
        %v3402 = vpack.c.b16 %v3369, %v3366
        %v3403 = vpack.c.b16 %v3370, %v3367
        %v3404 = vpack.c.b16 %v3374, %v3371
        %v3405 = vpack.c.b16 %v3375, %v3372
        %v3406 = vpack.c.b16 %v3376, %v3373
        %v3407 = vpack.c.b16 %v3380, %v3377
        %v3408 = vpack.c.b16 %v3381, %v3378
        %v3409 = vpack.c.b16 %v3382, %v3379
        %v3410 = vpack.c.b16 %v3386, %v3383
        %v3411 = vpack.c.b16 %v3387, %v3384
        %v3412 = vpack.c.b16 %v3388, %v3385
        %3437 = vmatpush.bf16.msra.mxu0 %v3410
        %3438 = vmatpush.bf16.msra.mxu0 %v3407
        %3439 = vmatpush.bf16.msra.mxu0 %v3404
        %3440 = vmatpush.bf16.msra.mxu0 %v3401
        %3441 = vmatpush.bf16.msra.mxu0 %v3398
        %3442 = vmatpush.bf16.msra.mxu0 %v3395
        %3443 = vmatpush.bf16.msra.mxu0 %v3392
        %3444 = vmatpush.bf16.msra.mxu0 %v3389
        %3445 = vmatmul.bf16.gmra.mxu0 %v3276
        %v3446 = vpop.f32.mrf.mxu0
        %v3447 = vadd.f32 0.0, %v3446
        %v3448 = vpop.f32.mrf.mxu0
        %3449 = vdwg.mxu0
        %3450 = vmatpush.bf16.msra.mxu0 %v3411
        %3451 = vmatpush.bf16.msra.mxu0 %v3408
        %3452 = vmatpush.bf16.msra.mxu0 %v3405
        %3453 = vmatpush.bf16.msra.mxu0 %v3402
        %3454 = vmatpush.bf16.msra.mxu0 %v3399
        %3455 = vmatpush.bf16.msra.mxu0 %v3396
        %3456 = vmatpush.bf16.msra.mxu0 %v3393
        %3457 = vmatpush.bf16.msra.mxu0 %v3390
        %3458 = vmatmul.bf16.gmra.mxu0 %v3276
        %v3459 = vpop.f32.mrf.mxu0
        %v3460 = vadd.f32 0.0, %v3459
        %v3461 = vpop.f32.mrf.mxu0
        %3462 = vdwg.mxu0
        %3463 = vmatpush.bf16.msra.mxu0 %v3412
        %3464 = vmatpush.bf16.msra.mxu0 %v3409
        %3465 = vmatpush.bf16.msra.mxu0 %v3406
        %3466 = vmatpush.bf16.msra.mxu0 %v3403
        %3467 = vmatpush.bf16.msra.mxu0 %v3400
        %3468 = vmatpush.bf16.msra.mxu0 %v3397
        %3469 = vmatpush.bf16.msra.mxu0 %v3394
        %3470 = vmatpush.bf16.msra.mxu0 %v3391
        %3471 = vmatmul.bf16.gmra.mxu0 %v3276
        %v3472 = vpop.f32.mrf.mxu0
        %v3473 = vadd.f32 0.0, %v3472
        %v3474 = vpop.f32.mrf.mxu0
        %3475 = vdwg.mxu0
        %v3476 = vadd.f32 %v3221, %v3447
        %v3477 = vadd.f32 %v3222, %v3460
        %v3478 = vadd.f32 %v3223, %v3473
        %v3479 = vld [vmem:[#allocation8] sm:$0x7]
        %v3481 = vperm.slane %v3479, 0
        %v3482 = vperm.slane %v3479, 1
        %v3483 = vperm.slane %v3479, 2
        %v3487 = vadd.f32 %v3476, %v3481
        %v3488 = vadd.f32 %v3477, %v3482
        %v3489 = vadd.f32 %v3478, %v3483
        %3490 = vst [vmem:[%s263] sm:$0xff] %v3487
        %3491 = vst [vmem:[%s263 + $0x8] sm:$0xff] %v3488
        %3492 = vst [vmem:[%s263 + $0x10] sm:$0xff] %v3489
        %s3493 = sand.u32 %s120, 1
        %s3494 = scalar_lea.sflag [#allocation4], %s3493
        %s3495 = sand.u32 %s120, 1
        %s3496 = smul.addr %s3495, 24
        %s3497 = scalar_lea.vmem [#allocation10], %s3496
        // Predicated region
        $region53: #{tpu_custom_call.1} parent=35 // pred_check
          %p3498 = pneg %p130
        $region54: #{tpu_custom_call.1} parent=35 // pred_check_branch
          %3500 = sbr.rel (%p3498) target = $region56
        $region55: #{tpu_custom_call.1} parent=35 // pred_region
          %3502 = vsyncadd %s3494, 0
          %s3503 = smul.addr %s23, 3
          %s3504 = smul.addr %s3503, 8
          %s3505 = scalar_lea.hbm %s4, %s3504
          %s3507 = sshll.u32 %s3497, 4
          %s3508 = int_to_ptr.vmem [resolvable:$true] %s3507
          %s3509 = sshll.u32 %s3505, 4
          %s3510 = int_to_ptr.hbm [resolvable:$true] %s3509
          %3512 = dma.vmem_to_hbm [thread:$0]  %s3508, 384, %s3510, %s3494
        $region56: #{tpu_custom_call.1} parent=35 // pred_fallthru
          _
      $region36: #{tpu_custom_call.1} parent=5 // pred_fallthru
        _
      %p3513 = scmp.le.s32.totalorder 2, %s18
      // Predicated region
      $region57: #{tpu_custom_call.1} parent=5 // pred_check
        %p3514 = pneg %p3513
      $region58: #{tpu_custom_call.1} parent=5 // pred_check_branch
        %3516 = sbr.rel (%p3514) target = $region60
      $region59: #{tpu_custom_call.1} parent=5 // pred_region
        %s3517 = ssub.s32 %s18, 2
        // Predicated region
        $region61: #{tpu_custom_call.1} parent=59 // pred_check
          %p3518 = pneg %p136
        $region62: #{tpu_custom_call.1} parent=59 // pred_check_branch
          %3520 = sbr.rel (%p3518) target = $region64
        $region63: #{tpu_custom_call.1} parent=59 // pred_region
          %s3521 = sand.u32 %s121, 1
          %s3522 = scalar_lea.sflag [#allocation4], %s3521
          %s3523 = sand.u32 %s121, 1
          %s3524 = smul.addr %s3523, 24
          %s3525 = scalar_lea.vmem [#allocation10], %s3524
          %3527 = dma.done %s3522, 384
        $region64: #{tpu_custom_call.1} parent=59 // pred_fallthru
          _
      $region60: #{tpu_custom_call.1} parent=5 // pred_fallthru
        _
    $region6: #{tpu_custom_call.1} parent=1 // loop_footer
      %s22 = sadd.s32 1, %s18
    $region7: #{tpu_custom_call.1} parent=1 // loop_footer_branch
      %17 = sbr.rel target = $region3
    $region8: #{tpu_custom_call.1} parent=1 // loop_exit
      _
    %3528 = vsyncpa [#allocation3], 1
    %s3529 = scalar_lea.sflag [#allocation3], 1
    %3530 = vsyncpa %s3529, 1
    %3531 = vsyncpa [#allocation6], 1
    %3532 = vsyncpa [#allocation9], 1
    %3533 = vsyncpa [#allocation4], 1
    %s3534 = scalar_lea.sflag [#allocation4], 1
    %3535 = vsyncpa %s3534, 1

</llo_original>
